<compile_context>
chip_gen: v5e
topology: v5e:2x2
jax: 0.10.0
libtpu: 0.0.40
codegen_flags: <defaults>
</compile_context>

<pallas_src>
import functools
import math

import jax
import jax.numpy as jnp
import numpy as np
from jax import lax
from jax.experimental import pallas as pl
from jax.experimental.pallas import tpu as pltpu


# ------------------------------ fused kernel --------------------------------

def _fused_layer_kernel(x_ref, ln1g_ref, ln1b_ref, wqkv_ref, bqkv_ref,
                        wout_ref, bout_ref, ln2g_ref, ln2b_ref,
                        w1_ref, b1_ref, w2_ref, b2_ref, o_ref,
                        *, bz, ch, pn, num_heads, eps):
    """Whole encoder layer on a (M, d) activation; rows ordered (channel, patch, batch)."""
    f32, bf16 = jnp.float32, jnp.bfloat16
    x = x_ref[...]                                   # (M, d) f32
    M, d = x.shape
    d2 = d // 2
    dh = d2 // num_heads

    def layer_norm(v, g, b):
        mu = jnp.mean(v, axis=-1, keepdims=True)
        cen = v - mu
        var = jnp.mean(cen * cen, axis=-1, keepdims=True)
        return cen * lax.rsqrt(var + eps) * g + b

    # ----- LN1 + both branches' QKV in ONE block-diagonal matmul (bf16 feed, f32 accum) -----
    y = layer_norm(x, ln1g_ref[...], ln1b_ref[...]).astype(bf16)
    qkv = jnp.dot(y, wqkv_ref[...], preferred_element_type=f32) + bqkv_ref[...]   # (M, 3d)
    # column layout: [q_s | k_s | v_s | q_t | k_t | v_t];  q pre-scaled by 1/sqrt(dh) offline.

    wout = wout_ref[...]                             # (d, d) bf16 block-diagonal out-projection

    def branch_attention(qkv_g, wrow):
        """qkv_g: (G, L, 3*d2) group-blocked QKV.  Returns (G*L, d) f32 out-projected context."""
        G, L, _ = qkv_g.shape
        acc = jnp.zeros((G * L, d), f32)
        for h in range(num_heads):                   # static, tiny head count
            q = qkv_g[..., h * dh:(h + 1) * dh].astype(bf16)
            k = qkv_g[..., d2 + h * dh:d2 + (h + 1) * dh].astype(bf16)
            v = qkv_g[..., 2 * d2 + h * dh:2 * d2 + (h + 1) * dh].astype(bf16)
            # group-blocked scores: (G, L, L) instead of (M, M); no masks needed.
            s = jnp.einsum('gqd,gkd->gqk', q, k, preferred_element_type=f32)
            s = s - jnp.max(s, axis=-1, keepdims=True)
            p = jnp.exp(s)
            p = p * pl.reciprocal(jnp.sum(p, axis=-1, keepdims=True), approx=True)
            o = jnp.einsum('gqk,gkd->gqd', p.astype(bf16), v, preferred_element_type=f32)
            # per-head output projection accumulated through the block-diagonal wout rows:
            # no dh-wide / d2-wide concatenates anywhere.
            acc = acc + jnp.dot(o.reshape(G * L, dh).astype(bf16),
                                wout[wrow + h * dh:wrow + (h + 1) * dh, :],
                                preferred_element_type=f32)
        return acc

    # ----- spatial branch: groups = channel.  With (c, p, b) row order this is a pure reshape.
    qkv_s = qkv[:, :3 * d2].reshape(ch, pn * bz, 3 * d2)
    sa = branch_attention(qkv_s, 0)                  # (M, d), already back in (c, p, b) order

    # ----- temporal branch: groups = patch.  Regroup / scatter touch only major dims. -------
    qkv_t4 = qkv[:, 3 * d2:].reshape(ch, pn, bz, 3 * d2)
    qkv_t = jnp.stack([qkv_t4[:, p].reshape(ch * bz, 3 * d2) for p in range(pn)], axis=0)
    sa_t = branch_attention(qkv_t, d2).reshape(pn, ch, bz, d)
    sa_t = jnp.concatenate([sa_t[p][:, None] for p in range(pn)], axis=1)   # (ch, pn, bz, d)
    sa = sa + sa_t.reshape(M, d) + bout_ref[...]

    # TODO(synk): dropout / dropout1 / dropout2 / attention dropout are identity (inference).
    x1 = x + sa                                      # residual 1 (fused)

    # ----- LN2 + FFN (relu) + residual 2 -----------------------------------------------------
    y2 = layer_norm(x1, ln2g_ref[...], ln2b_ref[...]).astype(bf16)
    h1 = jnp.dot(y2, w1_ref[...], preferred_element_type=f32) + b1_ref[...]
    h1 = jnp.maximum(h1, 0.0)
    ff = jnp.dot(h1.astype(bf16), w2_ref[...], preferred_element_type=f32) + b2_ref[...]
    o_ref[...] = x1 + ff


# -------------------------- parameter preprocessing --------------------------

def prepare_params(raw, d_model, nhead):
    """One-time (outside jit): transpose weights, fuse both branches into block-diagonal
    QKV / out-proj matrices, fold the softmax scale into q, and store matmul weights in bf16."""
    d2 = d_model // 2
    nh = nhead // 2
    dh = d2 // nh
    scale = 1.0 / math.sqrt(dh)
    dim_ff = raw['lin1_w'].shape[0]
    f32, bf16 = jnp.float32, jnp.bfloat16

    def fold_scale(w_in, b_in):
        # torch in_proj layout stacks [q; k; v] along the out dim -> fold 1/sqrt(dh) into q rows.
        w = jnp.concatenate([w_in[:d2] * scale, w_in[d2:]], axis=0)
        b = jnp.concatenate([b_in[:d2] * scale, b_in[d2:]])
        return w, b

    s_w, s_b = fold_scale(raw['s_in_w'], raw['s_in_b'])
    t_w, t_b = fold_scale(raw['t_in_w'], raw['t_in_b'])

    wqkv = jnp.zeros((d_model, 3 * d_model), f32)
    wqkv = wqkv.at[:d2, :3 * d2].set(s_w.T)
    wqkv = wqkv.at[d2:, 3 * d2:].set(t_w.T)
    bqkv = jnp.concatenate([s_b, t_b]).reshape(1, 3 * d_model)

    wout = jnp.zeros((d_model, d_model), f32)
    wout = wout.at[:d2, :d2].set(raw['s_out_w'].T)
    wout = wout.at[d2:, d2:].set(raw['t_out_w'].T)
    bout = jnp.concatenate([raw['s_out_b'], raw['t_out_b']]).reshape(1, d_model)

    return {
        'ln1_g': raw['ln1_w'].reshape(1, d_model).astype(f32),
        'ln1_b': raw['ln1_b'].reshape(1, d_model).astype(f32),
        'wqkv': wqkv.astype(bf16), 'bqkv': bqkv.astype(f32),
        'wout': wout.astype(bf16), 'bout': bout.astype(f32),
        'ln2_g': raw['ln2_w'].reshape(1, d_model).astype(f32),
        'ln2_b': raw['ln2_b'].reshape(1, d_model).astype(f32),
        'w1': raw['lin1_w'].T.astype(bf16), 'b1': raw['lin1_b'].reshape(1, dim_ff).astype(f32),
        'w2': raw['lin2_w'].T.astype(bf16), 'b2': raw['lin2_b'].reshape(1, d_model).astype(f32),
    }


# ---------------------------- full forward pass ------------------------------

def transformer_encoder_layer_forward(x, params, *, nhead, eps=1e-5):
    """x: (bz, ch_num, patch_num, d_model) float32.  One fused, grid-less pallas_call."""
    bz, ch, pn, d = x.shape
    M = bz * ch * pn
    nh = nhead // 2                                  # heads per criss-cross sub-attention
    # Group-major row order (channel, patch, batch): spatial groups become contiguous row
    # blocks and the temporal regroup/scatter only ever touches major dims inside the kernel.
    x2d = jnp.transpose(x, (1, 2, 0, 3)).reshape(M, d)

    args = (x2d, params['ln1_g'], params['ln1_b'], params['wqkv'], params['bqkv'],
            params['wout'], params['bout'], params['ln2_g'], params['ln2_b'],
            params['w1'], params['b1'], params['w2'], params['b2'])

    # Grid-less call: operands live once in VMEM (no pointless double buffering at grid=(1,)).
    vmem = pl.BlockSpec(memory_space=pltpu.MemorySpace.VMEM)

    out2d = pl.pallas_call(
        functools.partial(_fused_layer_kernel, bz=bz, ch=ch, pn=pn, num_heads=nh, eps=eps),
        out_shape=jax.ShapeDtypeStruct((M, d), x.dtype),
        in_specs=[vmem] * len(args),
        out_specs=vmem,
    )(*args)
    return jnp.transpose(out2d.reshape(ch, pn, bz, d), (2, 0, 1, 3))


# ------------------------- pure-JAX reference check --------------------------

def _ref_mha_seq_first(x, w_in, b_in, w_out, b_out, H):
    """x: (L, N, E) — torch MultiheadAttention with batch_first=False semantics."""
    L, N, E = x.shape
    dh = E // H
    hi = lax.Precision.HIGHEST
    qkv = jnp.einsum('lne,fe->lnf', x, w_in, precision=hi) + b_in
    q, k, v = qkv[..., :E], qkv[..., E:2 * E], qkv[..., 2 * E:]
    q = q.reshape(L, N, H, dh)
    k = k.reshape(L, N, H, dh)
    v = v.reshape(L, N, H, dh)
    s = jnp.einsum('qnhd,knhd->nhqk', q, k, precision=hi) / math.sqrt(dh)
    a = jax.nn.softmax(s, axis=-1)
    o = jnp.einsum('nhqk,knhd->qnhd', a, v, precision=hi).reshape(L, N, E)
    return jnp.einsum('lne,fe->lnf', o, w_out, precision=hi) + b_out


def _ref_ln(x, g, b, eps):
    mean = jnp.mean(x, axis=-1, keepdims=True)
    var = jnp.mean((x - mean) ** 2, axis=-1, keepdims=True)
    return (x - mean) * lax.rsqrt(var + eps) * g + b


def reference_forward(x, raw, *, nhead, eps=1e-5):
    bz, ch, pn, d = x.shape
    d2 = d // 2
    nh = nhead // 2
    hi = lax.Precision.HIGHEST
    y = _ref_ln(x, raw['ln1_w'], raw['ln1_b'], eps)
    # spatial: (L=bz*pn, N=ch, E=d2); temporal: (L=bz*ch, N=pn, E=d2)   (batch_first=False)
    xs = jnp.transpose(y[..., :d2], (0, 2, 1, 3)).reshape(bz * pn, ch, d2)
    xt = y[..., d2:].reshape(bz * ch, pn, d2)
    xs_o = _ref_mha_seq_first(xs, raw['s_in_w'], raw['s_in_b'], raw['s_out_w'], raw['s_out_b'], nh)
    xt_o = _ref_mha_seq_first(xt, raw['t_in_w'], raw['t_in_b'], raw['t_out_w'], raw['t_out_b'], nh)
    xs_o = jnp.transpose(xs_o.reshape(bz, pn, ch, d2), (0, 2, 1, 3))
    xt_o = xt_o.reshape(bz, ch, pn, d2)
    x = x + jnp.concatenate([xs_o, xt_o], axis=-1)
    y2 = _ref_ln(x, raw['ln2_w'], raw['ln2_b'], eps)
    h = jnp.maximum(jnp.einsum('bcpd,fd->bcpf', y2, raw['lin1_w'], precision=hi)
                    + raw['lin1_b'], 0.0)
    ff = jnp.einsum('bcpf,df->bcpd', h, raw['lin2_w'], precision=hi) + raw['lin2_b']
    return x + ff


# ----------------------------------- main ------------------------------------

if __name__ == "__main__":
    d_model = 32          # == patch_size (last dim of the 4-D input)
    nhead = 4             # each sub-attention uses nhead // 2 = 2 heads over d_model // 2 = 16
    dim_ff = 64
    bz, ch_num, patch_num = 2, 4, 8
    d2 = d_model // 2

    key = jax.random.PRNGKey(0)
    ks = jax.random.split(key, 20)

    def nrm(k, shape, scale=0.05):
        return scale * jax.random.normal(k, shape, jnp.float32)

    raw = {
        # self_attn_s (embed=d2, heads=nhead//2), PyTorch (out, in) convention
        's_in_w': nrm(ks[0], (3 * d2, d2)), 's_in_b': nrm(ks[1], (3 * d2,)),
        's_out_w': nrm(ks[2], (d2, d2)),    's_out_b': nrm(ks[3], (d2,)),
        # self_attn_t
        't_in_w': nrm(ks[4], (3 * d2, d2)), 't_in_b': nrm(ks[5], (3 * d2,)),
        't_out_w': nrm(ks[6], (d2, d2)),    't_out_b': nrm(ks[7], (d2,)),
        # feed-forward
        'lin1_w': nrm(ks[8], (dim_ff, d_model)),  'lin1_b': nrm(ks[9], (dim_ff,)),
        'lin2_w': nrm(ks[10], (d_model, dim_ff)), 'lin2_b': nrm(ks[11], (d_model,)),
        # layer norms
        'ln1_w': 1.0 + nrm(ks[12], (d_model,)), 'ln1_b': nrm(ks[13], (d_model,)),
        'ln2_w': 1.0 + nrm(ks[14], (d_model,)), 'ln2_b': nrm(ks[15], (d_model,)),
    }

    # One-time weight preprocessing (transposes, branch fusion, scale folding, bf16) outside jit.
    params = prepare_params(raw, d_model, nhead)

    x = jax.random.normal(ks[16], (bz, ch_num, patch_num, d_model), jnp.float32)

    fwd = jax.jit(functools.partial(transformer_encoder_layer_forward, nhead=nhead, eps=1e-5))
    out = jax.block_until_ready(fwd(x, params))

    ref = jax.block_until_ready(reference_forward(x, raw, nhead=nhead, eps=1e-5))
    np.testing.assert_allclose(np.asarray(out), np.asarray(ref), rtol=5e-3, atol=5e-3)

    print("KERNEL_OK")
</pallas_src>

<mosaic_0001>
module attributes {stable_mosaic.version = 11 : i64} {
  func.func @_fused_layer_kernel(%arg0: memref<64x32xf32, #tpu.memory_space<vmem>>, %arg1: memref<1x32xf32, #tpu.memory_space<vmem>>, %arg2: memref<1x32xf32, #tpu.memory_space<vmem>>, %arg3: memref<32x96xbf16, #tpu.memory_space<vmem>>, %arg4: memref<1x96xf32, #tpu.memory_space<vmem>>, %arg5: memref<32x32xbf16, #tpu.memory_space<vmem>>, %arg6: memref<1x32xf32, #tpu.memory_space<vmem>>, %arg7: memref<1x32xf32, #tpu.memory_space<vmem>>, %arg8: memref<1x32xf32, #tpu.memory_space<vmem>>, %arg9: memref<32x64xbf16, #tpu.memory_space<vmem>>, %arg10: memref<1x64xf32, #tpu.memory_space<vmem>>, %arg11: memref<64x32xbf16, #tpu.memory_space<vmem>>, %arg12: memref<1x32xf32, #tpu.memory_space<vmem>>, %arg13: memref<64x32xf32, #tpu.memory_space<vmem>>) attributes {dimension_semantics = [], scalar_prefetch = 0 : i64, scratch_operands = 0 : i64, tpu.core_type = #tpu.core_type<tc>} {
    %c0 = arith.constant 0 : index
    %c0_0 = arith.constant 0 : index
    %0 = vector.load %arg0[%c0, %c0_0] : memref<64x32xf32, #tpu.memory_space<vmem>>, vector<64x32xf32>
    %c0_1 = arith.constant 0 : index
    %c0_2 = arith.constant 0 : index
    %1 = vector.load %arg1[%c0_1, %c0_2] : memref<1x32xf32, #tpu.memory_space<vmem>>, vector<1x32xf32>
    %c0_3 = arith.constant 0 : index
    %c0_4 = arith.constant 0 : index
    %2 = vector.load %arg2[%c0_3, %c0_4] : memref<1x32xf32, #tpu.memory_space<vmem>>, vector<1x32xf32>
    %cst = arith.constant dense<0.000000e+00> : vector<64xf32>
    %3 = vector.multi_reduction <add>, %0, %cst [1] : vector<64x32xf32> to vector<64xf32>
    %4 = vector.shape_cast %3 : vector<64xf32> to vector<64x1xf32>
    %cst_5 = arith.constant 3.200000e+01 : f32
    %5 = vector.broadcast %cst_5 : f32 to vector<64x1xf32>
    %6 = arith.divf %4, %5 : vector<64x1xf32>
    %7 = vector.broadcast %6 : vector<64x1xf32> to vector<64x32xf32>
    %8 = arith.subf %0, %7 : vector<64x32xf32>
    %9 = arith.mulf %8, %8 : vector<64x32xf32>
    %cst_6 = arith.constant dense<0.000000e+00> : vector<64xf32>
    %10 = vector.multi_reduction <add>, %9, %cst_6 [1] : vector<64x32xf32> to vector<64xf32>
    %11 = vector.shape_cast %10 : vector<64xf32> to vector<64x1xf32>
    %cst_7 = arith.constant 3.200000e+01 : f32
    %12 = vector.broadcast %cst_7 : f32 to vector<64x1xf32>
    %13 = arith.divf %11, %12 : vector<64x1xf32>
    %cst_8 = arith.constant 9.99999974E-6 : f32
    %14 = vector.broadcast %cst_8 : f32 to vector<64x1xf32>
    %15 = arith.addf %13, %14 : vector<64x1xf32>
    %16 = math.rsqrt %15 : vector<64x1xf32>
    %17 = vector.broadcast %16 : vector<64x1xf32> to vector<64x32xf32>
    %18 = arith.mulf %8, %17 : vector<64x32xf32>
    %19 = vector.broadcast %1 : vector<1x32xf32> to vector<64x32xf32>
    %20 = arith.mulf %18, %19 : vector<64x32xf32>
    %21 = vector.broadcast %2 : vector<1x32xf32> to vector<64x32xf32>
    %22 = arith.addf %20, %21 : vector<64x32xf32>
    %23 = arith.truncf %22 : vector<64x32xf32> to vector<64x32xbf16>
    %c0_9 = arith.constant 0 : index
    %c0_10 = arith.constant 0 : index
    %24 = vector.load %arg3[%c0_9, %c0_10] : memref<32x96xbf16, #tpu.memory_space<vmem>>, vector<32x96xbf16>
    %cst_11 = arith.constant dense<0.000000e+00> : vector<64x96xf32>
    %25 = tpu.matmul %23, %24, %cst_11 {dimension_numbers = #tpu.dot_dimension_numbers<[1], [0], [0], [1], [0, 0, 1, 1], [], []>} : vector<64x32xbf16>, vector<32x96xbf16>, vector<64x96xf32> -> vector<64x96xf32>
    %c0_12 = arith.constant 0 : index
    %c0_13 = arith.constant 0 : index
    %26 = vector.load %arg4[%c0_12, %c0_13] : memref<1x96xf32, #tpu.memory_space<vmem>>, vector<1x96xf32>
    %27 = vector.broadcast %26 : vector<1x96xf32> to vector<64x96xf32>
    %28 = arith.addf %25, %27 : vector<64x96xf32>
    %c0_14 = arith.constant 0 : index
    %c0_15 = arith.constant 0 : index
    %29 = vector.load %arg5[%c0_14, %c0_15] : memref<32x32xbf16, #tpu.memory_space<vmem>>, vector<32x32xbf16>
    %30 = vector.extract_strided_slice %28 {offsets = [0, 0], sizes = [64, 48], strides = [1, 1]} : vector<64x96xf32> to vector<64x48xf32>
    %31 = vector.shape_cast %30 : vector<64x48xf32> to vector<4x16x48xf32>
    %cst_16 = arith.constant 0.000000e+00 : f32
    %32 = vector.broadcast %cst_16 : f32 to vector<64x32xf32>
    %33 = vector.extract_strided_slice %31 {offsets = [0, 0, 0], sizes = [4, 16, 8], strides = [1, 1, 1]} : vector<4x16x48xf32> to vector<4x16x8xf32>
    %34 = arith.truncf %33 : vector<4x16x8xf32> to vector<4x16x8xbf16>
    %35 = vector.extract_strided_slice %31 {offsets = [0, 0, 16], sizes = [4, 16, 8], strides = [1, 1, 1]} : vector<4x16x48xf32> to vector<4x16x8xf32>
    %36 = arith.truncf %35 : vector<4x16x8xf32> to vector<4x16x8xbf16>
    %37 = vector.extract_strided_slice %31 {offsets = [0, 0, 32], sizes = [4, 16, 8], strides = [1, 1, 1]} : vector<4x16x48xf32> to vector<4x16x8xf32>
    %38 = arith.truncf %37 : vector<4x16x8xf32> to vector<4x16x8xbf16>
    "tpu.trace_start"() <{level = 10 : i32, message = "gqd,gkd->gqk"}> : () -> ()
    %cst_17 = arith.constant dense<0.000000e+00> : vector<4x16x16xf32>
    %39 = tpu.matmul %34, %36, %cst_17 {dimension_numbers = #tpu.dot_dimension_numbers<[2], [2], [1], [1], [0, 0, 0, 1, 1, 1], [0], [0]>} : vector<4x16x8xbf16>, vector<4x16x8xbf16>, vector<4x16x16xf32> -> vector<4x16x16xf32>
    "tpu.trace_stop"() : () -> ()
    %cst_18 = arith.constant dense<0xFF800000> : vector<4x16xf32>
    %40 = vector.multi_reduction <maximumf>, %39, %cst_18 [2] : vector<4x16x16xf32> to vector<4x16xf32>
    %41 = vector.shape_cast %40 : vector<4x16xf32> to vector<4x16x1xf32>
    %42 = vector.broadcast %41 : vector<4x16x1xf32> to vector<4x16x16xf32>
    %43 = arith.subf %39, %42 : vector<4x16x16xf32>
    %44 = math.exp %43 : vector<4x16x16xf32>
    %cst_19 = arith.constant dense<0.000000e+00> : vector<4x16xf32>
    %45 = vector.multi_reduction <add>, %44, %cst_19 [2] : vector<4x16x16xf32> to vector<4x16xf32>
    %46 = vector.shape_cast %45 : vector<4x16xf32> to vector<4x16x1xf32>
    %47 = tpu.reciprocal %46 {approx = true} : vector<4x16x1xf32> -> vector<4x16x1xf32>
    %48 = vector.broadcast %47 : vector<4x16x1xf32> to vector<4x16x16xf32>
    %49 = arith.mulf %44, %48 : vector<4x16x16xf32>
    %50 = arith.truncf %49 : vector<4x16x16xf32> to vector<4x16x16xbf16>
    "tpu.trace_start"() <{level = 10 : i32, message = "gqk,gkd->gqd"}> : () -> ()
    %cst_20 = arith.constant dense<0.000000e+00> : vector<4x16x8xf32>
    %51 = tpu.matmul %50, %38, %cst_20 {dimension_numbers = #tpu.dot_dimension_numbers<[2], [1], [1], [2], [0, 0, 0, 1, 1, 2], [0], [0]>} : vector<4x16x16xbf16>, vector<4x16x8xbf16>, vector<4x16x8xf32> -> vector<4x16x8xf32>
    "tpu.trace_stop"() : () -> ()
    %52 = vector.shape_cast %51 : vector<4x16x8xf32> to vector<64x8xf32>
    %53 = arith.truncf %52 : vector<64x8xf32> to vector<64x8xbf16>
    %54 = vector.extract_strided_slice %29 {offsets = [0, 0], sizes = [8, 32], strides = [1, 1]} : vector<32x32xbf16> to vector<8x32xbf16>
    %cst_21 = arith.constant dense<0.000000e+00> : vector<64x32xf32>
    %55 = tpu.matmul %53, %54, %cst_21 {dimension_numbers = #tpu.dot_dimension_numbers<[1], [0], [0], [1], [0, 0, 1, 1], [], []>} : vector<64x8xbf16>, vector<8x32xbf16>, vector<64x32xf32> -> vector<64x32xf32>
    %56 = arith.addf %32, %55 : vector<64x32xf32>
    %57 = vector.extract_strided_slice %31 {offsets = [0, 0, 8], sizes = [4, 16, 8], strides = [1, 1, 1]} : vector<4x16x48xf32> to vector<4x16x8xf32>
    %58 = arith.truncf %57 : vector<4x16x8xf32> to vector<4x16x8xbf16>
    %59 = vector.extract_strided_slice %31 {offsets = [0, 0, 24], sizes = [4, 16, 8], strides = [1, 1, 1]} : vector<4x16x48xf32> to vector<4x16x8xf32>
    %60 = arith.truncf %59 : vector<4x16x8xf32> to vector<4x16x8xbf16>
    %61 = vector.extract_strided_slice %31 {offsets = [0, 0, 40], sizes = [4, 16, 8], strides = [1, 1, 1]} : vector<4x16x48xf32> to vector<4x16x8xf32>
    %62 = arith.truncf %61 : vector<4x16x8xf32> to vector<4x16x8xbf16>
    "tpu.trace_start"() <{level = 10 : i32, message = "gqd,gkd->gqk"}> : () -> ()
    %cst_22 = arith.constant dense<0.000000e+00> : vector<4x16x16xf32>
    %63 = tpu.matmul %58, %60, %cst_22 {dimension_numbers = #tpu.dot_dimension_numbers<[2], [2], [1], [1], [0, 0, 0, 1, 1, 1], [0], [0]>} : vector<4x16x8xbf16>, vector<4x16x8xbf16>, vector<4x16x16xf32> -> vector<4x16x16xf32>
    "tpu.trace_stop"() : () -> ()
    %cst_23 = arith.constant dense<0xFF800000> : vector<4x16xf32>
    %64 = vector.multi_reduction <maximumf>, %63, %cst_23 [2] : vector<4x16x16xf32> to vector<4x16xf32>
    %65 = vector.shape_cast %64 : vector<4x16xf32> to vector<4x16x1xf32>
    %66 = vector.broadcast %65 : vector<4x16x1xf32> to vector<4x16x16xf32>
    %67 = arith.subf %63, %66 : vector<4x16x16xf32>
    %68 = math.exp %67 : vector<4x16x16xf32>
    %cst_24 = arith.constant dense<0.000000e+00> : vector<4x16xf32>
    %69 = vector.multi_reduction <add>, %68, %cst_24 [2] : vector<4x16x16xf32> to vector<4x16xf32>
    %70 = vector.shape_cast %69 : vector<4x16xf32> to vector<4x16x1xf32>
    %71 = tpu.reciprocal %70 {approx = true} : vector<4x16x1xf32> -> vector<4x16x1xf32>
    %72 = vector.broadcast %71 : vector<4x16x1xf32> to vector<4x16x16xf32>
    %73 = arith.mulf %68, %72 : vector<4x16x16xf32>
    %74 = arith.truncf %73 : vector<4x16x16xf32> to vector<4x16x16xbf16>
    "tpu.trace_start"() <{level = 10 : i32, message = "gqk,gkd->gqd"}> : () -> ()
    %cst_25 = arith.constant dense<0.000000e+00> : vector<4x16x8xf32>
    %75 = tpu.matmul %74, %62, %cst_25 {dimension_numbers = #tpu.dot_dimension_numbers<[2], [1], [1], [2], [0, 0, 0, 1, 1, 2], [0], [0]>} : vector<4x16x16xbf16>, vector<4x16x8xbf16>, vector<4x16x8xf32> -> vector<4x16x8xf32>
    "tpu.trace_stop"() : () -> ()
    %76 = vector.shape_cast %75 : vector<4x16x8xf32> to vector<64x8xf32>
    %77 = arith.truncf %76 : vector<64x8xf32> to vector<64x8xbf16>
    %78 = vector.extract_strided_slice %29 {offsets = [8, 0], sizes = [8, 32], strides = [1, 1]} : vector<32x32xbf16> to vector<8x32xbf16>
    %cst_26 = arith.constant dense<0.000000e+00> : vector<64x32xf32>
    %79 = tpu.matmul %77, %78, %cst_26 {dimension_numbers = #tpu.dot_dimension_numbers<[1], [0], [0], [1], [0, 0, 1, 1], [], []>} : vector<64x8xbf16>, vector<8x32xbf16>, vector<64x32xf32> -> vector<64x32xf32>
    %80 = arith.addf %56, %79 : vector<64x32xf32>
    %81 = vector.extract_strided_slice %28 {offsets = [0, 48], sizes = [64, 48], strides = [1, 1]} : vector<64x96xf32> to vector<64x48xf32>
    %82 = vector.shape_cast %81 : vector<64x48xf32> to vector<4x8x2x48xf32>
    %83 = vector.extract_strided_slice %82 {offsets = [0, 0, 0, 0], sizes = [4, 1, 2, 48], strides = [1, 1, 1, 1]} : vector<4x8x2x48xf32> to vector<4x1x2x48xf32>
    %84 = vector.shape_cast %83 : vector<4x1x2x48xf32> to vector<4x2x48xf32>
    %85 = vector.shape_cast %84 : vector<4x2x48xf32> to vector<8x48xf32>
    %86 = vector.extract_strided_slice %82 {offsets = [0, 1, 0, 0], sizes = [4, 1, 2, 48], strides = [1, 1, 1, 1]} : vector<4x8x2x48xf32> to vector<4x1x2x48xf32>
    %87 = vector.shape_cast %86 : vector<4x1x2x48xf32> to vector<4x2x48xf32>
    %88 = vector.shape_cast %87 : vector<4x2x48xf32> to vector<8x48xf32>
    %89 = vector.extract_strided_slice %82 {offsets = [0, 2, 0, 0], sizes = [4, 1, 2, 48], strides = [1, 1, 1, 1]} : vector<4x8x2x48xf32> to vector<4x1x2x48xf32>
    %90 = vector.shape_cast %89 : vector<4x1x2x48xf32> to vector<4x2x48xf32>
    %91 = vector.shape_cast %90 : vector<4x2x48xf32> to vector<8x48xf32>
    %92 = vector.extract_strided_slice %82 {offsets = [0, 3, 0, 0], sizes = [4, 1, 2, 48], strides = [1, 1, 1, 1]} : vector<4x8x2x48xf32> to vector<4x1x2x48xf32>
    %93 = vector.shape_cast %92 : vector<4x1x2x48xf32> to vector<4x2x48xf32>
    %94 = vector.shape_cast %93 : vector<4x2x48xf32> to vector<8x48xf32>
    %95 = vector.extract_strided_slice %82 {offsets = [0, 4, 0, 0], sizes = [4, 1, 2, 48], strides = [1, 1, 1, 1]} : vector<4x8x2x48xf32> to vector<4x1x2x48xf32>
    %96 = vector.shape_cast %95 : vector<4x1x2x48xf32> to vector<4x2x48xf32>
    %97 = vector.shape_cast %96 : vector<4x2x48xf32> to vector<8x48xf32>
    %98 = vector.extract_strided_slice %82 {offsets = [0, 5, 0, 0], sizes = [4, 1, 2, 48], strides = [1, 1, 1, 1]} : vector<4x8x2x48xf32> to vector<4x1x2x48xf32>
    %99 = vector.shape_cast %98 : vector<4x1x2x48xf32> to vector<4x2x48xf32>
    %100 = vector.shape_cast %99 : vector<4x2x48xf32> to vector<8x48xf32>
    %101 = vector.extract_strided_slice %82 {offsets = [0, 6, 0, 0], sizes = [4, 1, 2, 48], strides = [1, 1, 1, 1]} : vector<4x8x2x48xf32> to vector<4x1x2x48xf32>
    %102 = vector.shape_cast %101 : vector<4x1x2x48xf32> to vector<4x2x48xf32>
    %103 = vector.shape_cast %102 : vector<4x2x48xf32> to vector<8x48xf32>
    %104 = vector.extract_strided_slice %82 {offsets = [0, 7, 0, 0], sizes = [4, 1, 2, 48], strides = [1, 1, 1, 1]} : vector<4x8x2x48xf32> to vector<4x1x2x48xf32>
    %105 = vector.shape_cast %104 : vector<4x1x2x48xf32> to vector<4x2x48xf32>
    %106 = vector.shape_cast %105 : vector<4x2x48xf32> to vector<8x48xf32>
    %107 = vector.shape_cast %85 : vector<8x48xf32> to vector<1x8x48xf32>
    %108 = vector.shape_cast %88 : vector<8x48xf32> to vector<1x8x48xf32>
    %109 = vector.shape_cast %91 : vector<8x48xf32> to vector<1x8x48xf32>
    %110 = vector.shape_cast %94 : vector<8x48xf32> to vector<1x8x48xf32>
    %111 = vector.shape_cast %97 : vector<8x48xf32> to vector<1x8x48xf32>
    %112 = vector.shape_cast %100 : vector<8x48xf32> to vector<1x8x48xf32>
    %113 = vector.shape_cast %103 : vector<8x48xf32> to vector<1x8x48xf32>
    %114 = vector.shape_cast %106 : vector<8x48xf32> to vector<1x8x48xf32>
    %115 = tpu.concatenate %107, %108, %109, %110, %111, %112, %113, %114 in 0 : vector<1x8x48xf32>, vector<1x8x48xf32>, vector<1x8x48xf32>, vector<1x8x48xf32>, vector<1x8x48xf32>, vector<1x8x48xf32>, vector<1x8x48xf32>, vector<1x8x48xf32> -> vector<8x8x48xf32>
    %cst_27 = arith.constant 0.000000e+00 : f32
    %116 = vector.broadcast %cst_27 : f32 to vector<64x32xf32>
    %117 = vector.extract_strided_slice %115 {offsets = [0, 0, 0], sizes = [8, 8, 8], strides = [1, 1, 1]} : vector<8x8x48xf32> to vector<8x8x8xf32>
    %118 = arith.truncf %117 : vector<8x8x8xf32> to vector<8x8x8xbf16>
    %119 = vector.extract_strided_slice %115 {offsets = [0, 0, 16], sizes = [8, 8, 8], strides = [1, 1, 1]} : vector<8x8x48xf32> to vector<8x8x8xf32>
    %120 = arith.truncf %119 : vector<8x8x8xf32> to vector<8x8x8xbf16>
    %121 = vector.extract_strided_slice %115 {offsets = [0, 0, 32], sizes = [8, 8, 8], strides = [1, 1, 1]} : vector<8x8x48xf32> to vector<8x8x8xf32>
    %122 = arith.truncf %121 : vector<8x8x8xf32> to vector<8x8x8xbf16>
    "tpu.trace_start"() <{level = 10 : i32, message = "gqd,gkd->gqk"}> : () -> ()
    %cst_28 = arith.constant dense<0.000000e+00> : vector<8x8x8xf32>
    %123 = tpu.matmul %118, %120, %cst_28 {dimension_numbers = #tpu.dot_dimension_numbers<[2], [2], [1], [1], [0, 0, 0, 1, 1, 1], [0], [0]>} : vector<8x8x8xbf16>, vector<8x8x8xbf16>, vector<8x8x8xf32> -> vector<8x8x8xf32>
    "tpu.trace_stop"() : () -> ()
    %cst_29 = arith.constant dense<0xFF800000> : vector<8x8xf32>
    %124 = vector.multi_reduction <maximumf>, %123, %cst_29 [2] : vector<8x8x8xf32> to vector<8x8xf32>
    %125 = vector.shape_cast %124 : vector<8x8xf32> to vector<8x8x1xf32>
    %126 = vector.broadcast %125 : vector<8x8x1xf32> to vector<8x8x8xf32>
    %127 = arith.subf %123, %126 : vector<8x8x8xf32>
    %128 = math.exp %127 : vector<8x8x8xf32>
    %cst_30 = arith.constant dense<0.000000e+00> : vector<8x8xf32>
    %129 = vector.multi_reduction <add>, %128, %cst_30 [2] : vector<8x8x8xf32> to vector<8x8xf32>
    %130 = vector.shape_cast %129 : vector<8x8xf32> to vector<8x8x1xf32>
    %131 = tpu.reciprocal %130 {approx = true} : vector<8x8x1xf32> -> vector<8x8x1xf32>
    %132 = vector.broadcast %131 : vector<8x8x1xf32> to vector<8x8x8xf32>
    %133 = arith.mulf %128, %132 : vector<8x8x8xf32>
    %134 = arith.truncf %133 : vector<8x8x8xf32> to vector<8x8x8xbf16>
    "tpu.trace_start"() <{level = 10 : i32, message = "gqk,gkd->gqd"}> : () -> ()
    %cst_31 = arith.constant dense<0.000000e+00> : vector<8x8x8xf32>
    %135 = tpu.matmul %134, %122, %cst_31 {dimension_numbers = #tpu.dot_dimension_numbers<[2], [1], [1], [2], [0, 0, 0, 1, 1, 2], [0], [0]>} : vector<8x8x8xbf16>, vector<8x8x8xbf16>, vector<8x8x8xf32> -> vector<8x8x8xf32>
    "tpu.trace_stop"() : () -> ()
    %136 = vector.shape_cast %135 : vector<8x8x8xf32> to vector<64x8xf32>
    %137 = arith.truncf %136 : vector<64x8xf32> to vector<64x8xbf16>
    %138 = vector.extract_strided_slice %29 {offsets = [16, 0], sizes = [8, 32], strides = [1, 1]} : vector<32x32xbf16> to vector<8x32xbf16>
    %cst_32 = arith.constant dense<0.000000e+00> : vector<64x32xf32>
    %139 = tpu.matmul %137, %138, %cst_32 {dimension_numbers = #tpu.dot_dimension_numbers<[1], [0], [0], [1], [0, 0, 1, 1], [], []>} : vector<64x8xbf16>, vector<8x32xbf16>, vector<64x32xf32> -> vector<64x32xf32>
    %140 = arith.addf %116, %139 : vector<64x32xf32>
    %141 = vector.extract_strided_slice %115 {offsets = [0, 0, 8], sizes = [8, 8, 8], strides = [1, 1, 1]} : vector<8x8x48xf32> to vector<8x8x8xf32>
    %142 = arith.truncf %141 : vector<8x8x8xf32> to vector<8x8x8xbf16>
    %143 = vector.extract_strided_slice %115 {offsets = [0, 0, 24], sizes = [8, 8, 8], strides = [1, 1, 1]} : vector<8x8x48xf32> to vector<8x8x8xf32>
    %144 = arith.truncf %143 : vector<8x8x8xf32> to vector<8x8x8xbf16>
    %145 = vector.extract_strided_slice %115 {offsets = [0, 0, 40], sizes = [8, 8, 8], strides = [1, 1, 1]} : vector<8x8x48xf32> to vector<8x8x8xf32>
    %146 = arith.truncf %145 : vector<8x8x8xf32> to vector<8x8x8xbf16>
    "tpu.trace_start"() <{level = 10 : i32, message = "gqd,gkd->gqk"}> : () -> ()
    %cst_33 = arith.constant dense<0.000000e+00> : vector<8x8x8xf32>
    %147 = tpu.matmul %142, %144, %cst_33 {dimension_numbers = #tpu.dot_dimension_numbers<[2], [2], [1], [1], [0, 0, 0, 1, 1, 1], [0], [0]>} : vector<8x8x8xbf16>, vector<8x8x8xbf16>, vector<8x8x8xf32> -> vector<8x8x8xf32>
    "tpu.trace_stop"() : () -> ()
    %cst_34 = arith.constant dense<0xFF800000> : vector<8x8xf32>
    %148 = vector.multi_reduction <maximumf>, %147, %cst_34 [2] : vector<8x8x8xf32> to vector<8x8xf32>
    %149 = vector.shape_cast %148 : vector<8x8xf32> to vector<8x8x1xf32>
    %150 = vector.broadcast %149 : vector<8x8x1xf32> to vector<8x8x8xf32>
    %151 = arith.subf %147, %150 : vector<8x8x8xf32>
    %152 = math.exp %151 : vector<8x8x8xf32>
    %cst_35 = arith.constant dense<0.000000e+00> : vector<8x8xf32>
    %153 = vector.multi_reduction <add>, %152, %cst_35 [2] : vector<8x8x8xf32> to vector<8x8xf32>
    %154 = vector.shape_cast %153 : vector<8x8xf32> to vector<8x8x1xf32>
    %155 = tpu.reciprocal %154 {approx = true} : vector<8x8x1xf32> -> vector<8x8x1xf32>
    %156 = vector.broadcast %155 : vector<8x8x1xf32> to vector<8x8x8xf32>
    %157 = arith.mulf %152, %156 : vector<8x8x8xf32>
    %158 = arith.truncf %157 : vector<8x8x8xf32> to vector<8x8x8xbf16>
    "tpu.trace_start"() <{level = 10 : i32, message = "gqk,gkd->gqd"}> : () -> ()
    %cst_36 = arith.constant dense<0.000000e+00> : vector<8x8x8xf32>
    %159 = tpu.matmul %158, %146, %cst_36 {dimension_numbers = #tpu.dot_dimension_numbers<[2], [1], [1], [2], [0, 0, 0, 1, 1, 2], [0], [0]>} : vector<8x8x8xbf16>, vector<8x8x8xbf16>, vector<8x8x8xf32> -> vector<8x8x8xf32>
    "tpu.trace_stop"() : () -> ()
    %160 = vector.shape_cast %159 : vector<8x8x8xf32> to vector<64x8xf32>
    %161 = arith.truncf %160 : vector<64x8xf32> to vector<64x8xbf16>
    %162 = vector.extract_strided_slice %29 {offsets = [24, 0], sizes = [8, 32], strides = [1, 1]} : vector<32x32xbf16> to vector<8x32xbf16>
    %cst_37 = arith.constant dense<0.000000e+00> : vector<64x32xf32>
    %163 = tpu.matmul %161, %162, %cst_37 {dimension_numbers = #tpu.dot_dimension_numbers<[1], [0], [0], [1], [0, 0, 1, 1], [], []>} : vector<64x8xbf16>, vector<8x32xbf16>, vector<64x32xf32> -> vector<64x32xf32>
    %164 = arith.addf %140, %163 : vector<64x32xf32>
    %165 = vector.shape_cast %164 : vector<64x32xf32> to vector<8x4x2x32xf32>
    %166 = vector.extract_strided_slice %165 {offsets = [0, 0, 0, 0], sizes = [1, 4, 2, 32], strides = [1, 1, 1, 1]} : vector<8x4x2x32xf32> to vector<1x4x2x32xf32>
    %167 = vector.shape_cast %166 : vector<1x4x2x32xf32> to vector<4x2x32xf32>
    %168 = vector.shape_cast %167 : vector<4x2x32xf32> to vector<4x1x2x32xf32>
    %169 = vector.extract_strided_slice %165 {offsets = [1, 0, 0, 0], sizes = [1, 4, 2, 32], strides = [1, 1, 1, 1]} : vector<8x4x2x32xf32> to vector<1x4x2x32xf32>
    %170 = vector.shape_cast %169 : vector<1x4x2x32xf32> to vector<4x2x32xf32>
    %171 = vector.shape_cast %170 : vector<4x2x32xf32> to vector<4x1x2x32xf32>
    %172 = vector.extract_strided_slice %165 {offsets = [2, 0, 0, 0], sizes = [1, 4, 2, 32], strides = [1, 1, 1, 1]} : vector<8x4x2x32xf32> to vector<1x4x2x32xf32>
    %173 = vector.shape_cast %172 : vector<1x4x2x32xf32> to vector<4x2x32xf32>
    %174 = vector.shape_cast %173 : vector<4x2x32xf32> to vector<4x1x2x32xf32>
    %175 = vector.extract_strided_slice %165 {offsets = [3, 0, 0, 0], sizes = [1, 4, 2, 32], strides = [1, 1, 1, 1]} : vector<8x4x2x32xf32> to vector<1x4x2x32xf32>
    %176 = vector.shape_cast %175 : vector<1x4x2x32xf32> to vector<4x2x32xf32>
    %177 = vector.shape_cast %176 : vector<4x2x32xf32> to vector<4x1x2x32xf32>
    %178 = vector.extract_strided_slice %165 {offsets = [4, 0, 0, 0], sizes = [1, 4, 2, 32], strides = [1, 1, 1, 1]} : vector<8x4x2x32xf32> to vector<1x4x2x32xf32>
    %179 = vector.shape_cast %178 : vector<1x4x2x32xf32> to vector<4x2x32xf32>
    %180 = vector.shape_cast %179 : vector<4x2x32xf32> to vector<4x1x2x32xf32>
    %181 = vector.extract_strided_slice %165 {offsets = [5, 0, 0, 0], sizes = [1, 4, 2, 32], strides = [1, 1, 1, 1]} : vector<8x4x2x32xf32> to vector<1x4x2x32xf32>
    %182 = vector.shape_cast %181 : vector<1x4x2x32xf32> to vector<4x2x32xf32>
    %183 = vector.shape_cast %182 : vector<4x2x32xf32> to vector<4x1x2x32xf32>
    %184 = vector.extract_strided_slice %165 {offsets = [6, 0, 0, 0], sizes = [1, 4, 2, 32], strides = [1, 1, 1, 1]} : vector<8x4x2x32xf32> to vector<1x4x2x32xf32>
    %185 = vector.shape_cast %184 : vector<1x4x2x32xf32> to vector<4x2x32xf32>
    %186 = vector.shape_cast %185 : vector<4x2x32xf32> to vector<4x1x2x32xf32>
    %187 = vector.extract_strided_slice %165 {offsets = [7, 0, 0, 0], sizes = [1, 4, 2, 32], strides = [1, 1, 1, 1]} : vector<8x4x2x32xf32> to vector<1x4x2x32xf32>
    %188 = vector.shape_cast %187 : vector<1x4x2x32xf32> to vector<4x2x32xf32>
    %189 = vector.shape_cast %188 : vector<4x2x32xf32> to vector<4x1x2x32xf32>
    %190 = tpu.concatenate %168, %171, %174, %177, %180, %183, %186, %189 in 1 : vector<4x1x2x32xf32>, vector<4x1x2x32xf32>, vector<4x1x2x32xf32>, vector<4x1x2x32xf32>, vector<4x1x2x32xf32>, vector<4x1x2x32xf32>, vector<4x1x2x32xf32>, vector<4x1x2x32xf32> -> vector<4x8x2x32xf32>
    %191 = vector.shape_cast %190 : vector<4x8x2x32xf32> to vector<64x32xf32>
    %192 = arith.addf %80, %191 : vector<64x32xf32>
    %c0_38 = arith.constant 0 : index
    %c0_39 = arith.constant 0 : index
    %193 = vector.load %arg6[%c0_38, %c0_39] : memref<1x32xf32, #tpu.memory_space<vmem>>, vector<1x32xf32>
    %194 = vector.broadcast %193 : vector<1x32xf32> to vector<64x32xf32>
    %195 = arith.addf %192, %194 : vector<64x32xf32>
    %196 = arith.addf %0, %195 : vector<64x32xf32>
    %c0_40 = arith.constant 0 : index
    %c0_41 = arith.constant 0 : index
    %197 = vector.load %arg7[%c0_40, %c0_41] : memref<1x32xf32, #tpu.memory_space<vmem>>, vector<1x32xf32>
    %c0_42 = arith.constant 0 : index
    %c0_43 = arith.constant 0 : index
    %198 = vector.load %arg8[%c0_42, %c0_43] : memref<1x32xf32, #tpu.memory_space<vmem>>, vector<1x32xf32>
    %cst_44 = arith.constant dense<0.000000e+00> : vector<64xf32>
    %199 = vector.multi_reduction <add>, %196, %cst_44 [1] : vector<64x32xf32> to vector<64xf32>
    %200 = vector.shape_cast %199 : vector<64xf32> to vector<64x1xf32>
    %cst_45 = arith.constant 3.200000e+01 : f32
    %201 = vector.broadcast %cst_45 : f32 to vector<64x1xf32>
    %202 = arith.divf %200, %201 : vector<64x1xf32>
    %203 = vector.broadcast %202 : vector<64x1xf32> to vector<64x32xf32>
    %204 = arith.subf %196, %203 : vector<64x32xf32>
    %205 = arith.mulf %204, %204 : vector<64x32xf32>
    %cst_46 = arith.constant dense<0.000000e+00> : vector<64xf32>
    %206 = vector.multi_reduction <add>, %205, %cst_46 [1] : vector<64x32xf32> to vector<64xf32>
    %207 = vector.shape_cast %206 : vector<64xf32> to vector<64x1xf32>
    %cst_47 = arith.constant 3.200000e+01 : f32
    %208 = vector.broadcast %cst_47 : f32 to vector<64x1xf32>
    %209 = arith.divf %207, %208 : vector<64x1xf32>
    %cst_48 = arith.constant 9.99999974E-6 : f32
    %210 = vector.broadcast %cst_48 : f32 to vector<64x1xf32>
    %211 = arith.addf %209, %210 : vector<64x1xf32>
    %212 = math.rsqrt %211 : vector<64x1xf32>
    %213 = vector.broadcast %212 : vector<64x1xf32> to vector<64x32xf32>
    %214 = arith.mulf %204, %213 : vector<64x32xf32>
    %215 = vector.broadcast %197 : vector<1x32xf32> to vector<64x32xf32>
    %216 = arith.mulf %214, %215 : vector<64x32xf32>
    %217 = vector.broadcast %198 : vector<1x32xf32> to vector<64x32xf32>
    %218 = arith.addf %216, %217 : vector<64x32xf32>
    %219 = arith.truncf %218 : vector<64x32xf32> to vector<64x32xbf16>
    %c0_49 = arith.constant 0 : index
    %c0_50 = arith.constant 0 : index
    %220 = vector.load %arg9[%c0_49, %c0_50] : memref<32x64xbf16, #tpu.memory_space<vmem>>, vector<32x64xbf16>
    %cst_51 = arith.constant dense<0.000000e+00> : vector<64x64xf32>
    %221 = tpu.matmul %219, %220, %cst_51 {dimension_numbers = #tpu.dot_dimension_numbers<[1], [0], [0], [1], [0, 0, 1, 1], [], []>} : vector<64x32xbf16>, vector<32x64xbf16>, vector<64x64xf32> -> vector<64x64xf32>
    %c0_52 = arith.constant 0 : index
    %c0_53 = arith.constant 0 : index
    %222 = vector.load %arg10[%c0_52, %c0_53] : memref<1x64xf32, #tpu.memory_space<vmem>>, vector<1x64xf32>
    %223 = vector.broadcast %222 : vector<1x64xf32> to vector<64x64xf32>
    %224 = arith.addf %221, %223 : vector<64x64xf32>
    %cst_54 = arith.constant 0.000000e+00 : f32
    %225 = vector.broadcast %cst_54 : f32 to vector<64x64xf32>
    %226 = arith.maximumf %224, %225 : vector<64x64xf32>
    %227 = arith.truncf %226 : vector<64x64xf32> to vector<64x64xbf16>
    %c0_55 = arith.constant 0 : index
    %c0_56 = arith.constant 0 : index
    %228 = vector.load %arg11[%c0_55, %c0_56] : memref<64x32xbf16, #tpu.memory_space<vmem>>, vector<64x32xbf16>
    %cst_57 = arith.constant dense<0.000000e+00> : vector<64x32xf32>
    %229 = tpu.matmul %227, %228, %cst_57 {dimension_numbers = #tpu.dot_dimension_numbers<[1], [0], [0], [1], [0, 0, 1, 1], [], []>} : vector<64x64xbf16>, vector<64x32xbf16>, vector<64x32xf32> -> vector<64x32xf32>
    %c0_58 = arith.constant 0 : index
    %c0_59 = arith.constant 0 : index
    %230 = vector.load %arg12[%c0_58, %c0_59] : memref<1x32xf32, #tpu.memory_space<vmem>>, vector<1x32xf32>
    %231 = vector.broadcast %230 : vector<1x32xf32> to vector<64x32xf32>
    %232 = arith.addf %229, %231 : vector<64x32xf32>
    %233 = arith.addf %196, %232 : vector<64x32xf32>
    %c0_60 = arith.constant 0 : index
    %c0_61 = arith.constant 0 : index
    %234 = vector.load %arg13[%c0_60, %c0_61] : memref<64x32xf32, #tpu.memory_space<vmem>>, vector<64x32xf32>
    tpu.vector_store %arg13[%c0_60, %c0_61], %233 {strides = array<i32>} : memref<64x32xf32, #tpu.memory_space<vmem>>, vector<64x32xf32>,
    return
  }
}

</mosaic_0001>

<llo_original>
// kernel: transformer_encoder_layer_forward.1
$region0: #{transformer_encoder_layer_forward.1}
  #allocation0 [shape = 'u32[]', space=smem, size = 0x4, offset = 0x4, fixed_abs, tag = 'smem constant byte address 0x4 - core index']
  #allocation1 [shape = 'u32[72,128]{1,0:T(1,128)}', space=vmem, size = 0x9000, scoped, tag = 'internal scratch']
  %s0 = inlined_call_operand.vmem [shape: f32[64,32], index: 0, kind: input, shape index: {}]
  %s1 = inlined_call_operand.vmem [shape: f32[1,32], index: 1, kind: input, shape index: {}]
  %s2 = inlined_call_operand.vmem [shape: f32[1,32], index: 2, kind: input, shape index: {}]
  %s3 = inlined_call_operand.vmem [shape: bf16[32,96], index: 3, kind: input, shape index: {}]
  %s4 = inlined_call_operand.vmem [shape: f32[1,96], index: 4, kind: input, shape index: {}]
  %s5 = inlined_call_operand.vmem [shape: bf16[32,32], index: 5, kind: input, shape index: {}]
  %s6 = inlined_call_operand.vmem [shape: f32[1,32], index: 6, kind: input, shape index: {}]
  %s7 = inlined_call_operand.vmem [shape: f32[1,32], index: 7, kind: input, shape index: {}]
  %s8 = inlined_call_operand.vmem [shape: f32[1,32], index: 8, kind: input, shape index: {}]
  %s9 = inlined_call_operand.vmem [shape: bf16[32,64], index: 9, kind: input, shape index: {}]
  %s10 = inlined_call_operand.vmem [shape: f32[1,64], index: 10, kind: input, shape index: {}]
  %s11 = inlined_call_operand.vmem [shape: bf16[64,32], index: 11, kind: input, shape index: {}]
  %s12 = inlined_call_operand.vmem [shape: f32[1,32], index: 12, kind: input, shape index: {}]
  %s13 = inlined_call_operand.vmem [shape: f32[64,32], index: 13, kind: output, shape index: {}]
  %s14 = sld [smem:[#allocation0]]
  $region62: #{transformer_encoder_layer_forward.1} parent=0
    _
  %s16 = ssub.s32 1, %s14
  %s17 = scalar_select 0, %s16, %s14
  // Predicated region
  $region2: #{transformer_encoder_layer_forward.1} parent=0 // pred_check
    _
  $region3: #{transformer_encoder_layer_forward.1} parent=0 // pred_check_branch
    %19 = sbr.rel (0) target = $region5
  $region4: #{transformer_encoder_layer_forward.1} parent=0 // pred_region
    _
  $region5: #{transformer_encoder_layer_forward.1} parent=0 // pred_fallthru
    _
  // Predicated region
  $region6: #{transformer_encoder_layer_forward.1} parent=0 // pred_check
    _
  $region7: #{transformer_encoder_layer_forward.1} parent=0 // pred_check_branch
    %21 = sbr.rel (0) target = $region9
  $region8: #{transformer_encoder_layer_forward.1} parent=0 // pred_region
    _
  $region9: #{transformer_encoder_layer_forward.1} parent=0 // pred_fallthru
    _
  // Predicated region
  $region10: #{transformer_encoder_layer_forward.1} parent=0 // pred_check
    _
  $region11: #{transformer_encoder_layer_forward.1} parent=0 // pred_check_branch
    %23 = sbr.rel (0) target = $region13
  $region12: #{transformer_encoder_layer_forward.1} parent=0 // pred_region
    _
  $region13: #{transformer_encoder_layer_forward.1} parent=0 // pred_fallthru
    _
  // Predicated region
  $region14: #{transformer_encoder_layer_forward.1} parent=0 // pred_check
    _
  $region15: #{transformer_encoder_layer_forward.1} parent=0 // pred_check_branch
    %25 = sbr.rel (0) target = $region17
  $region16: #{transformer_encoder_layer_forward.1} parent=0 // pred_region
    _
  $region17: #{transformer_encoder_layer_forward.1} parent=0 // pred_fallthru
    _
  // Predicated region
  $region18: #{transformer_encoder_layer_forward.1} parent=0 // pred_check
    _
  $region19: #{transformer_encoder_layer_forward.1} parent=0 // pred_check_branch
    %27 = sbr.rel (0) target = $region21
  $region20: #{transformer_encoder_layer_forward.1} parent=0 // pred_region
    _
  $region21: #{transformer_encoder_layer_forward.1} parent=0 // pred_fallthru
    _
  // Predicated region
  $region22: #{transformer_encoder_layer_forward.1} parent=0 // pred_check
    _
  $region23: #{transformer_encoder_layer_forward.1} parent=0 // pred_check_branch
    %29 = sbr.rel (0) target = $region25
  $region24: #{transformer_encoder_layer_forward.1} parent=0 // pred_region
    _
  $region25: #{transformer_encoder_layer_forward.1} parent=0 // pred_fallthru
    _
  // Predicated region
  $region26: #{transformer_encoder_layer_forward.1} parent=0 // pred_check
    _
  $region27: #{transformer_encoder_layer_forward.1} parent=0 // pred_check_branch
    %31 = sbr.rel (0) target = $region29
  $region28: #{transformer_encoder_layer_forward.1} parent=0 // pred_region
    _
  $region29: #{transformer_encoder_layer_forward.1} parent=0 // pred_fallthru
    _
  // Predicated region
  $region30: #{transformer_encoder_layer_forward.1} parent=0 // pred_check
    _
  $region31: #{transformer_encoder_layer_forward.1} parent=0 // pred_check_branch
    %33 = sbr.rel (0) target = $region33
  $region32: #{transformer_encoder_layer_forward.1} parent=0 // pred_region
    _
  $region33: #{transformer_encoder_layer_forward.1} parent=0 // pred_fallthru
    _
  // Predicated region
  $region34: #{transformer_encoder_layer_forward.1} parent=0 // pred_check
    _
  $region35: #{transformer_encoder_layer_forward.1} parent=0 // pred_check_branch
    %35 = sbr.rel (0) target = $region37
  $region36: #{transformer_encoder_layer_forward.1} parent=0 // pred_region
    _
  $region37: #{transformer_encoder_layer_forward.1} parent=0 // pred_fallthru
    _
  // Predicated region
  $region38: #{transformer_encoder_layer_forward.1} parent=0 // pred_check
    _
  $region39: #{transformer_encoder_layer_forward.1} parent=0 // pred_check_branch
    %37 = sbr.rel (0) target = $region41
  $region40: #{transformer_encoder_layer_forward.1} parent=0 // pred_region
    _
  $region41: #{transformer_encoder_layer_forward.1} parent=0 // pred_fallthru
    _
  // Predicated region
  $region42: #{transformer_encoder_layer_forward.1} parent=0 // pred_check
    _
  $region43: #{transformer_encoder_layer_forward.1} parent=0 // pred_check_branch
    %39 = sbr.rel (0) target = $region45
  $region44: #{transformer_encoder_layer_forward.1} parent=0 // pred_region
    _
  $region45: #{transformer_encoder_layer_forward.1} parent=0 // pred_fallthru
    _
  // Predicated region
  $region46: #{transformer_encoder_layer_forward.1} parent=0 // pred_check
    _
  $region47: #{transformer_encoder_layer_forward.1} parent=0 // pred_check_branch
    %41 = sbr.rel (0) target = $region49
  $region48: #{transformer_encoder_layer_forward.1} parent=0 // pred_region
    _
  $region49: #{transformer_encoder_layer_forward.1} parent=0 // pred_fallthru
    _
  // Predicated region
  $region50: #{transformer_encoder_layer_forward.1} parent=0 // pred_check
    _
  $region51: #{transformer_encoder_layer_forward.1} parent=0 // pred_check_branch
    %43 = sbr.rel (0) target = $region53
  $region52: #{transformer_encoder_layer_forward.1} parent=0 // pred_region
    _
  $region53: #{transformer_encoder_layer_forward.1} parent=0 // pred_fallthru
    _
  %v45 = vld [vmem:[%s0] sm:$0xff]
  %v46 = vld [vmem:[%s0 + $0x8] sm:$0xff]
  %v47 = vld [vmem:[%s0 + $0x10] sm:$0xff]
  %v48 = vld [vmem:[%s0 + $0x18] sm:$0xff]
  %v49 = vld [vmem:[%s0 + $0x20] sm:$0xff]
  %v50 = vld [vmem:[%s0 + $0x28] sm:$0xff]
  %v51 = vld [vmem:[%s0 + $0x30] sm:$0xff]
  %v52 = vld [vmem:[%s0 + $0x38] sm:$0xff]
  %v53 = vld [vmem:[%s1] sm:$0x1]
  %v54 = vld [vmem:[%s2] sm:$0x1]
  %vm55 = vcmask 261120
  %v56 = vsel %vm55, %v45, 0.0
  %57 = vadd.xlane.f32.xlu0 %v56
  %v58 = vpop.xlane.xlu0 %57
  %v59 = vsel %vm55, %v46, 0.0
  %60 = vadd.xlane.f32.xlu0 %v59
  %v61 = vpop.xlane.xlu0 %60
  %v62 = vsel %vm55, %v47, 0.0
  %63 = vadd.xlane.f32.xlu0 %v62
  %v64 = vpop.xlane.xlu0 %63
  %v65 = vsel %vm55, %v48, 0.0
  %66 = vadd.xlane.f32.xlu0 %v65
  %v67 = vpop.xlane.xlu0 %66
  %v68 = vsel %vm55, %v49, 0.0
  %69 = vadd.xlane.f32.xlu0 %v68
  %v70 = vpop.xlane.xlu0 %69
  %v71 = vsel %vm55, %v50, 0.0
  %72 = vadd.xlane.f32.xlu0 %v71
  %v73 = vpop.xlane.xlu0 %72
  %v74 = vsel %vm55, %v51, 0.0
  %75 = vadd.xlane.f32.xlu0 %v74
  %v76 = vpop.xlane.xlu0 %75
  %v77 = vsel %vm55, %v52, 0.0
  %78 = vadd.xlane.f32.xlu0 %v77
  %v79 = vpop.xlane.xlu0 %78
  %v80 = vrcp.pop 32.0
  %v81 = vmul.f32 32.0, %v80
  %v82 = vsub.f32 1.0, %v81
  %v83 = vmul.f32 %v80, %v82
  %v84 = vadd.f32 %v80, %v83
  %vm85 = vweird.f32 %v80
  %v86 = vsel %vm85, %v80, %v84
  %v87 = vmul.f32 %v58, %v86
  %v88 = vmul.f32 %v61, %v86
  %v89 = vmul.f32 %v64, %v86
  %v90 = vmul.f32 %v67, %v86
  %v91 = vmul.f32 %v70, %v86
  %v92 = vmul.f32 %v73, %v86
  %v93 = vmul.f32 %v76, %v86
  %v94 = vmul.f32 %v79, %v86
  %v95 = vsub.f32 %v45, %v87
  %v96 = vsub.f32 %v46, %v88
  %v97 = vsub.f32 %v47, %v89
  %v98 = vsub.f32 %v48, %v90
  %v99 = vsub.f32 %v49, %v91
  %v100 = vsub.f32 %v50, %v92
  %v101 = vsub.f32 %v51, %v93
  %v102 = vsub.f32 %v52, %v94
  %v103 = vmul.f32 %v95, %v95
  %v104 = vmul.f32 %v96, %v96
  %v105 = vmul.f32 %v97, %v97
  %v106 = vmul.f32 %v98, %v98
  %v107 = vmul.f32 %v99, %v99
  %v108 = vmul.f32 %v100, %v100
  %v109 = vmul.f32 %v101, %v101
  %v110 = vmul.f32 %v102, %v102
  %v111 = vsel %vm55, %v103, 0.0
  %112 = vadd.xlane.f32.xlu0 %v111
  %v113 = vpop.xlane.xlu0 %112
  %v114 = vsel %vm55, %v104, 0.0
  %115 = vadd.xlane.f32.xlu0 %v114
  %v116 = vpop.xlane.xlu0 %115
  %v117 = vsel %vm55, %v105, 0.0
  %118 = vadd.xlane.f32.xlu0 %v117
  %v119 = vpop.xlane.xlu0 %118
  %v120 = vsel %vm55, %v106, 0.0
  %121 = vadd.xlane.f32.xlu0 %v120
  %v122 = vpop.xlane.xlu0 %121
  %v123 = vsel %vm55, %v107, 0.0
  %124 = vadd.xlane.f32.xlu0 %v123
  %v125 = vpop.xlane.xlu0 %124
  %v126 = vsel %vm55, %v108, 0.0
  %127 = vadd.xlane.f32.xlu0 %v126
  %v128 = vpop.xlane.xlu0 %127
  %v129 = vsel %vm55, %v109, 0.0
  %130 = vadd.xlane.f32.xlu0 %v129
  %v131 = vpop.xlane.xlu0 %130
  %v132 = vsel %vm55, %v110, 0.0
  %133 = vadd.xlane.f32.xlu0 %v132
  %v134 = vpop.xlane.xlu0 %133
  %v135 = vmul.f32 %v113, %v86
  %v136 = vmul.f32 %v116, %v86
  %v137 = vmul.f32 %v119, %v86
  %v138 = vmul.f32 %v122, %v86
  %v139 = vmul.f32 %v125, %v86
  %v140 = vmul.f32 %v128, %v86
  %v141 = vmul.f32 %v131, %v86
  %v142 = vmul.f32 %v134, %v86
  %v143 = vadd.f32 %v135, 1e-05
  %v144 = vadd.f32 %v136, 1e-05
  %v145 = vadd.f32 %v137, 1e-05
  %v146 = vadd.f32 %v138, 1e-05
  %v147 = vadd.f32 %v139, 1e-05
  %v148 = vadd.f32 %v140, 1e-05
  %v149 = vadd.f32 %v141, 1e-05
  %v150 = vadd.f32 %v142, 1e-05
  %v151 = vrsqrt.pop %v143
  %v152 = vmul.f32 %v151, %v143
  %v153 = vmul.f32 %v152, %v151
  %v154 = vmul.f32 0.5, %v153
  %v155 = vsub.f32 1.5, %v154
  %v156 = vmul.f32 %v151, %v155
  %vm157 = vweird.f32 %v143
  %vm158 = vweird.f32 %v151
  %vm159 = vmor %vm157, %vm158
  %v160 = vsel %vm159, %v151, %v156
  %v161 = vrsqrt.pop %v144
  %v162 = vmul.f32 %v161, %v144
  %v163 = vmul.f32 %v162, %v161
  %v164 = vmul.f32 0.5, %v163
  %v165 = vsub.f32 1.5, %v164
  %v166 = vmul.f32 %v161, %v165
  %vm167 = vweird.f32 %v144
  %vm168 = vweird.f32 %v161
  %vm169 = vmor %vm167, %vm168
  %v170 = vsel %vm169, %v161, %v166
  %v171 = vrsqrt.pop %v145
  %v172 = vmul.f32 %v171, %v145
  %v173 = vmul.f32 %v172, %v171
  %v174 = vmul.f32 0.5, %v173
  %v175 = vsub.f32 1.5, %v174
  %v176 = vmul.f32 %v171, %v175
  %vm177 = vweird.f32 %v145
  %vm178 = vweird.f32 %v171
  %vm179 = vmor %vm177, %vm178
  %v180 = vsel %vm179, %v171, %v176
  %v181 = vrsqrt.pop %v146
  %v182 = vmul.f32 %v181, %v146
  %v183 = vmul.f32 %v182, %v181
  %v184 = vmul.f32 0.5, %v183
  %v185 = vsub.f32 1.5, %v184
  %v186 = vmul.f32 %v181, %v185
  %vm187 = vweird.f32 %v146
  %vm188 = vweird.f32 %v181
  %vm189 = vmor %vm187, %vm188
  %v190 = vsel %vm189, %v181, %v186
  %v191 = vrsqrt.pop %v147
  %v192 = vmul.f32 %v191, %v147
  %v193 = vmul.f32 %v192, %v191
  %v194 = vmul.f32 0.5, %v193
  %v195 = vsub.f32 1.5, %v194
  %v196 = vmul.f32 %v191, %v195
  %vm197 = vweird.f32 %v147
  %vm198 = vweird.f32 %v191
  %vm199 = vmor %vm197, %vm198
  %v200 = vsel %vm199, %v191, %v196
  %v201 = vrsqrt.pop %v148
  %v202 = vmul.f32 %v201, %v148
  %v203 = vmul.f32 %v202, %v201
  %v204 = vmul.f32 0.5, %v203
  %v205 = vsub.f32 1.5, %v204
  %v206 = vmul.f32 %v201, %v205
  %vm207 = vweird.f32 %v148
  %vm208 = vweird.f32 %v201
  %vm209 = vmor %vm207, %vm208
  %v210 = vsel %vm209, %v201, %v206
  %v211 = vrsqrt.pop %v149
  %v212 = vmul.f32 %v211, %v149
  %v213 = vmul.f32 %v212, %v211
  %v214 = vmul.f32 0.5, %v213
  %v215 = vsub.f32 1.5, %v214
  %v216 = vmul.f32 %v211, %v215
  %vm217 = vweird.f32 %v149
  %vm218 = vweird.f32 %v211
  %vm219 = vmor %vm217, %vm218
  %v220 = vsel %vm219, %v211, %v216
  %v221 = vrsqrt.pop %v150
  %v222 = vmul.f32 %v221, %v150
  %v223 = vmul.f32 %v222, %v221
  %v224 = vmul.f32 0.5, %v223
  %v225 = vsub.f32 1.5, %v224
  %v226 = vmul.f32 %v221, %v225
  %vm227 = vweird.f32 %v150
  %vm228 = vweird.f32 %v221
  %vm229 = vmor %vm227, %vm228
  %v230 = vsel %vm229, %v221, %v226
  %v231 = vmul.f32 %v95, %v160
  %v232 = vmul.f32 %v96, %v170
  %v233 = vmul.f32 %v97, %v180
  %v234 = vmul.f32 %v98, %v190
  %v235 = vmul.f32 %v99, %v200
  %v236 = vmul.f32 %v100, %v210
  %v237 = vmul.f32 %v101, %v220
  %v238 = vmul.f32 %v102, %v230
  %v240 = vperm.slane %v53, 0
  %v242 = vmul.f32 %v231, %v240
  %v243 = vmul.f32 %v232, %v240
  %v244 = vmul.f32 %v233, %v240
  %v245 = vmul.f32 %v234, %v240
  %v246 = vmul.f32 %v235, %v240
  %v247 = vmul.f32 %v236, %v240
  %v248 = vmul.f32 %v237, %v240
  %v249 = vmul.f32 %v238, %v240
  %v251 = vperm.slane %v54, 0
  %v253 = vadd.f32 %v242, %v251
  %v254 = vadd.f32 %v243, %v251
  %v255 = vadd.f32 %v244, %v251
  %v256 = vadd.f32 %v245, %v251
  %v257 = vadd.f32 %v246, %v251
  %v258 = vadd.f32 %v247, %v251
  %v259 = vadd.f32 %v248, %v251
  %v260 = vadd.f32 %v249, %v251
  %v261 = vpack.c.bf16 %v254, %v253
  %v262 = vpack.c.bf16 %v256, %v255
  %v263 = vpack.c.bf16 %v258, %v257
  %v264 = vpack.c.bf16 %v260, %v259
  %v265 = vld [vmem:[%s3] sm:$0xf]
  %v266 = vld [vmem:[%s3 + $0x4] sm:$0xf]
  %v267 = vld [vmem:[%s3 + $0x8] sm:$0xf]
  %v268 = vld [vmem:[%s3 + $0xc] sm:$0xf]
  %v269 = vld [vmem:[%s4] sm:$0x1]
  %v271 = vperm.slane %v269, 0
  %v277 = vunpack.c.l.b16 %v265
  %v278 = vunpack.c.l.b16 %v266
  %v279 = vunpack.c.l.b16 %v267
  %v280 = vunpack.c.l.b16 %v268
  %v281 = vpack.c.b16 %v278, %v277
  %v282 = vpack.c.b16 %v280, %v279
  %v286 = vsel %vm55, %v261, 0
  %v289 = vsel %vm55, %v262, 0
  %v292 = vsel %vm55, %v263, 0
  %v295 = vsel %vm55, %v264, 0
  %297 = vmatpush.bf16.msra.mxu0 0
  %298 = vmatpush.bf16.msra.mxu0 0
  %299 = vmatpush.bf16.msra.mxu0 0
  %300 = vmatpush.bf16.msra.mxu0 0
  %301 = vmatpush.bf16.msra.mxu0 0
  %302 = vmatpush.bf16.msra.mxu0 0
  %303 = vmatpush.bf16.msra.mxu0 %v282
  %304 = vmatpush.bf16.msra.mxu0 %v281
  %305 = vmatmul.bf16.gmra.mxu0 %v286
  %v306 = vpop.f32.mrf.mxu0
  %v307 = vadd.f32 %v271, %v306
  %v308 = vpop.f32.mrf.mxu0
  %v309 = vadd.f32 %v271, %v308
  %310 = vmatmul.bf16.gmra.mxu0 %v289
  %v311 = vpop.f32.mrf.mxu0
  %v312 = vadd.f32 %v271, %v311
  %v313 = vpop.f32.mrf.mxu0
  %v314 = vadd.f32 %v271, %v313
  %315 = vmatmul.bf16.gmra.mxu0 %v292
  %v316 = vpop.f32.mrf.mxu0
  %v317 = vadd.f32 %v271, %v316
  %v318 = vpop.f32.mrf.mxu0
  %v319 = vadd.f32 %v271, %v318
  %320 = vmatmul.bf16.gmra.mxu0 %v295
  %v321 = vpop.f32.mrf.mxu0
  %v322 = vadd.f32 %v271, %v321
  %v323 = vpop.f32.mrf.mxu0
  %v324 = vadd.f32 %v271, %v323
  %325 = vdwg.mxu0
  %v326 = vld [vmem:[%s5] sm:$0xf]
  %v327 = vld [vmem:[%s5 + $0x4] sm:$0xf]
  %v328 = vld [vmem:[%s5 + $0x8] sm:$0xf]
  %v329 = vld [vmem:[%s5 + $0xc] sm:$0xf]
  %v330 = vpack.c.bf16 %v307, %v307
  %v331 = vpack.c.bf16 %v309, %v309
  %v332 = vpack.c.bf16 %v312, %v312
  %v333 = vpack.c.bf16 %v314, %v314
  %v334 = vpack.c.bf16 %v317, %v317
  %v335 = vpack.c.bf16 %v319, %v319
  %v336 = vpack.c.bf16 %v322, %v322
  %v337 = vpack.c.bf16 %v324, %v324
  %v340 = vunpack.c.l.b16 %v330
  %v341 = vunpack.c.l.b16 %v331
  %v342 = vpack.c.b16 %v341, %v340
  %343 = vrot.lane.b32.xlu0 %v342, 112
  %v344 = vpop.permute.xlu0 %343
  %vm345 = vcmask 64512
  %v347 = vsel %vm345, %v342, 0
  %v350 = vsel %vm345, %v344, 0
  %352 = vmatpush.bf16.xpose.msra.mxu0 0
  %353 = vmatpush.bf16.xpose.msra.mxu0 0
  %354 = vmatpush.bf16.xpose.msra.mxu0 0
  %355 = vmatpush.bf16.xpose.msra.mxu0 0
  %356 = vmatpush.bf16.xpose.msra.mxu0 0
  %357 = vmatpush.bf16.xpose.msra.mxu0 0
  %358 = vmatpush.bf16.xpose.msra.mxu0 0
  %359 = vmatpush.bf16.xpose.msra.mxu0 %v350
  %360 = vmatmul.bf16.gmra.mxu0 %v347
  %v361 = vpop.f32.mrf.mxu0
  %v362 = vadd.f32 0.0, %v361
  %v363 = vpop.f32.mrf.mxu0
  %v364 = vadd.f32 0.0, %v363
  %365 = vdwg.mxu0
  %v368 = vunpack.c.l.b16 %v332
  %v369 = vunpack.c.l.b16 %v333
  %v370 = vpack.c.b16 %v369, %v368
  %371 = vrot.lane.b32.xlu0 %v370, 112
  %v372 = vpop.permute.xlu0 %371
  %v374 = vsel %vm345, %v370, 0
  %v377 = vsel %vm345, %v372, 0
  %379 = vmatpush.bf16.xpose.msra.mxu0 0
  %380 = vmatpush.bf16.xpose.msra.mxu0 0
  %381 = vmatpush.bf16.xpose.msra.mxu0 0
  %382 = vmatpush.bf16.xpose.msra.mxu0 0
  %383 = vmatpush.bf16.xpose.msra.mxu0 0
  %384 = vmatpush.bf16.xpose.msra.mxu0 0
  %385 = vmatpush.bf16.xpose.msra.mxu0 0
  %386 = vmatpush.bf16.xpose.msra.mxu0 %v377
  %387 = vmatmul.bf16.gmra.mxu0 %v374
  %v388 = vpop.f32.mrf.mxu0
  %v389 = vadd.f32 0.0, %v388
  %v390 = vpop.f32.mrf.mxu0
  %v391 = vadd.f32 0.0, %v390
  %392 = vdwg.mxu0
  %v395 = vunpack.c.l.b16 %v334
  %v396 = vunpack.c.l.b16 %v335
  %v397 = vpack.c.b16 %v396, %v395
  %398 = vrot.lane.b32.xlu0 %v397, 112
  %v399 = vpop.permute.xlu0 %398
  %v401 = vsel %vm345, %v397, 0
  %v404 = vsel %vm345, %v399, 0
  %406 = vmatpush.bf16.xpose.msra.mxu0 0
  %407 = vmatpush.bf16.xpose.msra.mxu0 0
  %408 = vmatpush.bf16.xpose.msra.mxu0 0
  %409 = vmatpush.bf16.xpose.msra.mxu0 0
  %410 = vmatpush.bf16.xpose.msra.mxu0 0
  %411 = vmatpush.bf16.xpose.msra.mxu0 0
  %412 = vmatpush.bf16.xpose.msra.mxu0 0
  %413 = vmatpush.bf16.xpose.msra.mxu0 %v404
  %414 = vmatmul.bf16.gmra.mxu0 %v401
  %v415 = vpop.f32.mrf.mxu0
  %v416 = vadd.f32 0.0, %v415
  %v417 = vpop.f32.mrf.mxu0
  %v418 = vadd.f32 0.0, %v417
  %419 = vdwg.mxu0
  %v422 = vunpack.c.l.b16 %v336
  %v423 = vunpack.c.l.b16 %v337
  %v424 = vpack.c.b16 %v423, %v422
  %425 = vrot.lane.b32.xlu0 %v424, 112
  %v426 = vpop.permute.xlu0 %425
  %v428 = vsel %vm345, %v424, 0
  %v431 = vsel %vm345, %v426, 0
  %433 = vmatpush.bf16.xpose.msra.mxu0 0
  %434 = vmatpush.bf16.xpose.msra.mxu0 0
  %435 = vmatpush.bf16.xpose.msra.mxu0 0
  %436 = vmatpush.bf16.xpose.msra.mxu0 0
  %437 = vmatpush.bf16.xpose.msra.mxu0 0
  %438 = vmatpush.bf16.xpose.msra.mxu0 0
  %439 = vmatpush.bf16.xpose.msra.mxu0 0
  %440 = vmatpush.bf16.xpose.msra.mxu0 %v431
  %441 = vmatmul.bf16.gmra.mxu0 %v428
  %v442 = vpop.f32.mrf.mxu0
  %v443 = vadd.f32 0.0, %v442
  %v444 = vpop.f32.mrf.mxu0
  %v445 = vadd.f32 0.0, %v444
  %446 = vdwg.mxu0
  %vm447 = vcmask 130048
  %v448 = vsel %vm447, %v362, -inf
  %449 = vmax.xlane.f32.xlu0 %v448
  %v450 = vpop.xlane.xlu0 %449
  %v451 = vsel %vm447, %v364, -inf
  %452 = vmax.xlane.f32.xlu0 %v451
  %v453 = vpop.xlane.xlu0 %452
  %v454 = vsel %vm447, %v389, -inf
  %455 = vmax.xlane.f32.xlu0 %v454
  %v456 = vpop.xlane.xlu0 %455
  %v457 = vsel %vm447, %v391, -inf
  %458 = vmax.xlane.f32.xlu0 %v457
  %v459 = vpop.xlane.xlu0 %458
  %v460 = vsel %vm447, %v416, -inf
  %461 = vmax.xlane.f32.xlu0 %v460
  %v462 = vpop.xlane.xlu0 %461
  %v463 = vsel %vm447, %v418, -inf
  %464 = vmax.xlane.f32.xlu0 %v463
  %v465 = vpop.xlane.xlu0 %464
  %v466 = vsel %vm447, %v443, -inf
  %467 = vmax.xlane.f32.xlu0 %v466
  %v468 = vpop.xlane.xlu0 %467
  %v469 = vsel %vm447, %v445, -inf
  %470 = vmax.xlane.f32.xlu0 %v469
  %v471 = vpop.xlane.xlu0 %470
  %v472 = vsub.f32 %v362, %v450
  %v473 = vsub.f32 %v364, %v453
  %v474 = vsub.f32 %v389, %v456
  %v475 = vsub.f32 %v391, %v459
  %v476 = vsub.f32 %v416, %v462
  %v477 = vsub.f32 %v418, %v465
  %v478 = vsub.f32 %v443, %v468
  %v479 = vsub.f32 %v445, %v471
  %v480 = vmul.f32 %v472, 1.442695
  %v481 = vpow.pop %v480
  %v482 = vmul.f32 %v473, 1.442695
  %v483 = vpow.pop %v482
  %v484 = vmul.f32 %v474, 1.442695
  %v485 = vpow.pop %v484
  %v486 = vmul.f32 %v475, 1.442695
  %v487 = vpow.pop %v486
  %v488 = vmul.f32 %v476, 1.442695
  %v489 = vpow.pop %v488
  %v490 = vmul.f32 %v477, 1.442695
  %v491 = vpow.pop %v490
  %v492 = vmul.f32 %v478, 1.442695
  %v493 = vpow.pop %v492
  %v494 = vmul.f32 %v479, 1.442695
  %v495 = vpow.pop %v494
  %v496 = vsel %vm447, %v481, 0.0
  %497 = vadd.xlane.f32.xlu0 %v496
  %v498 = vpop.xlane.xlu0 %497
  %v499 = vsel %vm447, %v483, 0.0
  %500 = vadd.xlane.f32.xlu0 %v499
  %v501 = vpop.xlane.xlu0 %500
  %v502 = vsel %vm447, %v485, 0.0
  %503 = vadd.xlane.f32.xlu0 %v502
  %v504 = vpop.xlane.xlu0 %503
  %v505 = vsel %vm447, %v487, 0.0
  %506 = vadd.xlane.f32.xlu0 %v505
  %v507 = vpop.xlane.xlu0 %506
  %v508 = vsel %vm447, %v489, 0.0
  %509 = vadd.xlane.f32.xlu0 %v508
  %v510 = vpop.xlane.xlu0 %509
  %v511 = vsel %vm447, %v491, 0.0
  %512 = vadd.xlane.f32.xlu0 %v511
  %v513 = vpop.xlane.xlu0 %512
  %v514 = vsel %vm447, %v493, 0.0
  %515 = vadd.xlane.f32.xlu0 %v514
  %v516 = vpop.xlane.xlu0 %515
  %v517 = vsel %vm447, %v495, 0.0
  %518 = vadd.xlane.f32.xlu0 %v517
  %v519 = vpop.xlane.xlu0 %518
  %v520 = vrcp.pop %v498
  %v521 = vrcp.pop %v501
  %v522 = vrcp.pop %v504
  %v523 = vrcp.pop %v507
  %v524 = vrcp.pop %v510
  %v525 = vrcp.pop %v513
  %v526 = vrcp.pop %v516
  %v527 = vrcp.pop %v519
  %v528 = vmul.f32 %v481, %v520
  %v529 = vmul.f32 %v483, %v521
  %v530 = vmul.f32 %v485, %v522
  %v531 = vmul.f32 %v487, %v523
  %v532 = vmul.f32 %v489, %v524
  %v533 = vmul.f32 %v491, %v525
  %v534 = vmul.f32 %v493, %v526
  %v535 = vmul.f32 %v495, %v527
  %v536 = vpack.c.bf16 %v528, %v528
  %v537 = vpack.c.bf16 %v529, %v529
  %v538 = vpack.c.bf16 %v530, %v530
  %v539 = vpack.c.bf16 %v531, %v531
  %v540 = vpack.c.bf16 %v532, %v532
  %v541 = vpack.c.bf16 %v533, %v533
  %v542 = vpack.c.bf16 %v534, %v534
  %v543 = vpack.c.bf16 %v535, %v535
  %v546 = vunpack.c.l.b16 %v536
  %v547 = vunpack.c.l.b16 %v537
  %v548 = vpack.c.b16 %v547, %v546
  %549 = vrot.lane.b32.xlu0 %v342, 96
  %v550 = vpop.permute.xlu0 %549
  %v553 = vsel %vm447, %v548, 0
  %555 = vmatpush.bf16.msra.mxu0 0
  %556 = vmatpush.bf16.msra.mxu0 0
  %557 = vmatpush.bf16.msra.mxu0 0
  %558 = vmatpush.bf16.msra.mxu0 0
  %559 = vmatpush.bf16.msra.mxu0 0
  %560 = vmatpush.bf16.msra.mxu0 0
  %561 = vmatpush.bf16.msra.mxu0 0
  %562 = vmatpush.bf16.msra.mxu0 %v550
  %563 = vmatmul.bf16.gmra.mxu0 %v553
  %v564 = vpop.f32.mrf.mxu0
  %v565 = vadd.f32 0.0, %v564
  %v566 = vpop.f32.mrf.mxu0
  %v567 = vadd.f32 0.0, %v566
  %568 = vdwg.mxu0
  %v571 = vunpack.c.l.b16 %v538
  %v572 = vunpack.c.l.b16 %v539
  %v573 = vpack.c.b16 %v572, %v571
  %574 = vrot.lane.b32.xlu0 %v370, 96
  %v575 = vpop.permute.xlu0 %574
  %v578 = vsel %vm447, %v573, 0
  %580 = vmatpush.bf16.msra.mxu0 0
  %581 = vmatpush.bf16.msra.mxu0 0
  %582 = vmatpush.bf16.msra.mxu0 0
  %583 = vmatpush.bf16.msra.mxu0 0
  %584 = vmatpush.bf16.msra.mxu0 0
  %585 = vmatpush.bf16.msra.mxu0 0
  %586 = vmatpush.bf16.msra.mxu0 0
  %587 = vmatpush.bf16.msra.mxu0 %v575
  %588 = vmatmul.bf16.gmra.mxu0 %v578
  %v589 = vpop.f32.mrf.mxu0
  %v590 = vadd.f32 0.0, %v589
  %v591 = vpop.f32.mrf.mxu0
  %v592 = vadd.f32 0.0, %v591
  %593 = vdwg.mxu0
  %v596 = vunpack.c.l.b16 %v540
  %v597 = vunpack.c.l.b16 %v541
  %v598 = vpack.c.b16 %v597, %v596
  %599 = vrot.lane.b32.xlu0 %v397, 96
  %v600 = vpop.permute.xlu0 %599
  %v603 = vsel %vm447, %v598, 0
  %605 = vmatpush.bf16.msra.mxu0 0
  %606 = vmatpush.bf16.msra.mxu0 0
  %607 = vmatpush.bf16.msra.mxu0 0
  %608 = vmatpush.bf16.msra.mxu0 0
  %609 = vmatpush.bf16.msra.mxu0 0
  %610 = vmatpush.bf16.msra.mxu0 0
  %611 = vmatpush.bf16.msra.mxu0 0
  %612 = vmatpush.bf16.msra.mxu0 %v600
  %613 = vmatmul.bf16.gmra.mxu0 %v603
  %v614 = vpop.f32.mrf.mxu0
  %v615 = vadd.f32 0.0, %v614
  %v616 = vpop.f32.mrf.mxu0
  %v617 = vadd.f32 0.0, %v616
  %618 = vdwg.mxu0
  %v621 = vunpack.c.l.b16 %v542
  %v622 = vunpack.c.l.b16 %v543
  %v623 = vpack.c.b16 %v622, %v621
  %624 = vrot.lane.b32.xlu0 %v424, 96
  %v625 = vpop.permute.xlu0 %624
  %v628 = vsel %vm447, %v623, 0
  %630 = vmatpush.bf16.msra.mxu0 0
  %631 = vmatpush.bf16.msra.mxu0 0
  %632 = vmatpush.bf16.msra.mxu0 0
  %633 = vmatpush.bf16.msra.mxu0 0
  %634 = vmatpush.bf16.msra.mxu0 0
  %635 = vmatpush.bf16.msra.mxu0 0
  %636 = vmatpush.bf16.msra.mxu0 0
  %637 = vmatpush.bf16.msra.mxu0 %v625
  %638 = vmatmul.bf16.gmra.mxu0 %v628
  %v639 = vpop.f32.mrf.mxu0
  %v640 = vadd.f32 0.0, %v639
  %v641 = vpop.f32.mrf.mxu0
  %v642 = vadd.f32 0.0, %v641
  %643 = vdwg.mxu0
  %v644 = vpack.c.bf16 %v567, %v565
  %v645 = vpack.c.bf16 %v592, %v590
  %v646 = vpack.c.bf16 %v617, %v615
  %v647 = vpack.c.bf16 %v642, %v640
  %648 = vrot.lane.b32.xlu0 %v342, 120
  %v649 = vpop.permute.xlu0 %648
  %650 = vrot.lane.b32.xlu0 %v342, 104
  %v651 = vpop.permute.xlu0 %650
  %v653 = vsel %vm345, %v649, 0
  %v656 = vsel %vm345, %v651, 0
  %658 = vmatpush.bf16.xpose.msra.mxu0 0
  %659 = vmatpush.bf16.xpose.msra.mxu0 0
  %660 = vmatpush.bf16.xpose.msra.mxu0 0
  %661 = vmatpush.bf16.xpose.msra.mxu0 0
  %662 = vmatpush.bf16.xpose.msra.mxu0 0
  %663 = vmatpush.bf16.xpose.msra.mxu0 0
  %664 = vmatpush.bf16.xpose.msra.mxu0 0
  %665 = vmatpush.bf16.xpose.msra.mxu0 %v656
  %666 = vmatmul.bf16.gmra.mxu0 %v653
  %v667 = vpop.f32.mrf.mxu0
  %v668 = vadd.f32 0.0, %v667
  %v669 = vpop.f32.mrf.mxu0
  %v670 = vadd.f32 0.0, %v669
  %671 = vdwg.mxu0
  %672 = vrot.lane.b32.xlu0 %v370, 120
  %v673 = vpop.permute.xlu0 %672
  %674 = vrot.lane.b32.xlu0 %v370, 104
  %v675 = vpop.permute.xlu0 %674
  %v677 = vsel %vm345, %v673, 0
  %v680 = vsel %vm345, %v675, 0
  %682 = vmatpush.bf16.xpose.msra.mxu0 0
  %683 = vmatpush.bf16.xpose.msra.mxu0 0
  %684 = vmatpush.bf16.xpose.msra.mxu0 0
  %685 = vmatpush.bf16.xpose.msra.mxu0 0
  %686 = vmatpush.bf16.xpose.msra.mxu0 0
  %687 = vmatpush.bf16.xpose.msra.mxu0 0
  %688 = vmatpush.bf16.xpose.msra.mxu0 0
  %689 = vmatpush.bf16.xpose.msra.mxu0 %v680
  %690 = vmatmul.bf16.gmra.mxu0 %v677
  %v691 = vpop.f32.mrf.mxu0
  %v692 = vadd.f32 0.0, %v691
  %v693 = vpop.f32.mrf.mxu0
  %v694 = vadd.f32 0.0, %v693
  %695 = vdwg.mxu0
  %696 = vrot.lane.b32.xlu0 %v397, 120
  %v697 = vpop.permute.xlu0 %696
  %698 = vrot.lane.b32.xlu0 %v397, 104
  %v699 = vpop.permute.xlu0 %698
  %v701 = vsel %vm345, %v697, 0
  %v704 = vsel %vm345, %v699, 0
  %706 = vmatpush.bf16.xpose.msra.mxu0 0
  %707 = vmatpush.bf16.xpose.msra.mxu0 0
  %708 = vmatpush.bf16.xpose.msra.mxu0 0
  %709 = vmatpush.bf16.xpose.msra.mxu0 0
  %710 = vmatpush.bf16.xpose.msra.mxu0 0
  %711 = vmatpush.bf16.xpose.msra.mxu0 0
  %712 = vmatpush.bf16.xpose.msra.mxu0 0
  %713 = vmatpush.bf16.xpose.msra.mxu0 %v704
  %714 = vmatmul.bf16.gmra.mxu0 %v701
  %v715 = vpop.f32.mrf.mxu0
  %v716 = vadd.f32 0.0, %v715
  %v717 = vpop.f32.mrf.mxu0
  %v718 = vadd.f32 0.0, %v717
  %719 = vdwg.mxu0
  %720 = vrot.lane.b32.xlu0 %v424, 120
  %v721 = vpop.permute.xlu0 %720
  %722 = vrot.lane.b32.xlu0 %v424, 104
  %v723 = vpop.permute.xlu0 %722
  %v725 = vsel %vm345, %v721, 0
  %v728 = vsel %vm345, %v723, 0
  %730 = vmatpush.bf16.xpose.msra.mxu0 0
  %731 = vmatpush.bf16.xpose.msra.mxu0 0
  %732 = vmatpush.bf16.xpose.msra.mxu0 0
  %733 = vmatpush.bf16.xpose.msra.mxu0 0
  %734 = vmatpush.bf16.xpose.msra.mxu0 0
  %735 = vmatpush.bf16.xpose.msra.mxu0 0
  %736 = vmatpush.bf16.xpose.msra.mxu0 0
  %737 = vmatpush.bf16.xpose.msra.mxu0 %v728
  %738 = vmatmul.bf16.gmra.mxu0 %v725
  %v739 = vpop.f32.mrf.mxu0
  %v740 = vadd.f32 0.0, %v739
  %v741 = vpop.f32.mrf.mxu0
  %v742 = vadd.f32 0.0, %v741
  %743 = vdwg.mxu0
  %v744 = vsel %vm447, %v668, -inf
  %745 = vmax.xlane.f32.xlu0 %v744
  %v746 = vpop.xlane.xlu0 %745
  %v747 = vsel %vm447, %v670, -inf
  %748 = vmax.xlane.f32.xlu0 %v747
  %v749 = vpop.xlane.xlu0 %748
  %v750 = vsel %vm447, %v692, -inf
  %751 = vmax.xlane.f32.xlu0 %v750
  %v752 = vpop.xlane.xlu0 %751
  %v753 = vsel %vm447, %v694, -inf
  %754 = vmax.xlane.f32.xlu0 %v753
  %v755 = vpop.xlane.xlu0 %754
  %v756 = vsel %vm447, %v716, -inf
  %757 = vmax.xlane.f32.xlu0 %v756
  %v758 = vpop.xlane.xlu0 %757
  %v759 = vsel %vm447, %v718, -inf
  %760 = vmax.xlane.f32.xlu0 %v759
  %v761 = vpop.xlane.xlu0 %760
  %v762 = vsel %vm447, %v740, -inf
  %763 = vmax.xlane.f32.xlu0 %v762
  %v764 = vpop.xlane.xlu0 %763
  %v765 = vsel %vm447, %v742, -inf
  %766 = vmax.xlane.f32.xlu0 %v765
  %v767 = vpop.xlane.xlu0 %766
  %v768 = vsub.f32 %v668, %v746
  %v769 = vsub.f32 %v670, %v749
  %v770 = vsub.f32 %v692, %v752
  %v771 = vsub.f32 %v694, %v755
  %v772 = vsub.f32 %v716, %v758
  %v773 = vsub.f32 %v718, %v761
  %v774 = vsub.f32 %v740, %v764
  %v775 = vsub.f32 %v742, %v767
  %v776 = vmul.f32 %v768, 1.442695
  %v777 = vpow.pop %v776
  %v778 = vmul.f32 %v769, 1.442695
  %v779 = vpow.pop %v778
  %v780 = vmul.f32 %v770, 1.442695
  %v781 = vpow.pop %v780
  %v782 = vmul.f32 %v771, 1.442695
  %v783 = vpow.pop %v782
  %v784 = vmul.f32 %v772, 1.442695
  %v785 = vpow.pop %v784
  %v786 = vmul.f32 %v773, 1.442695
  %v787 = vpow.pop %v786
  %v788 = vmul.f32 %v774, 1.442695
  %v789 = vpow.pop %v788
  %v790 = vmul.f32 %v775, 1.442695
  %v791 = vpow.pop %v790
  %v792 = vsel %vm447, %v777, 0.0
  %793 = vadd.xlane.f32.xlu0 %v792
  %v794 = vpop.xlane.xlu0 %793
  %v795 = vsel %vm447, %v779, 0.0
  %796 = vadd.xlane.f32.xlu0 %v795
  %v797 = vpop.xlane.xlu0 %796
  %v798 = vsel %vm447, %v781, 0.0
  %799 = vadd.xlane.f32.xlu0 %v798
  %v800 = vpop.xlane.xlu0 %799
  %v801 = vsel %vm447, %v783, 0.0
  %802 = vadd.xlane.f32.xlu0 %v801
  %v803 = vpop.xlane.xlu0 %802
  %v804 = vsel %vm447, %v785, 0.0
  %805 = vadd.xlane.f32.xlu0 %v804
  %v806 = vpop.xlane.xlu0 %805
  %v807 = vsel %vm447, %v787, 0.0
  %808 = vadd.xlane.f32.xlu0 %v807
  %v809 = vpop.xlane.xlu0 %808
  %v810 = vsel %vm447, %v789, 0.0
  %811 = vadd.xlane.f32.xlu0 %v810
  %v812 = vpop.xlane.xlu0 %811
  %v813 = vsel %vm447, %v791, 0.0
  %814 = vadd.xlane.f32.xlu0 %v813
  %v815 = vpop.xlane.xlu0 %814
  %v816 = vrcp.pop %v794
  %v817 = vrcp.pop %v797
  %v818 = vrcp.pop %v800
  %v819 = vrcp.pop %v803
  %v820 = vrcp.pop %v806
  %v821 = vrcp.pop %v809
  %v822 = vrcp.pop %v812
  %v823 = vrcp.pop %v815
  %v824 = vmul.f32 %v777, %v816
  %v825 = vmul.f32 %v779, %v817
  %v826 = vmul.f32 %v781, %v818
  %v827 = vmul.f32 %v783, %v819
  %v828 = vmul.f32 %v785, %v820
  %v829 = vmul.f32 %v787, %v821
  %v830 = vmul.f32 %v789, %v822
  %v831 = vmul.f32 %v791, %v823
  %v832 = vpack.c.bf16 %v824, %v824
  %v833 = vpack.c.bf16 %v825, %v825
  %v834 = vpack.c.bf16 %v826, %v826
  %v835 = vpack.c.bf16 %v827, %v827
  %v836 = vpack.c.bf16 %v828, %v828
  %v837 = vpack.c.bf16 %v829, %v829
  %v838 = vpack.c.bf16 %v830, %v830
  %v839 = vpack.c.bf16 %v831, %v831
  %v842 = vunpack.c.l.b16 %v832
  %v843 = vunpack.c.l.b16 %v833
  %v844 = vpack.c.b16 %v843, %v842
  %845 = vrot.lane.b32.xlu0 %v342, 88
  %v846 = vpop.permute.xlu0 %845
  %v849 = vsel %vm447, %v844, 0
  %851 = vmatpush.bf16.msra.mxu0 0
  %852 = vmatpush.bf16.msra.mxu0 0
  %853 = vmatpush.bf16.msra.mxu0 0
  %854 = vmatpush.bf16.msra.mxu0 0
  %855 = vmatpush.bf16.msra.mxu0 0
  %856 = vmatpush.bf16.msra.mxu0 0
  %857 = vmatpush.bf16.msra.mxu0 0
  %858 = vmatpush.bf16.msra.mxu0 %v846
  %859 = vmatmul.bf16.gmra.mxu0 %v849
  %v860 = vpop.f32.mrf.mxu0
  %v861 = vadd.f32 0.0, %v860
  %v862 = vpop.f32.mrf.mxu0
  %v863 = vadd.f32 0.0, %v862
  %864 = vdwg.mxu0
  %v867 = vunpack.c.l.b16 %v834
  %v868 = vunpack.c.l.b16 %v835
  %v869 = vpack.c.b16 %v868, %v867
  %870 = vrot.lane.b32.xlu0 %v370, 88
  %v871 = vpop.permute.xlu0 %870
  %v874 = vsel %vm447, %v869, 0
  %876 = vmatpush.bf16.msra.mxu0 0
  %877 = vmatpush.bf16.msra.mxu0 0
  %878 = vmatpush.bf16.msra.mxu0 0
  %879 = vmatpush.bf16.msra.mxu0 0
  %880 = vmatpush.bf16.msra.mxu0 0
  %881 = vmatpush.bf16.msra.mxu0 0
  %882 = vmatpush.bf16.msra.mxu0 0
  %883 = vmatpush.bf16.msra.mxu0 %v871
  %884 = vmatmul.bf16.gmra.mxu0 %v874
  %v885 = vpop.f32.mrf.mxu0
  %v886 = vadd.f32 0.0, %v885
  %v887 = vpop.f32.mrf.mxu0
  %v888 = vadd.f32 0.0, %v887
  %889 = vdwg.mxu0
  %v892 = vunpack.c.l.b16 %v836
  %v893 = vunpack.c.l.b16 %v837
  %v894 = vpack.c.b16 %v893, %v892
  %895 = vrot.lane.b32.xlu0 %v397, 88
  %v896 = vpop.permute.xlu0 %895
  %v899 = vsel %vm447, %v894, 0
  %901 = vmatpush.bf16.msra.mxu0 0
  %902 = vmatpush.bf16.msra.mxu0 0
  %903 = vmatpush.bf16.msra.mxu0 0
  %904 = vmatpush.bf16.msra.mxu0 0
  %905 = vmatpush.bf16.msra.mxu0 0
  %906 = vmatpush.bf16.msra.mxu0 0
  %907 = vmatpush.bf16.msra.mxu0 0
  %908 = vmatpush.bf16.msra.mxu0 %v896
  %909 = vmatmul.bf16.gmra.mxu0 %v899
  %v910 = vpop.f32.mrf.mxu0
  %v911 = vadd.f32 0.0, %v910
  %v912 = vpop.f32.mrf.mxu0
  %v913 = vadd.f32 0.0, %v912
  %914 = vdwg.mxu0
  %v917 = vunpack.c.l.b16 %v838
  %v918 = vunpack.c.l.b16 %v839
  %v919 = vpack.c.b16 %v918, %v917
  %920 = vrot.lane.b32.xlu0 %v424, 88
  %v921 = vpop.permute.xlu0 %920
  %v924 = vsel %vm447, %v919, 0
  %926 = vmatpush.bf16.msra.mxu0 0
  %927 = vmatpush.bf16.msra.mxu0 0
  %928 = vmatpush.bf16.msra.mxu0 0
  %929 = vmatpush.bf16.msra.mxu0 0
  %930 = vmatpush.bf16.msra.mxu0 0
  %931 = vmatpush.bf16.msra.mxu0 0
  %932 = vmatpush.bf16.msra.mxu0 0
  %933 = vmatpush.bf16.msra.mxu0 %v921
  %934 = vmatmul.bf16.gmra.mxu0 %v924
  %v935 = vpop.f32.mrf.mxu0
  %v936 = vadd.f32 0.0, %v935
  %v937 = vpop.f32.mrf.mxu0
  %v938 = vadd.f32 0.0, %v937
  %939 = vdwg.mxu0
  %v940 = vpack.c.bf16 %v863, %v861
  %v941 = vpack.c.bf16 %v888, %v886
  %v942 = vpack.c.bf16 %v913, %v911
  %v943 = vpack.c.bf16 %v938, %v936
  %v945 = vsel %vm345, %v940, 0
  %v948 = vsel %vm345, %v941, 0
  %v951 = vsel %vm345, %v942, 0
  %v954 = vsel %vm345, %v943, 0
  %vm956 = vcmask 1043456
  %v958 = vsel %vm956, %v327, 0
  %960 = vmatpush.bf16.msra.mxu0 0
  %961 = vmatpush.bf16.msra.mxu0 0
  %962 = vmatpush.bf16.msra.mxu0 0
  %963 = vmatpush.bf16.msra.mxu0 0
  %964 = vmatpush.bf16.msra.mxu0 0
  %965 = vmatpush.bf16.msra.mxu0 0
  %966 = vmatpush.bf16.msra.mxu0 0
  %967 = vmatpush.bf16.msra.mxu0 %v958
  %968 = vmatmul.bf16.gmra.mxu0 %v945
  %v969 = vpop.f32.mrf.mxu0
  %v970 = vadd.f32 0.0, %v969
  %v971 = vpop.f32.mrf.mxu0
  %v972 = vadd.f32 0.0, %v971
  %973 = vmatmul.bf16.gmra.mxu0 %v948
  %v974 = vpop.f32.mrf.mxu0
  %v975 = vadd.f32 0.0, %v974
  %v976 = vpop.f32.mrf.mxu0
  %v977 = vadd.f32 0.0, %v976
  %978 = vmatmul.bf16.gmra.mxu0 %v951
  %v979 = vpop.f32.mrf.mxu0
  %v980 = vadd.f32 0.0, %v979
  %v981 = vpop.f32.mrf.mxu0
  %v982 = vadd.f32 0.0, %v981
  %983 = vmatmul.bf16.gmra.mxu0 %v954
  %v984 = vpop.f32.mrf.mxu0
  %v985 = vadd.f32 0.0, %v984
  %v986 = vpop.f32.mrf.mxu0
  %v987 = vadd.f32 0.0, %v986
  %988 = vdwg.mxu0
  %v990 = vsel %vm345, %v644, 0
  %v993 = vsel %vm345, %v645, 0
  %v996 = vsel %vm345, %v646, 0
  %v999 = vsel %vm345, %v647, 0
  %v1002 = vsel %vm956, %v326, 0
  %1004 = vmatpush.bf16.msra.mxu0 0
  %1005 = vmatpush.bf16.msra.mxu0 0
  %1006 = vmatpush.bf16.msra.mxu0 0
  %1007 = vmatpush.bf16.msra.mxu0 0
  %1008 = vmatpush.bf16.msra.mxu0 0
  %1009 = vmatpush.bf16.msra.mxu0 0
  %1010 = vmatpush.bf16.msra.mxu0 0
  %1011 = vmatpush.bf16.msra.mxu0 %v1002
  %1012 = vmatmul.bf16.gmra.mxu0 %v990
  %v1013 = vpop.f32.mrf.mxu0
  %v1014 = vadd.f32 %v970, %v1013
  %v1015 = vpop.f32.mrf.mxu0
  %v1016 = vadd.f32 %v972, %v1015
  %1017 = vmatmul.bf16.gmra.mxu0 %v993
  %v1018 = vpop.f32.mrf.mxu0
  %v1019 = vadd.f32 %v975, %v1018
  %v1020 = vpop.f32.mrf.mxu0
  %v1021 = vadd.f32 %v977, %v1020
  %1022 = vmatmul.bf16.gmra.mxu0 %v996
  %v1023 = vpop.f32.mrf.mxu0
  %v1024 = vadd.f32 %v980, %v1023
  %v1025 = vpop.f32.mrf.mxu0
  %v1026 = vadd.f32 %v982, %v1025
  %1027 = vmatmul.bf16.gmra.mxu0 %v999
  %v1028 = vpop.f32.mrf.mxu0
  %v1029 = vadd.f32 %v985, %v1028
  %v1030 = vpop.f32.mrf.mxu0
  %v1031 = vadd.f32 %v987, %v1030
  %1032 = vdwg.mxu0
  %v1041 = vrot.slane %v307, 2
  %v1042 = vrot.slane %v307, 4
  %v1043 = vrot.slane %v307, 6
  %v1044 = vrot.slane %v309, 2
  %v1045 = vrot.slane %v309, 4
  %v1046 = vrot.slane %v309, 6
  %v1047 = vrot.slane %v312, 2
  %v1048 = vrot.slane %v312, 4
  %v1049 = vrot.slane %v312, 6
  %v1050 = vrot.slane %v314, 2
  %v1051 = vrot.slane %v314, 4
  %v1052 = vrot.slane %v314, 6
  %v1053 = vrot.slane %v317, 2
  %v1054 = vrot.slane %v317, 4
  %v1055 = vrot.slane %v317, 6
  %v1056 = vrot.slane %v319, 2
  %v1057 = vrot.slane %v319, 4
  %v1058 = vrot.slane %v319, 6
  %v1059 = vrot.slane %v322, 2
  %v1060 = vrot.slane %v322, 4
  %v1061 = vrot.slane %v322, 6
  %v1062 = vrot.slane %v324, 2
  %v1063 = vrot.slane %v324, 4
  %v1064 = vrot.slane %v324, 6
  %1065 = vst [vmem:[#allocation1] ss:$4 sm:$0xff] %v307
  %s1066 = scalar_lea.vmem [#allocation1], 1
  %1067 = vst [vmem:[%s1066] ss:$4 sm:$0xff] %v312
  %s1068 = scalar_lea.vmem [#allocation1], 2
  %1069 = vst [vmem:[%s1068] ss:$4 sm:$0xff] %v317
  %s1070 = scalar_lea.vmem [#allocation1], 3
  %1071 = vst [vmem:[%s1070] ss:$4 sm:$0xff] %v322
  %v1072 = vld.sshfl [vmem:[#allocation1] sm:$0xff pattern:$0x73625140]
  %s1073 = scalar_lea.vmem [#allocation1], 32
  %1074 = vst [vmem:[%s1073] ss:$4 sm:$0xff] %v1041
  %s1075 = scalar_lea.vmem [#allocation1], 33
  %1076 = vst [vmem:[%s1075] ss:$4 sm:$0xff] %v1047
  %s1077 = scalar_lea.vmem [#allocation1], 34
  %1078 = vst [vmem:[%s1077] ss:$4 sm:$0xff] %v1053
  %s1079 = scalar_lea.vmem [#allocation1], 35
  %1080 = vst [vmem:[%s1079] ss:$4 sm:$0xff] %v1059
  %v1081 = vld.sshfl [vmem:[#allocation1 + $0x20] sm:$0xff pattern:$0x73625140]
  %1082 = vst [vmem:[#allocation1] ss:$4 sm:$0xff] %v1042
  %1083 = vst [vmem:[%s1066] ss:$4 sm:$0xff] %v1048
  %1084 = vst [vmem:[%s1068] ss:$4 sm:$0xff] %v1054
  %1085 = vst [vmem:[%s1070] ss:$4 sm:$0xff] %v1060
  %v1086 = vld.sshfl [vmem:[#allocation1] sm:$0xff pattern:$0x73625140]
  %1087 = vst [vmem:[%s1073] ss:$4 sm:$0xff] %v1043
  %1088 = vst [vmem:[%s1075] ss:$4 sm:$0xff] %v1049
  %1089 = vst [vmem:[%s1077] ss:$4 sm:$0xff] %v1055
  %1090 = vst [vmem:[%s1079] ss:$4 sm:$0xff] %v1061
  %v1091 = vld.sshfl [vmem:[#allocation1 + $0x20] sm:$0xff pattern:$0x73625140]
  %1092 = vst [vmem:[#allocation1] ss:$4 sm:$0xff] %v309
  %1093 = vst [vmem:[%s1066] ss:$4 sm:$0xff] %v314
  %1094 = vst [vmem:[%s1068] ss:$4 sm:$0xff] %v319
  %1095 = vst [vmem:[%s1070] ss:$4 sm:$0xff] %v324
  %v1096 = vld.sshfl [vmem:[#allocation1] sm:$0xff pattern:$0x73625140]
  %1097 = vst [vmem:[%s1073] ss:$4 sm:$0xff] %v1044
  %1098 = vst [vmem:[%s1075] ss:$4 sm:$0xff] %v1050
  %1099 = vst [vmem:[%s1077] ss:$4 sm:$0xff] %v1056
  %1100 = vst [vmem:[%s1079] ss:$4 sm:$0xff] %v1062
  %v1101 = vld.sshfl [vmem:[#allocation1 + $0x20] sm:$0xff pattern:$0x73625140]
  %1102 = vst [vmem:[#allocation1] ss:$4 sm:$0xff] %v1045
  %1103 = vst [vmem:[%s1066] ss:$4 sm:$0xff] %v1051
  %1104 = vst [vmem:[%s1068] ss:$4 sm:$0xff] %v1057
  %1105 = vst [vmem:[%s1070] ss:$4 sm:$0xff] %v1063
  %v1106 = vld.sshfl [vmem:[#allocation1] sm:$0xff pattern:$0x73625140]
  %1107 = vst [vmem:[%s1073] ss:$4 sm:$0xff] %v1046
  %1108 = vst [vmem:[%s1075] ss:$4 sm:$0xff] %v1052
  %1109 = vst [vmem:[%s1077] ss:$4 sm:$0xff] %v1058
  %1110 = vst [vmem:[%s1079] ss:$4 sm:$0xff] %v1064
  %v1111 = vld.sshfl [vmem:[#allocation1 + $0x20] sm:$0xff pattern:$0x73625140]
  %v1120 = vpack.c.bf16 %v1072, %v1072
  %v1121 = vpack.c.bf16 %v1081, %v1081
  %v1122 = vpack.c.bf16 %v1086, %v1086
  %v1123 = vpack.c.bf16 %v1091, %v1091
  %v1124 = vpack.c.bf16 %v1096, %v1096
  %v1125 = vpack.c.bf16 %v1101, %v1101
  %v1126 = vpack.c.bf16 %v1106, %v1106
  %v1127 = vpack.c.bf16 %v1111, %v1111
  %1128 = vst [vmem:[#allocation1] ss:$4 sm:$0xff] %v307
  %s1129 = scalar_lea.vmem [#allocation1], 1
  %1130 = vst [vmem:[%s1129] ss:$4 sm:$0xff] %v312
  %s1131 = scalar_lea.vmem [#allocation1], 2
  %1132 = vst [vmem:[%s1131] ss:$4 sm:$0xff] %v317
  %s1133 = scalar_lea.vmem [#allocation1], 3
  %1134 = vst [vmem:[%s1133] ss:$4 sm:$0xff] %v322
  %v1135 = vld.sshfl [vmem:[#allocation1] sm:$0xff pattern:$0x73625140]
  %s1136 = scalar_lea.vmem [#allocation1], 32
  %1137 = vst [vmem:[%s1136] ss:$4 sm:$0xff] %v1041
  %s1138 = scalar_lea.vmem [#allocation1], 33
  %1139 = vst [vmem:[%s1138] ss:$4 sm:$0xff] %v1047
  %s1140 = scalar_lea.vmem [#allocation1], 34
  %1141 = vst [vmem:[%s1140] ss:$4 sm:$0xff] %v1053
  %s1142 = scalar_lea.vmem [#allocation1], 35
  %1143 = vst [vmem:[%s1142] ss:$4 sm:$0xff] %v1059
  %v1144 = vld.sshfl [vmem:[#allocation1 + $0x20] sm:$0xff pattern:$0x73625140]
  %1145 = vst [vmem:[#allocation1] ss:$4 sm:$0xff] %v1042
  %1146 = vst [vmem:[%s1129] ss:$4 sm:$0xff] %v1048
  %1147 = vst [vmem:[%s1131] ss:$4 sm:$0xff] %v1054
  %1148 = vst [vmem:[%s1133] ss:$4 sm:$0xff] %v1060
  %v1149 = vld.sshfl [vmem:[#allocation1] sm:$0xff pattern:$0x73625140]
  %1150 = vst [vmem:[%s1136] ss:$4 sm:$0xff] %v1043
  %1151 = vst [vmem:[%s1138] ss:$4 sm:$0xff] %v1049
  %1152 = vst [vmem:[%s1140] ss:$4 sm:$0xff] %v1055
  %1153 = vst [vmem:[%s1142] ss:$4 sm:$0xff] %v1061
  %v1154 = vld.sshfl [vmem:[#allocation1 + $0x20] sm:$0xff pattern:$0x73625140]
  %1155 = vst [vmem:[#allocation1] ss:$4 sm:$0xff] %v309
  %1156 = vst [vmem:[%s1129] ss:$4 sm:$0xff] %v314
  %1157 = vst [vmem:[%s1131] ss:$4 sm:$0xff] %v319
  %1158 = vst [vmem:[%s1133] ss:$4 sm:$0xff] %v324
  %v1159 = vld.sshfl [vmem:[#allocation1] sm:$0xff pattern:$0x73625140]
  %1160 = vst [vmem:[%s1136] ss:$4 sm:$0xff] %v1044
  %1161 = vst [vmem:[%s1138] ss:$4 sm:$0xff] %v1050
  %1162 = vst [vmem:[%s1140] ss:$4 sm:$0xff] %v1056
  %1163 = vst [vmem:[%s1142] ss:$4 sm:$0xff] %v1062
  %v1164 = vld.sshfl [vmem:[#allocation1 + $0x20] sm:$0xff pattern:$0x73625140]
  %1165 = vst [vmem:[#allocation1] ss:$4 sm:$0xff] %v1045
  %1166 = vst [vmem:[%s1129] ss:$4 sm:$0xff] %v1051
  %1167 = vst [vmem:[%s1131] ss:$4 sm:$0xff] %v1057
  %1168 = vst [vmem:[%s1133] ss:$4 sm:$0xff] %v1063
  %v1169 = vld.sshfl [vmem:[#allocation1] sm:$0xff pattern:$0x73625140]
  %1170 = vst [vmem:[%s1136] ss:$4 sm:$0xff] %v1046
  %1171 = vst [vmem:[%s1138] ss:$4 sm:$0xff] %v1052
  %1172 = vst [vmem:[%s1140] ss:$4 sm:$0xff] %v1058
  %1173 = vst [vmem:[%s1142] ss:$4 sm:$0xff] %v1064
  %v1174 = vld.sshfl [vmem:[#allocation1 + $0x20] sm:$0xff pattern:$0x73625140]
  %v1183 = vpack.c.bf16 %v1135, %v1135
  %v1184 = vpack.c.bf16 %v1144, %v1144
  %v1185 = vpack.c.bf16 %v1149, %v1149
  %v1186 = vpack.c.bf16 %v1154, %v1154
  %v1187 = vpack.c.bf16 %v1159, %v1159
  %v1188 = vpack.c.bf16 %v1164, %v1164
  %v1189 = vpack.c.bf16 %v1169, %v1169
  %v1190 = vpack.c.bf16 %v1174, %v1174
  %1191 = vst [vmem:[#allocation1] ss:$4 sm:$0xff] %v307
  %s1192 = scalar_lea.vmem [#allocation1], 1
  %1193 = vst [vmem:[%s1192] ss:$4 sm:$0xff] %v312
  %s1194 = scalar_lea.vmem [#allocation1], 2
  %1195 = vst [vmem:[%s1194] ss:$4 sm:$0xff] %v317
  %s1196 = scalar_lea.vmem [#allocation1], 3
  %1197 = vst [vmem:[%s1196] ss:$4 sm:$0xff] %v322
  %v1198 = vld.sshfl [vmem:[#allocation1] sm:$0xff pattern:$0x73625140]
  %s1199 = scalar_lea.vmem [#allocation1], 32
  %1200 = vst [vmem:[%s1199] ss:$4 sm:$0xff] %v1041
  %s1201 = scalar_lea.vmem [#allocation1], 33
  %1202 = vst [vmem:[%s1201] ss:$4 sm:$0xff] %v1047
  %s1203 = scalar_lea.vmem [#allocation1], 34
  %1204 = vst [vmem:[%s1203] ss:$4 sm:$0xff] %v1053
  %s1205 = scalar_lea.vmem [#allocation1], 35
  %1206 = vst [vmem:[%s1205] ss:$4 sm:$0xff] %v1059
  %v1207 = vld.sshfl [vmem:[#allocation1 + $0x20] sm:$0xff pattern:$0x73625140]
  %1208 = vst [vmem:[#allocation1] ss:$4 sm:$0xff] %v1042
  %1209 = vst [vmem:[%s1192] ss:$4 sm:$0xff] %v1048
  %1210 = vst [vmem:[%s1194] ss:$4 sm:$0xff] %v1054
  %1211 = vst [vmem:[%s1196] ss:$4 sm:$0xff] %v1060
  %v1212 = vld.sshfl [vmem:[#allocation1] sm:$0xff pattern:$0x73625140]
  %1213 = vst [vmem:[%s1199] ss:$4 sm:$0xff] %v1043
  %1214 = vst [vmem:[%s1201] ss:$4 sm:$0xff] %v1049
  %1215 = vst [vmem:[%s1203] ss:$4 sm:$0xff] %v1055
  %1216 = vst [vmem:[%s1205] ss:$4 sm:$0xff] %v1061
  %v1217 = vld.sshfl [vmem:[#allocation1 + $0x20] sm:$0xff pattern:$0x73625140]
  %1218 = vst [vmem:[#allocation1] ss:$4 sm:$0xff] %v309
  %1219 = vst [vmem:[%s1192] ss:$4 sm:$0xff] %v314
  %1220 = vst [vmem:[%s1194] ss:$4 sm:$0xff] %v319
  %1221 = vst [vmem:[%s1196] ss:$4 sm:$0xff] %v324
  %v1222 = vld.sshfl [vmem:[#allocation1] sm:$0xff pattern:$0x73625140]
  %1223 = vst [vmem:[%s1199] ss:$4 sm:$0xff] %v1044
  %1224 = vst [vmem:[%s1201] ss:$4 sm:$0xff] %v1050
  %1225 = vst [vmem:[%s1203] ss:$4 sm:$0xff] %v1056
  %1226 = vst [vmem:[%s1205] ss:$4 sm:$0xff] %v1062
  %v1227 = vld.sshfl [vmem:[#allocation1 + $0x20] sm:$0xff pattern:$0x73625140]
  %1228 = vst [vmem:[#allocation1] ss:$4 sm:$0xff] %v1045
  %1229 = vst [vmem:[%s1192] ss:$4 sm:$0xff] %v1051
  %1230 = vst [vmem:[%s1194] ss:$4 sm:$0xff] %v1057
  %1231 = vst [vmem:[%s1196] ss:$4 sm:$0xff] %v1063
  %v1232 = vld.sshfl [vmem:[#allocation1] sm:$0xff pattern:$0x73625140]
  %1233 = vst [vmem:[%s1199] ss:$4 sm:$0xff] %v1046
  %1234 = vst [vmem:[%s1201] ss:$4 sm:$0xff] %v1052
  %1235 = vst [vmem:[%s1203] ss:$4 sm:$0xff] %v1058
  %1236 = vst [vmem:[%s1205] ss:$4 sm:$0xff] %v1064
  %v1237 = vld.sshfl [vmem:[#allocation1 + $0x20] sm:$0xff pattern:$0x73625140]
  %v1246 = vpack.c.bf16 %v1198, %v1198
  %v1247 = vpack.c.bf16 %v1207, %v1207
  %v1248 = vpack.c.bf16 %v1212, %v1212
  %v1249 = vpack.c.bf16 %v1217, %v1217
  %v1250 = vpack.c.bf16 %v1222, %v1222
  %v1251 = vpack.c.bf16 %v1227, %v1227
  %v1252 = vpack.c.bf16 %v1232, %v1232
  %v1253 = vpack.c.bf16 %v1237, %v1237
  %v1255 = vunpack.c.l.b16 %v1120
  %v1256 = vpack.c.b16 %v1255, %v1255
  %1257 = vrot.lane.b32.xlu0 %v1256, 80
  %v1258 = vpop.permute.xlu0 %1257
  %v1260 = vunpack.c.l.b16 %v1183
  %v1261 = vpack.c.b16 %v1260, %v1260
  %1262 = vrot.lane.b32.xlu0 %v1261, 64
  %v1263 = vpop.permute.xlu0 %1262
  %v1265 = vsel %vm345, %v1258, 0
  %v1268 = vsel %vm345, %v1263, 0
  %1270 = vmatpush.bf16.xpose.msra.mxu0 0
  %1271 = vmatpush.bf16.xpose.msra.mxu0 0
  %1272 = vmatpush.bf16.xpose.msra.mxu0 0
  %1273 = vmatpush.bf16.xpose.msra.mxu0 0
  %1274 = vmatpush.bf16.xpose.msra.mxu0 0
  %1275 = vmatpush.bf16.xpose.msra.mxu0 0
  %1276 = vmatpush.bf16.xpose.msra.mxu0 0
  %1277 = vmatpush.bf16.xpose.msra.mxu0 %v1268
  %1278 = vmatmul.bf16.gmra.mxu0 %v1265
  %v1279 = vpop.f32.mrf.mxu0
  %v1280 = vadd.f32 0.0, %v1279
  %v1281 = vpop.f32.mrf.mxu0
  %1282 = vdwg.mxu0
  %v1284 = vunpack.c.l.b16 %v1121
  %v1285 = vpack.c.b16 %v1284, %v1284
  %1286 = vrot.lane.b32.xlu0 %v1285, 80
  %v1287 = vpop.permute.xlu0 %1286
  %v1289 = vunpack.c.l.b16 %v1184
  %v1290 = vpack.c.b16 %v1289, %v1289
  %1291 = vrot.lane.b32.xlu0 %v1290, 64
  %v1292 = vpop.permute.xlu0 %1291
  %v1294 = vsel %vm345, %v1287, 0
  %v1297 = vsel %vm345, %v1292, 0
  %1299 = vmatpush.bf16.xpose.msra.mxu0 0
  %1300 = vmatpush.bf16.xpose.msra.mxu0 0
  %1301 = vmatpush.bf16.xpose.msra.mxu0 0
  %1302 = vmatpush.bf16.xpose.msra.mxu0 0
  %1303 = vmatpush.bf16.xpose.msra.mxu0 0
  %1304 = vmatpush.bf16.xpose.msra.mxu0 0
  %1305 = vmatpush.bf16.xpose.msra.mxu0 0
  %1306 = vmatpush.bf16.xpose.msra.mxu0 %v1297
  %1307 = vmatmul.bf16.gmra.mxu0 %v1294
  %v1308 = vpop.f32.mrf.mxu0
  %v1309 = vadd.f32 0.0, %v1308
  %v1310 = vpop.f32.mrf.mxu0
  %1311 = vdwg.mxu0
  %v1313 = vunpack.c.l.b16 %v1122
  %v1314 = vpack.c.b16 %v1313, %v1313
  %1315 = vrot.lane.b32.xlu0 %v1314, 80
  %v1316 = vpop.permute.xlu0 %1315
  %v1318 = vunpack.c.l.b16 %v1185
  %v1319 = vpack.c.b16 %v1318, %v1318
  %1320 = vrot.lane.b32.xlu0 %v1319, 64
  %v1321 = vpop.permute.xlu0 %1320
  %v1323 = vsel %vm345, %v1316, 0
  %v1326 = vsel %vm345, %v1321, 0
  %1328 = vmatpush.bf16.xpose.msra.mxu0 0
  %1329 = vmatpush.bf16.xpose.msra.mxu0 0
  %1330 = vmatpush.bf16.xpose.msra.mxu0 0
  %1331 = vmatpush.bf16.xpose.msra.mxu0 0
  %1332 = vmatpush.bf16.xpose.msra.mxu0 0
  %1333 = vmatpush.bf16.xpose.msra.mxu0 0
  %1334 = vmatpush.bf16.xpose.msra.mxu0 0
  %1335 = vmatpush.bf16.xpose.msra.mxu0 %v1326
  %1336 = vmatmul.bf16.gmra.mxu0 %v1323
  %v1337 = vpop.f32.mrf.mxu0
  %v1338 = vadd.f32 0.0, %v1337
  %v1339 = vpop.f32.mrf.mxu0
  %1340 = vdwg.mxu0
  %v1342 = vunpack.c.l.b16 %v1123
  %v1343 = vpack.c.b16 %v1342, %v1342
  %1344 = vrot.lane.b32.xlu0 %v1343, 80
  %v1345 = vpop.permute.xlu0 %1344
  %v1347 = vunpack.c.l.b16 %v1186
  %v1348 = vpack.c.b16 %v1347, %v1347
  %1349 = vrot.lane.b32.xlu0 %v1348, 64
  %v1350 = vpop.permute.xlu0 %1349
  %v1352 = vsel %vm345, %v1345, 0
  %v1355 = vsel %vm345, %v1350, 0
  %1357 = vmatpush.bf16.xpose.msra.mxu0 0
  %1358 = vmatpush.bf16.xpose.msra.mxu0 0
  %1359 = vmatpush.bf16.xpose.msra.mxu0 0
  %1360 = vmatpush.bf16.xpose.msra.mxu0 0
  %1361 = vmatpush.bf16.xpose.msra.mxu0 0
  %1362 = vmatpush.bf16.xpose.msra.mxu0 0
  %1363 = vmatpush.bf16.xpose.msra.mxu0 0
  %1364 = vmatpush.bf16.xpose.msra.mxu0 %v1355
  %1365 = vmatmul.bf16.gmra.mxu0 %v1352
  %v1366 = vpop.f32.mrf.mxu0
  %v1367 = vadd.f32 0.0, %v1366
  %v1368 = vpop.f32.mrf.mxu0
  %1369 = vdwg.mxu0
  %v1371 = vunpack.c.l.b16 %v1124
  %v1372 = vpack.c.b16 %v1371, %v1371
  %1373 = vrot.lane.b32.xlu0 %v1372, 80
  %v1374 = vpop.permute.xlu0 %1373
  %v1376 = vunpack.c.l.b16 %v1187
  %v1377 = vpack.c.b16 %v1376, %v1376
  %1378 = vrot.lane.b32.xlu0 %v1377, 64
  %v1379 = vpop.permute.xlu0 %1378
  %v1381 = vsel %vm345, %v1374, 0
  %v1384 = vsel %vm345, %v1379, 0
  %1386 = vmatpush.bf16.xpose.msra.mxu0 0
  %1387 = vmatpush.bf16.xpose.msra.mxu0 0
  %1388 = vmatpush.bf16.xpose.msra.mxu0 0
  %1389 = vmatpush.bf16.xpose.msra.mxu0 0
  %1390 = vmatpush.bf16.xpose.msra.mxu0 0
  %1391 = vmatpush.bf16.xpose.msra.mxu0 0
  %1392 = vmatpush.bf16.xpose.msra.mxu0 0
  %1393 = vmatpush.bf16.xpose.msra.mxu0 %v1384
  %1394 = vmatmul.bf16.gmra.mxu0 %v1381
  %v1395 = vpop.f32.mrf.mxu0
  %v1396 = vadd.f32 0.0, %v1395
  %v1397 = vpop.f32.mrf.mxu0
  %1398 = vdwg.mxu0
  %v1400 = vunpack.c.l.b16 %v1125
  %v1401 = vpack.c.b16 %v1400, %v1400
  %1402 = vrot.lane.b32.xlu0 %v1401, 80
  %v1403 = vpop.permute.xlu0 %1402
  %v1405 = vunpack.c.l.b16 %v1188
  %v1406 = vpack.c.b16 %v1405, %v1405
  %1407 = vrot.lane.b32.xlu0 %v1406, 64
  %v1408 = vpop.permute.xlu0 %1407
  %v1410 = vsel %vm345, %v1403, 0
  %v1413 = vsel %vm345, %v1408, 0
  %1415 = vmatpush.bf16.xpose.msra.mxu0 0
  %1416 = vmatpush.bf16.xpose.msra.mxu0 0
  %1417 = vmatpush.bf16.xpose.msra.mxu0 0
  %1418 = vmatpush.bf16.xpose.msra.mxu0 0
  %1419 = vmatpush.bf16.xpose.msra.mxu0 0
  %1420 = vmatpush.bf16.xpose.msra.mxu0 0
  %1421 = vmatpush.bf16.xpose.msra.mxu0 0
  %1422 = vmatpush.bf16.xpose.msra.mxu0 %v1413
  %1423 = vmatmul.bf16.gmra.mxu0 %v1410
  %v1424 = vpop.f32.mrf.mxu0
  %v1425 = vadd.f32 0.0, %v1424
  %v1426 = vpop.f32.mrf.mxu0
  %1427 = vdwg.mxu0
  %v1429 = vunpack.c.l.b16 %v1126
  %v1430 = vpack.c.b16 %v1429, %v1429
  %1431 = vrot.lane.b32.xlu0 %v1430, 80
  %v1432 = vpop.permute.xlu0 %1431
  %v1434 = vunpack.c.l.b16 %v1189
  %v1435 = vpack.c.b16 %v1434, %v1434
  %1436 = vrot.lane.b32.xlu0 %v1435, 64
  %v1437 = vpop.permute.xlu0 %1436
  %v1439 = vsel %vm345, %v1432, 0
  %v1442 = vsel %vm345, %v1437, 0
  %1444 = vmatpush.bf16.xpose.msra.mxu0 0
  %1445 = vmatpush.bf16.xpose.msra.mxu0 0
  %1446 = vmatpush.bf16.xpose.msra.mxu0 0
  %1447 = vmatpush.bf16.xpose.msra.mxu0 0
  %1448 = vmatpush.bf16.xpose.msra.mxu0 0
  %1449 = vmatpush.bf16.xpose.msra.mxu0 0
  %1450 = vmatpush.bf16.xpose.msra.mxu0 0
  %1451 = vmatpush.bf16.xpose.msra.mxu0 %v1442
  %1452 = vmatmul.bf16.gmra.mxu0 %v1439
  %v1453 = vpop.f32.mrf.mxu0
  %v1454 = vadd.f32 0.0, %v1453
  %v1455 = vpop.f32.mrf.mxu0
  %1456 = vdwg.mxu0
  %v1458 = vunpack.c.l.b16 %v1127
  %v1459 = vpack.c.b16 %v1458, %v1458
  %1460 = vrot.lane.b32.xlu0 %v1459, 80
  %v1461 = vpop.permute.xlu0 %1460
  %v1463 = vunpack.c.l.b16 %v1190
  %v1464 = vpack.c.b16 %v1463, %v1463
  %1465 = vrot.lane.b32.xlu0 %v1464, 64
  %v1466 = vpop.permute.xlu0 %1465
  %v1468 = vsel %vm345, %v1461, 0
  %v1471 = vsel %vm345, %v1466, 0
  %1473 = vmatpush.bf16.xpose.msra.mxu0 0
  %1474 = vmatpush.bf16.xpose.msra.mxu0 0
  %1475 = vmatpush.bf16.xpose.msra.mxu0 0
  %1476 = vmatpush.bf16.xpose.msra.mxu0 0
  %1477 = vmatpush.bf16.xpose.msra.mxu0 0
  %1478 = vmatpush.bf16.xpose.msra.mxu0 0
  %1479 = vmatpush.bf16.xpose.msra.mxu0 0
  %1480 = vmatpush.bf16.xpose.msra.mxu0 %v1471
  %1481 = vmatmul.bf16.gmra.mxu0 %v1468
  %v1482 = vpop.f32.mrf.mxu0
  %v1483 = vadd.f32 0.0, %v1482
  %v1484 = vpop.f32.mrf.mxu0
  %1485 = vdwg.mxu0
  %v1486 = vsel %vm345, %v1280, -inf
  %1487 = vmax.xlane.f32.xlu0 %v1486
  %v1488 = vpop.xlane.xlu0 %1487
  %v1489 = vsel %vm345, %v1309, -inf
  %1490 = vmax.xlane.f32.xlu0 %v1489
  %v1491 = vpop.xlane.xlu0 %1490
  %v1492 = vsel %vm345, %v1338, -inf
  %1493 = vmax.xlane.f32.xlu0 %v1492
  %v1494 = vpop.xlane.xlu0 %1493
  %v1495 = vsel %vm345, %v1367, -inf
  %1496 = vmax.xlane.f32.xlu0 %v1495
  %v1497 = vpop.xlane.xlu0 %1496
  %v1498 = vsel %vm345, %v1396, -inf
  %1499 = vmax.xlane.f32.xlu0 %v1498
  %v1500 = vpop.xlane.xlu0 %1499
  %v1501 = vsel %vm345, %v1425, -inf
  %1502 = vmax.xlane.f32.xlu0 %v1501
  %v1503 = vpop.xlane.xlu0 %1502
  %v1504 = vsel %vm345, %v1454, -inf
  %1505 = vmax.xlane.f32.xlu0 %v1504
  %v1506 = vpop.xlane.xlu0 %1505
  %v1507 = vsel %vm345, %v1483, -inf
  %1508 = vmax.xlane.f32.xlu0 %v1507
  %v1509 = vpop.xlane.xlu0 %1508
  %v1510 = vsub.f32 %v1280, %v1488
  %v1511 = vsub.f32 %v1309, %v1491
  %v1512 = vsub.f32 %v1338, %v1494
  %v1513 = vsub.f32 %v1367, %v1497
  %v1514 = vsub.f32 %v1396, %v1500
  %v1515 = vsub.f32 %v1425, %v1503
  %v1516 = vsub.f32 %v1454, %v1506
  %v1517 = vsub.f32 %v1483, %v1509
  %v1518 = vmul.f32 %v1510, 1.442695
  %v1519 = vpow.pop %v1518
  %v1520 = vmul.f32 %v1511, 1.442695
  %v1521 = vpow.pop %v1520
  %v1522 = vmul.f32 %v1512, 1.442695
  %v1523 = vpow.pop %v1522
  %v1524 = vmul.f32 %v1513, 1.442695
  %v1525 = vpow.pop %v1524
  %v1526 = vmul.f32 %v1514, 1.442695
  %v1527 = vpow.pop %v1526
  %v1528 = vmul.f32 %v1515, 1.442695
  %v1529 = vpow.pop %v1528
  %v1530 = vmul.f32 %v1516, 1.442695
  %v1531 = vpow.pop %v1530
  %v1532 = vmul.f32 %v1517, 1.442695
  %v1533 = vpow.pop %v1532
  %v1534 = vsel %vm345, %v1519, 0.0
  %1535 = vadd.xlane.f32.xlu0 %v1534
  %v1536 = vpop.xlane.xlu0 %1535
  %v1537 = vsel %vm345, %v1521, 0.0
  %1538 = vadd.xlane.f32.xlu0 %v1537
  %v1539 = vpop.xlane.xlu0 %1538
  %v1540 = vsel %vm345, %v1523, 0.0
  %1541 = vadd.xlane.f32.xlu0 %v1540
  %v1542 = vpop.xlane.xlu0 %1541
  %v1543 = vsel %vm345, %v1525, 0.0
  %1544 = vadd.xlane.f32.xlu0 %v1543
  %v1545 = vpop.xlane.xlu0 %1544
  %v1546 = vsel %vm345, %v1527, 0.0
  %1547 = vadd.xlane.f32.xlu0 %v1546
  %v1548 = vpop.xlane.xlu0 %1547
  %v1549 = vsel %vm345, %v1529, 0.0
  %1550 = vadd.xlane.f32.xlu0 %v1549
  %v1551 = vpop.xlane.xlu0 %1550
  %v1552 = vsel %vm345, %v1531, 0.0
  %1553 = vadd.xlane.f32.xlu0 %v1552
  %v1554 = vpop.xlane.xlu0 %1553
  %v1555 = vsel %vm345, %v1533, 0.0
  %1556 = vadd.xlane.f32.xlu0 %v1555
  %v1557 = vpop.xlane.xlu0 %1556
  %v1558 = vrcp.pop %v1536
  %v1559 = vrcp.pop %v1539
  %v1560 = vrcp.pop %v1542
  %v1561 = vrcp.pop %v1545
  %v1562 = vrcp.pop %v1548
  %v1563 = vrcp.pop %v1551
  %v1564 = vrcp.pop %v1554
  %v1565 = vrcp.pop %v1557
  %v1566 = vmul.f32 %v1519, %v1558
  %v1567 = vmul.f32 %v1521, %v1559
  %v1568 = vmul.f32 %v1523, %v1560
  %v1569 = vmul.f32 %v1525, %v1561
  %v1570 = vmul.f32 %v1527, %v1562
  %v1571 = vmul.f32 %v1529, %v1563
  %v1572 = vmul.f32 %v1531, %v1564
  %v1573 = vmul.f32 %v1533, %v1565
  %v1574 = vpack.c.bf16 %v1566, %v1566
  %v1575 = vpack.c.bf16 %v1567, %v1567
  %v1576 = vpack.c.bf16 %v1568, %v1568
  %v1577 = vpack.c.bf16 %v1569, %v1569
  %v1578 = vpack.c.bf16 %v1570, %v1570
  %v1579 = vpack.c.bf16 %v1571, %v1571
  %v1580 = vpack.c.bf16 %v1572, %v1572
  %v1581 = vpack.c.bf16 %v1573, %v1573
  %v1583 = vunpack.c.l.b16 %v1246
  %v1584 = vpack.c.b16 %v1583, %v1583
  %1585 = vrot.lane.b32.xlu0 %v1584, 48
  %v1586 = vpop.permute.xlu0 %1585
  %v1588 = vsel %vm345, %v1574, 0
  %v1591 = vsel %vm956, %v1586, 0
  %1593 = vmatpush.bf16.msra.mxu0 0
  %1594 = vmatpush.bf16.msra.mxu0 0
  %1595 = vmatpush.bf16.msra.mxu0 0
  %1596 = vmatpush.bf16.msra.mxu0 0
  %1597 = vmatpush.bf16.msra.mxu0 0
  %1598 = vmatpush.bf16.msra.mxu0 0
  %1599 = vmatpush.bf16.msra.mxu0 0
  %1600 = vmatpush.bf16.msra.mxu0 %v1591
  %1601 = vmatmul.bf16.gmra.mxu0 %v1588
  %v1602 = vpop.f32.mrf.mxu0
  %v1603 = vadd.f32 0.0, %v1602
  %v1604 = vpop.f32.mrf.mxu0
  %1605 = vdwg.mxu0
  %v1607 = vunpack.c.l.b16 %v1247
  %v1608 = vpack.c.b16 %v1607, %v1607
  %1609 = vrot.lane.b32.xlu0 %v1608, 48
  %v1610 = vpop.permute.xlu0 %1609
  %v1612 = vsel %vm345, %v1575, 0
  %v1615 = vsel %vm956, %v1610, 0
  %1617 = vmatpush.bf16.msra.mxu0 0
  %1618 = vmatpush.bf16.msra.mxu0 0
  %1619 = vmatpush.bf16.msra.mxu0 0
  %1620 = vmatpush.bf16.msra.mxu0 0
  %1621 = vmatpush.bf16.msra.mxu0 0
  %1622 = vmatpush.bf16.msra.mxu0 0
  %1623 = vmatpush.bf16.msra.mxu0 0
  %1624 = vmatpush.bf16.msra.mxu0 %v1615
  %1625 = vmatmul.bf16.gmra.mxu0 %v1612
  %v1626 = vpop.f32.mrf.mxu0
  %v1627 = vadd.f32 0.0, %v1626
  %v1628 = vpop.f32.mrf.mxu0
  %1629 = vdwg.mxu0
  %v1631 = vunpack.c.l.b16 %v1248
  %v1632 = vpack.c.b16 %v1631, %v1631
  %1633 = vrot.lane.b32.xlu0 %v1632, 48
  %v1634 = vpop.permute.xlu0 %1633
  %v1636 = vsel %vm345, %v1576, 0
  %v1639 = vsel %vm956, %v1634, 0
  %1641 = vmatpush.bf16.msra.mxu0 0
  %1642 = vmatpush.bf16.msra.mxu0 0
  %1643 = vmatpush.bf16.msra.mxu0 0
  %1644 = vmatpush.bf16.msra.mxu0 0
  %1645 = vmatpush.bf16.msra.mxu0 0
  %1646 = vmatpush.bf16.msra.mxu0 0
  %1647 = vmatpush.bf16.msra.mxu0 0
  %1648 = vmatpush.bf16.msra.mxu0 %v1639
  %1649 = vmatmul.bf16.gmra.mxu0 %v1636
  %v1650 = vpop.f32.mrf.mxu0
  %v1651 = vadd.f32 0.0, %v1650
  %v1652 = vpop.f32.mrf.mxu0
  %1653 = vdwg.mxu0
  %v1655 = vunpack.c.l.b16 %v1249
  %v1656 = vpack.c.b16 %v1655, %v1655
  %1657 = vrot.lane.b32.xlu0 %v1656, 48
  %v1658 = vpop.permute.xlu0 %1657
  %v1660 = vsel %vm345, %v1577, 0
  %v1663 = vsel %vm956, %v1658, 0
  %1665 = vmatpush.bf16.msra.mxu0 0
  %1666 = vmatpush.bf16.msra.mxu0 0
  %1667 = vmatpush.bf16.msra.mxu0 0
  %1668 = vmatpush.bf16.msra.mxu0 0
  %1669 = vmatpush.bf16.msra.mxu0 0
  %1670 = vmatpush.bf16.msra.mxu0 0
  %1671 = vmatpush.bf16.msra.mxu0 0
  %1672 = vmatpush.bf16.msra.mxu0 %v1663
  %1673 = vmatmul.bf16.gmra.mxu0 %v1660
  %v1674 = vpop.f32.mrf.mxu0
  %v1675 = vadd.f32 0.0, %v1674
  %v1676 = vpop.f32.mrf.mxu0
  %1677 = vdwg.mxu0
  %v1679 = vunpack.c.l.b16 %v1250
  %v1680 = vpack.c.b16 %v1679, %v1679
  %1681 = vrot.lane.b32.xlu0 %v1680, 48
  %v1682 = vpop.permute.xlu0 %1681
  %v1684 = vsel %vm345, %v1578, 0
  %v1687 = vsel %vm956, %v1682, 0
  %1689 = vmatpush.bf16.msra.mxu0 0
  %1690 = vmatpush.bf16.msra.mxu0 0
  %1691 = vmatpush.bf16.msra.mxu0 0
  %1692 = vmatpush.bf16.msra.mxu0 0
  %1693 = vmatpush.bf16.msra.mxu0 0
  %1694 = vmatpush.bf16.msra.mxu0 0
  %1695 = vmatpush.bf16.msra.mxu0 0
  %1696 = vmatpush.bf16.msra.mxu0 %v1687
  %1697 = vmatmul.bf16.gmra.mxu0 %v1684
  %v1698 = vpop.f32.mrf.mxu0
  %v1699 = vadd.f32 0.0, %v1698
  %v1700 = vpop.f32.mrf.mxu0
  %1701 = vdwg.mxu0
  %v1703 = vunpack.c.l.b16 %v1251
  %v1704 = vpack.c.b16 %v1703, %v1703
  %1705 = vrot.lane.b32.xlu0 %v1704, 48
  %v1706 = vpop.permute.xlu0 %1705
  %v1708 = vsel %vm345, %v1579, 0
  %v1711 = vsel %vm956, %v1706, 0
  %1713 = vmatpush.bf16.msra.mxu0 0
  %1714 = vmatpush.bf16.msra.mxu0 0
  %1715 = vmatpush.bf16.msra.mxu0 0
  %1716 = vmatpush.bf16.msra.mxu0 0
  %1717 = vmatpush.bf16.msra.mxu0 0
  %1718 = vmatpush.bf16.msra.mxu0 0
  %1719 = vmatpush.bf16.msra.mxu0 0
  %1720 = vmatpush.bf16.msra.mxu0 %v1711
  %1721 = vmatmul.bf16.gmra.mxu0 %v1708
  %v1722 = vpop.f32.mrf.mxu0
  %v1723 = vadd.f32 0.0, %v1722
  %v1724 = vpop.f32.mrf.mxu0
  %1725 = vdwg.mxu0
  %v1727 = vunpack.c.l.b16 %v1252
  %v1728 = vpack.c.b16 %v1727, %v1727
  %1729 = vrot.lane.b32.xlu0 %v1728, 48
  %v1730 = vpop.permute.xlu0 %1729
  %v1732 = vsel %vm345, %v1580, 0
  %v1735 = vsel %vm956, %v1730, 0
  %1737 = vmatpush.bf16.msra.mxu0 0
  %1738 = vmatpush.bf16.msra.mxu0 0
  %1739 = vmatpush.bf16.msra.mxu0 0
  %1740 = vmatpush.bf16.msra.mxu0 0
  %1741 = vmatpush.bf16.msra.mxu0 0
  %1742 = vmatpush.bf16.msra.mxu0 0
  %1743 = vmatpush.bf16.msra.mxu0 0
  %1744 = vmatpush.bf16.msra.mxu0 %v1735
  %1745 = vmatmul.bf16.gmra.mxu0 %v1732
  %v1746 = vpop.f32.mrf.mxu0
  %v1747 = vadd.f32 0.0, %v1746
  %v1748 = vpop.f32.mrf.mxu0
  %1749 = vdwg.mxu0
  %v1751 = vunpack.c.l.b16 %v1253
  %v1752 = vpack.c.b16 %v1751, %v1751
  %1753 = vrot.lane.b32.xlu0 %v1752, 48
  %v1754 = vpop.permute.xlu0 %1753
  %v1756 = vsel %vm345, %v1581, 0
  %v1759 = vsel %vm956, %v1754, 0
  %1761 = vmatpush.bf16.msra.mxu0 0
  %1762 = vmatpush.bf16.msra.mxu0 0
  %1763 = vmatpush.bf16.msra.mxu0 0
  %1764 = vmatpush.bf16.msra.mxu0 0
  %1765 = vmatpush.bf16.msra.mxu0 0
  %1766 = vmatpush.bf16.msra.mxu0 0
  %1767 = vmatpush.bf16.msra.mxu0 0
  %1768 = vmatpush.bf16.msra.mxu0 %v1759
  %1769 = vmatmul.bf16.gmra.mxu0 %v1756
  %v1770 = vpop.f32.mrf.mxu0
  %v1771 = vadd.f32 0.0, %v1770
  %v1772 = vpop.f32.mrf.mxu0
  %1773 = vdwg.mxu0
  %v1774 = vpack.c.bf16 %v1627, %v1603
  %v1775 = vpack.c.bf16 %v1675, %v1651
  %v1776 = vpack.c.bf16 %v1723, %v1699
  %v1777 = vpack.c.bf16 %v1771, %v1747
  %1778 = vst [vmem:[#allocation1] ss:$4 sm:$0xff] %v307
  %s1779 = scalar_lea.vmem [#allocation1], 1
  %1780 = vst [vmem:[%s1779] ss:$4 sm:$0xff] %v312
  %s1781 = scalar_lea.vmem [#allocation1], 2
  %1782 = vst [vmem:[%s1781] ss:$4 sm:$0xff] %v317
  %s1783 = scalar_lea.vmem [#allocation1], 3
  %1784 = vst [vmem:[%s1783] ss:$4 sm:$0xff] %v322
  %v1785 = vld.sshfl [vmem:[#allocation1] sm:$0xff pattern:$0x73625140]
  %s1786 = scalar_lea.vmem [#allocation1], 32
  %1787 = vst [vmem:[%s1786] ss:$4 sm:$0xff] %v1041
  %s1788 = scalar_lea.vmem [#allocation1], 33
  %1789 = vst [vmem:[%s1788] ss:$4 sm:$0xff] %v1047
  %s1790 = scalar_lea.vmem [#allocation1], 34
  %1791 = vst [vmem:[%s1790] ss:$4 sm:$0xff] %v1053
  %s1792 = scalar_lea.vmem [#allocation1], 35
  %1793 = vst [vmem:[%s1792] ss:$4 sm:$0xff] %v1059
  %v1794 = vld.sshfl [vmem:[#allocation1 + $0x20] sm:$0xff pattern:$0x73625140]
  %1795 = vst [vmem:[#allocation1] ss:$4 sm:$0xff] %v1042
  %1796 = vst [vmem:[%s1779] ss:$4 sm:$0xff] %v1048
  %1797 = vst [vmem:[%s1781] ss:$4 sm:$0xff] %v1054
  %1798 = vst [vmem:[%s1783] ss:$4 sm:$0xff] %v1060
  %v1799 = vld.sshfl [vmem:[#allocation1] sm:$0xff pattern:$0x73625140]
  %1800 = vst [vmem:[%s1786] ss:$4 sm:$0xff] %v1043
  %1801 = vst [vmem:[%s1788] ss:$4 sm:$0xff] %v1049
  %1802 = vst [vmem:[%s1790] ss:$4 sm:$0xff] %v1055
  %1803 = vst [vmem:[%s1792] ss:$4 sm:$0xff] %v1061
  %v1804 = vld.sshfl [vmem:[#allocation1 + $0x20] sm:$0xff pattern:$0x73625140]
  %1805 = vst [vmem:[#allocation1] ss:$4 sm:$0xff] %v309
  %1806 = vst [vmem:[%s1779] ss:$4 sm:$0xff] %v314
  %1807 = vst [vmem:[%s1781] ss:$4 sm:$0xff] %v319
  %1808 = vst [vmem:[%s1783] ss:$4 sm:$0xff] %v324
  %v1809 = vld.sshfl [vmem:[#allocation1] sm:$0xff pattern:$0x73625140]
  %1810 = vst [vmem:[%s1786] ss:$4 sm:$0xff] %v1044
  %1811 = vst [vmem:[%s1788] ss:$4 sm:$0xff] %v1050
  %1812 = vst [vmem:[%s1790] ss:$4 sm:$0xff] %v1056
  %1813 = vst [vmem:[%s1792] ss:$4 sm:$0xff] %v1062
  %v1814 = vld.sshfl [vmem:[#allocation1 + $0x20] sm:$0xff pattern:$0x73625140]
  %1815 = vst [vmem:[#allocation1] ss:$4 sm:$0xff] %v1045
  %1816 = vst [vmem:[%s1779] ss:$4 sm:$0xff] %v1051
  %1817 = vst [vmem:[%s1781] ss:$4 sm:$0xff] %v1057
  %1818 = vst [vmem:[%s1783] ss:$4 sm:$0xff] %v1063
  %v1819 = vld.sshfl [vmem:[#allocation1] sm:$0xff pattern:$0x73625140]
  %1820 = vst [vmem:[%s1786] ss:$4 sm:$0xff] %v1046
  %1821 = vst [vmem:[%s1788] ss:$4 sm:$0xff] %v1052
  %1822 = vst [vmem:[%s1790] ss:$4 sm:$0xff] %v1058
  %1823 = vst [vmem:[%s1792] ss:$4 sm:$0xff] %v1064
  %v1824 = vld.sshfl [vmem:[#allocation1 + $0x20] sm:$0xff pattern:$0x73625140]
  %v1833 = vpack.c.bf16 %v1785, %v1785
  %v1834 = vpack.c.bf16 %v1794, %v1794
  %v1835 = vpack.c.bf16 %v1799, %v1799
  %v1836 = vpack.c.bf16 %v1804, %v1804
  %v1837 = vpack.c.bf16 %v1809, %v1809
  %v1838 = vpack.c.bf16 %v1814, %v1814
  %v1839 = vpack.c.bf16 %v1819, %v1819
  %v1840 = vpack.c.bf16 %v1824, %v1824
  %1841 = vst [vmem:[#allocation1] ss:$4 sm:$0xff] %v307
  %s1842 = scalar_lea.vmem [#allocation1], 1
  %1843 = vst [vmem:[%s1842] ss:$4 sm:$0xff] %v312
  %s1844 = scalar_lea.vmem [#allocation1], 2
  %1845 = vst [vmem:[%s1844] ss:$4 sm:$0xff] %v317
  %s1846 = scalar_lea.vmem [#allocation1], 3
  %1847 = vst [vmem:[%s1846] ss:$4 sm:$0xff] %v322
  %v1848 = vld.sshfl [vmem:[#allocation1] sm:$0xff pattern:$0x73625140]
  %s1849 = scalar_lea.vmem [#allocation1], 32
  %1850 = vst [vmem:[%s1849] ss:$4 sm:$0xff] %v1041
  %s1851 = scalar_lea.vmem [#allocation1], 33
  %1852 = vst [vmem:[%s1851] ss:$4 sm:$0xff] %v1047
  %s1853 = scalar_lea.vmem [#allocation1], 34
  %1854 = vst [vmem:[%s1853] ss:$4 sm:$0xff] %v1053
  %s1855 = scalar_lea.vmem [#allocation1], 35
  %1856 = vst [vmem:[%s1855] ss:$4 sm:$0xff] %v1059
  %v1857 = vld.sshfl [vmem:[#allocation1 + $0x20] sm:$0xff pattern:$0x73625140]
  %1858 = vst [vmem:[#allocation1] ss:$4 sm:$0xff] %v1042
  %1859 = vst [vmem:[%s1842] ss:$4 sm:$0xff] %v1048
  %1860 = vst [vmem:[%s1844] ss:$4 sm:$0xff] %v1054
  %1861 = vst [vmem:[%s1846] ss:$4 sm:$0xff] %v1060
  %v1862 = vld.sshfl [vmem:[#allocation1] sm:$0xff pattern:$0x73625140]
  %1863 = vst [vmem:[%s1849] ss:$4 sm:$0xff] %v1043
  %1864 = vst [vmem:[%s1851] ss:$4 sm:$0xff] %v1049
  %1865 = vst [vmem:[%s1853] ss:$4 sm:$0xff] %v1055
  %1866 = vst [vmem:[%s1855] ss:$4 sm:$0xff] %v1061
  %v1867 = vld.sshfl [vmem:[#allocation1 + $0x20] sm:$0xff pattern:$0x73625140]
  %1868 = vst [vmem:[#allocation1] ss:$4 sm:$0xff] %v309
  %1869 = vst [vmem:[%s1842] ss:$4 sm:$0xff] %v314
  %1870 = vst [vmem:[%s1844] ss:$4 sm:$0xff] %v319
  %1871 = vst [vmem:[%s1846] ss:$4 sm:$0xff] %v324
  %v1872 = vld.sshfl [vmem:[#allocation1] sm:$0xff pattern:$0x73625140]
  %1873 = vst [vmem:[%s1849] ss:$4 sm:$0xff] %v1044
  %1874 = vst [vmem:[%s1851] ss:$4 sm:$0xff] %v1050
  %1875 = vst [vmem:[%s1853] ss:$4 sm:$0xff] %v1056
  %1876 = vst [vmem:[%s1855] ss:$4 sm:$0xff] %v1062
  %v1877 = vld.sshfl [vmem:[#allocation1 + $0x20] sm:$0xff pattern:$0x73625140]
  %1878 = vst [vmem:[#allocation1] ss:$4 sm:$0xff] %v1045
  %1879 = vst [vmem:[%s1842] ss:$4 sm:$0xff] %v1051
  %1880 = vst [vmem:[%s1844] ss:$4 sm:$0xff] %v1057
  %1881 = vst [vmem:[%s1846] ss:$4 sm:$0xff] %v1063
  %v1882 = vld.sshfl [vmem:[#allocation1] sm:$0xff pattern:$0x73625140]
  %1883 = vst [vmem:[%s1849] ss:$4 sm:$0xff] %v1046
  %1884 = vst [vmem:[%s1851] ss:$4 sm:$0xff] %v1052
  %1885 = vst [vmem:[%s1853] ss:$4 sm:$0xff] %v1058
  %1886 = vst [vmem:[%s1855] ss:$4 sm:$0xff] %v1064
  %v1887 = vld.sshfl [vmem:[#allocation1 + $0x20] sm:$0xff pattern:$0x73625140]
  %v1896 = vpack.c.bf16 %v1848, %v1848
  %v1897 = vpack.c.bf16 %v1857, %v1857
  %v1898 = vpack.c.bf16 %v1862, %v1862
  %v1899 = vpack.c.bf16 %v1867, %v1867
  %v1900 = vpack.c.bf16 %v1872, %v1872
  %v1901 = vpack.c.bf16 %v1877, %v1877
  %v1902 = vpack.c.bf16 %v1882, %v1882
  %v1903 = vpack.c.bf16 %v1887, %v1887
  %1904 = vst [vmem:[#allocation1] ss:$4 sm:$0xff] %v307
  %s1905 = scalar_lea.vmem [#allocation1], 1
  %1906 = vst [vmem:[%s1905] ss:$4 sm:$0xff] %v312
  %s1907 = scalar_lea.vmem [#allocation1], 2
  %1908 = vst [vmem:[%s1907] ss:$4 sm:$0xff] %v317
  %s1909 = scalar_lea.vmem [#allocation1], 3
  %1910 = vst [vmem:[%s1909] ss:$4 sm:$0xff] %v322
  %v1911 = vld.sshfl [vmem:[#allocation1] sm:$0xff pattern:$0x73625140]
  %s1912 = scalar_lea.vmem [#allocation1], 32
  %1913 = vst [vmem:[%s1912] ss:$4 sm:$0xff] %v1041
  %s1914 = scalar_lea.vmem [#allocation1], 33
  %1915 = vst [vmem:[%s1914] ss:$4 sm:$0xff] %v1047
  %s1916 = scalar_lea.vmem [#allocation1], 34
  %1917 = vst [vmem:[%s1916] ss:$4 sm:$0xff] %v1053
  %s1918 = scalar_lea.vmem [#allocation1], 35
  %1919 = vst [vmem:[%s1918] ss:$4 sm:$0xff] %v1059
  %v1920 = vld.sshfl [vmem:[#allocation1 + $0x20] sm:$0xff pattern:$0x73625140]
  %1921 = vst [vmem:[#allocation1] ss:$4 sm:$0xff] %v1042
  %1922 = vst [vmem:[%s1905] ss:$4 sm:$0xff] %v1048
  %1923 = vst [vmem:[%s1907] ss:$4 sm:$0xff] %v1054
  %1924 = vst [vmem:[%s1909] ss:$4 sm:$0xff] %v1060
  %v1925 = vld.sshfl [vmem:[#allocation1] sm:$0xff pattern:$0x73625140]
  %1926 = vst [vmem:[%s1912] ss:$4 sm:$0xff] %v1043
  %1927 = vst [vmem:[%s1914] ss:$4 sm:$0xff] %v1049
  %1928 = vst [vmem:[%s1916] ss:$4 sm:$0xff] %v1055
  %1929 = vst [vmem:[%s1918] ss:$4 sm:$0xff] %v1061
  %v1930 = vld.sshfl [vmem:[#allocation1 + $0x20] sm:$0xff pattern:$0x73625140]
  %1931 = vst [vmem:[#allocation1] ss:$4 sm:$0xff] %v309
  %1932 = vst [vmem:[%s1905] ss:$4 sm:$0xff] %v314
  %1933 = vst [vmem:[%s1907] ss:$4 sm:$0xff] %v319
  %1934 = vst [vmem:[%s1909] ss:$4 sm:$0xff] %v324
  %v1935 = vld.sshfl [vmem:[#allocation1] sm:$0xff pattern:$0x73625140]
  %1936 = vst [vmem:[%s1912] ss:$4 sm:$0xff] %v1044
  %1937 = vst [vmem:[%s1914] ss:$4 sm:$0xff] %v1050
  %1938 = vst [vmem:[%s1916] ss:$4 sm:$0xff] %v1056
  %1939 = vst [vmem:[%s1918] ss:$4 sm:$0xff] %v1062
  %v1940 = vld.sshfl [vmem:[#allocation1 + $0x20] sm:$0xff pattern:$0x73625140]
  %1941 = vst [vmem:[#allocation1] ss:$4 sm:$0xff] %v1045
  %1942 = vst [vmem:[%s1905] ss:$4 sm:$0xff] %v1051
  %1943 = vst [vmem:[%s1907] ss:$4 sm:$0xff] %v1057
  %1944 = vst [vmem:[%s1909] ss:$4 sm:$0xff] %v1063
  %v1945 = vld.sshfl [vmem:[#allocation1] sm:$0xff pattern:$0x73625140]
  %1946 = vst [vmem:[%s1912] ss:$4 sm:$0xff] %v1046
  %1947 = vst [vmem:[%s1914] ss:$4 sm:$0xff] %v1052
  %1948 = vst [vmem:[%s1916] ss:$4 sm:$0xff] %v1058
  %1949 = vst [vmem:[%s1918] ss:$4 sm:$0xff] %v1064
  %v1950 = vld.sshfl [vmem:[#allocation1 + $0x20] sm:$0xff pattern:$0x73625140]
  %v1959 = vpack.c.bf16 %v1911, %v1911
  %v1960 = vpack.c.bf16 %v1920, %v1920
  %v1961 = vpack.c.bf16 %v1925, %v1925
  %v1962 = vpack.c.bf16 %v1930, %v1930
  %v1963 = vpack.c.bf16 %v1935, %v1935
  %v1964 = vpack.c.bf16 %v1940, %v1940
  %v1965 = vpack.c.bf16 %v1945, %v1945
  %v1966 = vpack.c.bf16 %v1950, %v1950
  %v1968 = vunpack.c.l.b16 %v1833
  %v1969 = vpack.c.b16 %v1968, %v1968
  %1970 = vrot.lane.b32.xlu0 %v1969, 72
  %v1971 = vpop.permute.xlu0 %1970
  %v1973 = vunpack.c.l.b16 %v1896
  %v1974 = vpack.c.b16 %v1973, %v1973
  %1975 = vrot.lane.b32.xlu0 %v1974, 56
  %v1976 = vpop.permute.xlu0 %1975
  %v1978 = vsel %vm345, %v1971, 0
  %v1981 = vsel %vm345, %v1976, 0
  %1983 = vmatpush.bf16.xpose.msra.mxu0 0
  %1984 = vmatpush.bf16.xpose.msra.mxu0 0
  %1985 = vmatpush.bf16.xpose.msra.mxu0 0
  %1986 = vmatpush.bf16.xpose.msra.mxu0 0
  %1987 = vmatpush.bf16.xpose.msra.mxu0 0
  %1988 = vmatpush.bf16.xpose.msra.mxu0 0
  %1989 = vmatpush.bf16.xpose.msra.mxu0 0
  %1990 = vmatpush.bf16.xpose.msra.mxu0 %v1981
  %1991 = vmatmul.bf16.gmra.mxu0 %v1978
  %v1992 = vpop.f32.mrf.mxu0
  %v1993 = vadd.f32 0.0, %v1992
  %v1994 = vpop.f32.mrf.mxu0
  %1995 = vdwg.mxu0
  %v1997 = vunpack.c.l.b16 %v1834
  %v1998 = vpack.c.b16 %v1997, %v1997
  %1999 = vrot.lane.b32.xlu0 %v1998, 72
  %v2000 = vpop.permute.xlu0 %1999
  %v2002 = vunpack.c.l.b16 %v1897
  %v2003 = vpack.c.b16 %v2002, %v2002
  %2004 = vrot.lane.b32.xlu0 %v2003, 56
  %v2005 = vpop.permute.xlu0 %2004
  %v2007 = vsel %vm345, %v2000, 0
  %v2010 = vsel %vm345, %v2005, 0
  %2012 = vmatpush.bf16.xpose.msra.mxu0 0
  %2013 = vmatpush.bf16.xpose.msra.mxu0 0
  %2014 = vmatpush.bf16.xpose.msra.mxu0 0
  %2015 = vmatpush.bf16.xpose.msra.mxu0 0
  %2016 = vmatpush.bf16.xpose.msra.mxu0 0
  %2017 = vmatpush.bf16.xpose.msra.mxu0 0
  %2018 = vmatpush.bf16.xpose.msra.mxu0 0
  %2019 = vmatpush.bf16.xpose.msra.mxu0 %v2010
  %2020 = vmatmul.bf16.gmra.mxu0 %v2007
  %v2021 = vpop.f32.mrf.mxu0
  %v2022 = vadd.f32 0.0, %v2021
  %v2023 = vpop.f32.mrf.mxu0
  %2024 = vdwg.mxu0
  %v2026 = vunpack.c.l.b16 %v1835
  %v2027 = vpack.c.b16 %v2026, %v2026
  %2028 = vrot.lane.b32.xlu0 %v2027, 72
  %v2029 = vpop.permute.xlu0 %2028
  %v2031 = vunpack.c.l.b16 %v1898
  %v2032 = vpack.c.b16 %v2031, %v2031
  %2033 = vrot.lane.b32.xlu0 %v2032, 56
  %v2034 = vpop.permute.xlu0 %2033
  %v2036 = vsel %vm345, %v2029, 0
  %v2039 = vsel %vm345, %v2034, 0
  %2041 = vmatpush.bf16.xpose.msra.mxu0 0
  %2042 = vmatpush.bf16.xpose.msra.mxu0 0
  %2043 = vmatpush.bf16.xpose.msra.mxu0 0
  %2044 = vmatpush.bf16.xpose.msra.mxu0 0
  %2045 = vmatpush.bf16.xpose.msra.mxu0 0
  %2046 = vmatpush.bf16.xpose.msra.mxu0 0
  %2047 = vmatpush.bf16.xpose.msra.mxu0 0
  %2048 = vmatpush.bf16.xpose.msra.mxu0 %v2039
  %2049 = vmatmul.bf16.gmra.mxu0 %v2036
  %v2050 = vpop.f32.mrf.mxu0
  %v2051 = vadd.f32 0.0, %v2050
  %v2052 = vpop.f32.mrf.mxu0
  %2053 = vdwg.mxu0
  %v2055 = vunpack.c.l.b16 %v1836
  %v2056 = vpack.c.b16 %v2055, %v2055
  %2057 = vrot.lane.b32.xlu0 %v2056, 72
  %v2058 = vpop.permute.xlu0 %2057
  %v2060 = vunpack.c.l.b16 %v1899
  %v2061 = vpack.c.b16 %v2060, %v2060
  %2062 = vrot.lane.b32.xlu0 %v2061, 56
  %v2063 = vpop.permute.xlu0 %2062
  %v2065 = vsel %vm345, %v2058, 0
  %v2068 = vsel %vm345, %v2063, 0
  %2070 = vmatpush.bf16.xpose.msra.mxu0 0
  %2071 = vmatpush.bf16.xpose.msra.mxu0 0
  %2072 = vmatpush.bf16.xpose.msra.mxu0 0
  %2073 = vmatpush.bf16.xpose.msra.mxu0 0
  %2074 = vmatpush.bf16.xpose.msra.mxu0 0
  %2075 = vmatpush.bf16.xpose.msra.mxu0 0
  %2076 = vmatpush.bf16.xpose.msra.mxu0 0
  %2077 = vmatpush.bf16.xpose.msra.mxu0 %v2068
  %2078 = vmatmul.bf16.gmra.mxu0 %v2065
  %v2079 = vpop.f32.mrf.mxu0
  %v2080 = vadd.f32 0.0, %v2079
  %v2081 = vpop.f32.mrf.mxu0
  %2082 = vdwg.mxu0
  %v2084 = vunpack.c.l.b16 %v1837
  %v2085 = vpack.c.b16 %v2084, %v2084
  %2086 = vrot.lane.b32.xlu0 %v2085, 72
  %v2087 = vpop.permute.xlu0 %2086
  %v2089 = vunpack.c.l.b16 %v1900
  %v2090 = vpack.c.b16 %v2089, %v2089
  %2091 = vrot.lane.b32.xlu0 %v2090, 56
  %v2092 = vpop.permute.xlu0 %2091
  %v2094 = vsel %vm345, %v2087, 0
  %v2097 = vsel %vm345, %v2092, 0
  %2099 = vmatpush.bf16.xpose.msra.mxu0 0
  %2100 = vmatpush.bf16.xpose.msra.mxu0 0
  %2101 = vmatpush.bf16.xpose.msra.mxu0 0
  %2102 = vmatpush.bf16.xpose.msra.mxu0 0
  %2103 = vmatpush.bf16.xpose.msra.mxu0 0
  %2104 = vmatpush.bf16.xpose.msra.mxu0 0
  %2105 = vmatpush.bf16.xpose.msra.mxu0 0
  %2106 = vmatpush.bf16.xpose.msra.mxu0 %v2097
  %2107 = vmatmul.bf16.gmra.mxu0 %v2094
  %v2108 = vpop.f32.mrf.mxu0
  %v2109 = vadd.f32 0.0, %v2108
  %v2110 = vpop.f32.mrf.mxu0
  %2111 = vdwg.mxu0
  %v2113 = vunpack.c.l.b16 %v1838
  %v2114 = vpack.c.b16 %v2113, %v2113
  %2115 = vrot.lane.b32.xlu0 %v2114, 72
  %v2116 = vpop.permute.xlu0 %2115
  %v2118 = vunpack.c.l.b16 %v1901
  %v2119 = vpack.c.b16 %v2118, %v2118
  %2120 = vrot.lane.b32.xlu0 %v2119, 56
  %v2121 = vpop.permute.xlu0 %2120
  %v2123 = vsel %vm345, %v2116, 0
  %v2126 = vsel %vm345, %v2121, 0
  %2128 = vmatpush.bf16.xpose.msra.mxu0 0
  %2129 = vmatpush.bf16.xpose.msra.mxu0 0
  %2130 = vmatpush.bf16.xpose.msra.mxu0 0
  %2131 = vmatpush.bf16.xpose.msra.mxu0 0
  %2132 = vmatpush.bf16.xpose.msra.mxu0 0
  %2133 = vmatpush.bf16.xpose.msra.mxu0 0
  %2134 = vmatpush.bf16.xpose.msra.mxu0 0
  %2135 = vmatpush.bf16.xpose.msra.mxu0 %v2126
  %2136 = vmatmul.bf16.gmra.mxu0 %v2123
  %v2137 = vpop.f32.mrf.mxu0
  %v2138 = vadd.f32 0.0, %v2137
  %v2139 = vpop.f32.mrf.mxu0
  %2140 = vdwg.mxu0
  %v2142 = vunpack.c.l.b16 %v1839
  %v2143 = vpack.c.b16 %v2142, %v2142
  %2144 = vrot.lane.b32.xlu0 %v2143, 72
  %v2145 = vpop.permute.xlu0 %2144
  %v2147 = vunpack.c.l.b16 %v1902
  %v2148 = vpack.c.b16 %v2147, %v2147
  %2149 = vrot.lane.b32.xlu0 %v2148, 56
  %v2150 = vpop.permute.xlu0 %2149
  %v2152 = vsel %vm345, %v2145, 0
  %v2155 = vsel %vm345, %v2150, 0
  %2157 = vmatpush.bf16.xpose.msra.mxu0 0
  %2158 = vmatpush.bf16.xpose.msra.mxu0 0
  %2159 = vmatpush.bf16.xpose.msra.mxu0 0
  %2160 = vmatpush.bf16.xpose.msra.mxu0 0
  %2161 = vmatpush.bf16.xpose.msra.mxu0 0
  %2162 = vmatpush.bf16.xpose.msra.mxu0 0
  %2163 = vmatpush.bf16.xpose.msra.mxu0 0
  %2164 = vmatpush.bf16.xpose.msra.mxu0 %v2155
  %2165 = vmatmul.bf16.gmra.mxu0 %v2152
  %v2166 = vpop.f32.mrf.mxu0
  %v2167 = vadd.f32 0.0, %v2166
  %v2168 = vpop.f32.mrf.mxu0
  %2169 = vdwg.mxu0
  %v2171 = vunpack.c.l.b16 %v1840
  %v2172 = vpack.c.b16 %v2171, %v2171
  %2173 = vrot.lane.b32.xlu0 %v2172, 72
  %v2174 = vpop.permute.xlu0 %2173
  %v2176 = vunpack.c.l.b16 %v1903
  %v2177 = vpack.c.b16 %v2176, %v2176
  %2178 = vrot.lane.b32.xlu0 %v2177, 56
  %v2179 = vpop.permute.xlu0 %2178
  %v2181 = vsel %vm345, %v2174, 0
  %v2184 = vsel %vm345, %v2179, 0
  %2186 = vmatpush.bf16.xpose.msra.mxu0 0
  %2187 = vmatpush.bf16.xpose.msra.mxu0 0
  %2188 = vmatpush.bf16.xpose.msra.mxu0 0
  %2189 = vmatpush.bf16.xpose.msra.mxu0 0
  %2190 = vmatpush.bf16.xpose.msra.mxu0 0
  %2191 = vmatpush.bf16.xpose.msra.mxu0 0
  %2192 = vmatpush.bf16.xpose.msra.mxu0 0
  %2193 = vmatpush.bf16.xpose.msra.mxu0 %v2184
  %2194 = vmatmul.bf16.gmra.mxu0 %v2181
  %v2195 = vpop.f32.mrf.mxu0
  %v2196 = vadd.f32 0.0, %v2195
  %v2197 = vpop.f32.mrf.mxu0
  %2198 = vdwg.mxu0
  %v2199 = vsel %vm345, %v1993, -inf
  %2200 = vmax.xlane.f32.xlu0 %v2199
  %v2201 = vpop.xlane.xlu0 %2200
  %v2202 = vsel %vm345, %v2022, -inf
  %2203 = vmax.xlane.f32.xlu0 %v2202
  %v2204 = vpop.xlane.xlu0 %2203
  %v2205 = vsel %vm345, %v2051, -inf
  %2206 = vmax.xlane.f32.xlu0 %v2205
  %v2207 = vpop.xlane.xlu0 %2206
  %v2208 = vsel %vm345, %v2080, -inf
  %2209 = vmax.xlane.f32.xlu0 %v2208
  %v2210 = vpop.xlane.xlu0 %2209
  %v2211 = vsel %vm345, %v2109, -inf
  %2212 = vmax.xlane.f32.xlu0 %v2211
  %v2213 = vpop.xlane.xlu0 %2212
  %v2214 = vsel %vm345, %v2138, -inf
  %2215 = vmax.xlane.f32.xlu0 %v2214
  %v2216 = vpop.xlane.xlu0 %2215
  %v2217 = vsel %vm345, %v2167, -inf
  %2218 = vmax.xlane.f32.xlu0 %v2217
  %v2219 = vpop.xlane.xlu0 %2218
  %v2220 = vsel %vm345, %v2196, -inf
  %2221 = vmax.xlane.f32.xlu0 %v2220
  %v2222 = vpop.xlane.xlu0 %2221
  %v2223 = vsub.f32 %v1993, %v2201
  %v2224 = vsub.f32 %v2022, %v2204
  %v2225 = vsub.f32 %v2051, %v2207
  %v2226 = vsub.f32 %v2080, %v2210
  %v2227 = vsub.f32 %v2109, %v2213
  %v2228 = vsub.f32 %v2138, %v2216
  %v2229 = vsub.f32 %v2167, %v2219
  %v2230 = vsub.f32 %v2196, %v2222
  %v2231 = vmul.f32 %v2223, 1.442695
  %v2232 = vpow.pop %v2231
  %v2233 = vmul.f32 %v2224, 1.442695
  %v2234 = vpow.pop %v2233
  %v2235 = vmul.f32 %v2225, 1.442695
  %v2236 = vpow.pop %v2235
  %v2237 = vmul.f32 %v2226, 1.442695
  %v2238 = vpow.pop %v2237
  %v2239 = vmul.f32 %v2227, 1.442695
  %v2240 = vpow.pop %v2239
  %v2241 = vmul.f32 %v2228, 1.442695
  %v2242 = vpow.pop %v2241
  %v2243 = vmul.f32 %v2229, 1.442695
  %v2244 = vpow.pop %v2243
  %v2245 = vmul.f32 %v2230, 1.442695
  %v2246 = vpow.pop %v2245
  %v2247 = vsel %vm345, %v2232, 0.0
  %2248 = vadd.xlane.f32.xlu0 %v2247
  %v2249 = vpop.xlane.xlu0 %2248
  %v2250 = vsel %vm345, %v2234, 0.0
  %2251 = vadd.xlane.f32.xlu0 %v2250
  %v2252 = vpop.xlane.xlu0 %2251
  %v2253 = vsel %vm345, %v2236, 0.0
  %2254 = vadd.xlane.f32.xlu0 %v2253
  %v2255 = vpop.xlane.xlu0 %2254
  %v2256 = vsel %vm345, %v2238, 0.0
  %2257 = vadd.xlane.f32.xlu0 %v2256
  %v2258 = vpop.xlane.xlu0 %2257
  %v2259 = vsel %vm345, %v2240, 0.0
  %2260 = vadd.xlane.f32.xlu0 %v2259
  %v2261 = vpop.xlane.xlu0 %2260
  %v2262 = vsel %vm345, %v2242, 0.0
  %2263 = vadd.xlane.f32.xlu0 %v2262
  %v2264 = vpop.xlane.xlu0 %2263
  %v2265 = vsel %vm345, %v2244, 0.0
  %2266 = vadd.xlane.f32.xlu0 %v2265
  %v2267 = vpop.xlane.xlu0 %2266
  %v2268 = vsel %vm345, %v2246, 0.0
  %2269 = vadd.xlane.f32.xlu0 %v2268
  %v2270 = vpop.xlane.xlu0 %2269
  %v2271 = vrcp.pop %v2249
  %v2272 = vrcp.pop %v2252
  %v2273 = vrcp.pop %v2255
  %v2274 = vrcp.pop %v2258
  %v2275 = vrcp.pop %v2261
  %v2276 = vrcp.pop %v2264
  %v2277 = vrcp.pop %v2267
  %v2278 = vrcp.pop %v2270
  %v2279 = vmul.f32 %v2232, %v2271
  %v2280 = vmul.f32 %v2234, %v2272
  %v2281 = vmul.f32 %v2236, %v2273
  %v2282 = vmul.f32 %v2238, %v2274
  %v2283 = vmul.f32 %v2240, %v2275
  %v2284 = vmul.f32 %v2242, %v2276
  %v2285 = vmul.f32 %v2244, %v2277
  %v2286 = vmul.f32 %v2246, %v2278
  %v2287 = vpack.c.bf16 %v2279, %v2279
  %v2288 = vpack.c.bf16 %v2280, %v2280
  %v2289 = vpack.c.bf16 %v2281, %v2281
  %v2290 = vpack.c.bf16 %v2282, %v2282
  %v2291 = vpack.c.bf16 %v2283, %v2283
  %v2292 = vpack.c.bf16 %v2284, %v2284
  %v2293 = vpack.c.bf16 %v2285, %v2285
  %v2294 = vpack.c.bf16 %v2286, %v2286
  %v2296 = vunpack.c.l.b16 %v1959
  %v2297 = vpack.c.b16 %v2296, %v2296
  %2298 = vrot.lane.b32.xlu0 %v2297, 40
  %v2299 = vpop.permute.xlu0 %2298
  %v2301 = vsel %vm345, %v2287, 0
  %v2304 = vsel %vm956, %v2299, 0
  %2306 = vmatpush.bf16.msra.mxu0 0
  %2307 = vmatpush.bf16.msra.mxu0 0
  %2308 = vmatpush.bf16.msra.mxu0 0
  %2309 = vmatpush.bf16.msra.mxu0 0
  %2310 = vmatpush.bf16.msra.mxu0 0
  %2311 = vmatpush.bf16.msra.mxu0 0
  %2312 = vmatpush.bf16.msra.mxu0 0
  %2313 = vmatpush.bf16.msra.mxu0 %v2304
  %2314 = vmatmul.bf16.gmra.mxu0 %v2301
  %v2315 = vpop.f32.mrf.mxu0
  %v2316 = vadd.f32 0.0, %v2315
  %v2317 = vpop.f32.mrf.mxu0
  %2318 = vdwg.mxu0
  %v2320 = vunpack.c.l.b16 %v1960
  %v2321 = vpack.c.b16 %v2320, %v2320
  %2322 = vrot.lane.b32.xlu0 %v2321, 40
  %v2323 = vpop.permute.xlu0 %2322
  %v2325 = vsel %vm345, %v2288, 0
  %v2328 = vsel %vm956, %v2323, 0
  %2330 = vmatpush.bf16.msra.mxu0 0
  %2331 = vmatpush.bf16.msra.mxu0 0
  %2332 = vmatpush.bf16.msra.mxu0 0
  %2333 = vmatpush.bf16.msra.mxu0 0
  %2334 = vmatpush.bf16.msra.mxu0 0
  %2335 = vmatpush.bf16.msra.mxu0 0
  %2336 = vmatpush.bf16.msra.mxu0 0
  %2337 = vmatpush.bf16.msra.mxu0 %v2328
  %2338 = vmatmul.bf16.gmra.mxu0 %v2325
  %v2339 = vpop.f32.mrf.mxu0
  %v2340 = vadd.f32 0.0, %v2339
  %v2341 = vpop.f32.mrf.mxu0
  %2342 = vdwg.mxu0
  %v2344 = vunpack.c.l.b16 %v1961
  %v2345 = vpack.c.b16 %v2344, %v2344
  %2346 = vrot.lane.b32.xlu0 %v2345, 40
  %v2347 = vpop.permute.xlu0 %2346
  %v2349 = vsel %vm345, %v2289, 0
  %v2352 = vsel %vm956, %v2347, 0
  %2354 = vmatpush.bf16.msra.mxu0 0
  %2355 = vmatpush.bf16.msra.mxu0 0
  %2356 = vmatpush.bf16.msra.mxu0 0
  %2357 = vmatpush.bf16.msra.mxu0 0
  %2358 = vmatpush.bf16.msra.mxu0 0
  %2359 = vmatpush.bf16.msra.mxu0 0
  %2360 = vmatpush.bf16.msra.mxu0 0
  %2361 = vmatpush.bf16.msra.mxu0 %v2352
  %2362 = vmatmul.bf16.gmra.mxu0 %v2349
  %v2363 = vpop.f32.mrf.mxu0
  %v2364 = vadd.f32 0.0, %v2363
  %v2365 = vpop.f32.mrf.mxu0
  %2366 = vdwg.mxu0
  %v2368 = vunpack.c.l.b16 %v1962
  %v2369 = vpack.c.b16 %v2368, %v2368
  %2370 = vrot.lane.b32.xlu0 %v2369, 40
  %v2371 = vpop.permute.xlu0 %2370
  %v2373 = vsel %vm345, %v2290, 0
  %v2376 = vsel %vm956, %v2371, 0
  %2378 = vmatpush.bf16.msra.mxu0 0
  %2379 = vmatpush.bf16.msra.mxu0 0
  %2380 = vmatpush.bf16.msra.mxu0 0
  %2381 = vmatpush.bf16.msra.mxu0 0
  %2382 = vmatpush.bf16.msra.mxu0 0
  %2383 = vmatpush.bf16.msra.mxu0 0
  %2384 = vmatpush.bf16.msra.mxu0 0
  %2385 = vmatpush.bf16.msra.mxu0 %v2376
  %2386 = vmatmul.bf16.gmra.mxu0 %v2373
  %v2387 = vpop.f32.mrf.mxu0
  %v2388 = vadd.f32 0.0, %v2387
  %v2389 = vpop.f32.mrf.mxu0
  %2390 = vdwg.mxu0
  %v2392 = vunpack.c.l.b16 %v1963
  %v2393 = vpack.c.b16 %v2392, %v2392
  %2394 = vrot.lane.b32.xlu0 %v2393, 40
  %v2395 = vpop.permute.xlu0 %2394
  %v2397 = vsel %vm345, %v2291, 0
  %v2400 = vsel %vm956, %v2395, 0
  %2402 = vmatpush.bf16.msra.mxu0 0
  %2403 = vmatpush.bf16.msra.mxu0 0
  %2404 = vmatpush.bf16.msra.mxu0 0
  %2405 = vmatpush.bf16.msra.mxu0 0
  %2406 = vmatpush.bf16.msra.mxu0 0
  %2407 = vmatpush.bf16.msra.mxu0 0
  %2408 = vmatpush.bf16.msra.mxu0 0
  %2409 = vmatpush.bf16.msra.mxu0 %v2400
  %2410 = vmatmul.bf16.gmra.mxu0 %v2397
  %v2411 = vpop.f32.mrf.mxu0
  %v2412 = vadd.f32 0.0, %v2411
  %v2413 = vpop.f32.mrf.mxu0
  %2414 = vdwg.mxu0
  %v2416 = vunpack.c.l.b16 %v1964
  %v2417 = vpack.c.b16 %v2416, %v2416
  %2418 = vrot.lane.b32.xlu0 %v2417, 40
  %v2419 = vpop.permute.xlu0 %2418
  %v2421 = vsel %vm345, %v2292, 0
  %v2424 = vsel %vm956, %v2419, 0
  %2426 = vmatpush.bf16.msra.mxu0 0
  %2427 = vmatpush.bf16.msra.mxu0 0
  %2428 = vmatpush.bf16.msra.mxu0 0
  %2429 = vmatpush.bf16.msra.mxu0 0
  %2430 = vmatpush.bf16.msra.mxu0 0
  %2431 = vmatpush.bf16.msra.mxu0 0
  %2432 = vmatpush.bf16.msra.mxu0 0
  %2433 = vmatpush.bf16.msra.mxu0 %v2424
  %2434 = vmatmul.bf16.gmra.mxu0 %v2421
  %v2435 = vpop.f32.mrf.mxu0
  %v2436 = vadd.f32 0.0, %v2435
  %v2437 = vpop.f32.mrf.mxu0
  %2438 = vdwg.mxu0
  %v2440 = vunpack.c.l.b16 %v1965
  %v2441 = vpack.c.b16 %v2440, %v2440
  %2442 = vrot.lane.b32.xlu0 %v2441, 40
  %v2443 = vpop.permute.xlu0 %2442
  %v2445 = vsel %vm345, %v2293, 0
  %v2448 = vsel %vm956, %v2443, 0
  %2450 = vmatpush.bf16.msra.mxu0 0
  %2451 = vmatpush.bf16.msra.mxu0 0
  %2452 = vmatpush.bf16.msra.mxu0 0
  %2453 = vmatpush.bf16.msra.mxu0 0
  %2454 = vmatpush.bf16.msra.mxu0 0
  %2455 = vmatpush.bf16.msra.mxu0 0
  %2456 = vmatpush.bf16.msra.mxu0 0
  %2457 = vmatpush.bf16.msra.mxu0 %v2448
  %2458 = vmatmul.bf16.gmra.mxu0 %v2445
  %v2459 = vpop.f32.mrf.mxu0
  %v2460 = vadd.f32 0.0, %v2459
  %v2461 = vpop.f32.mrf.mxu0
  %2462 = vdwg.mxu0
  %v2464 = vunpack.c.l.b16 %v1966
  %v2465 = vpack.c.b16 %v2464, %v2464
  %2466 = vrot.lane.b32.xlu0 %v2465, 40
  %v2467 = vpop.permute.xlu0 %2466
  %v2469 = vsel %vm345, %v2294, 0
  %v2472 = vsel %vm956, %v2467, 0
  %2474 = vmatpush.bf16.msra.mxu0 0
  %2475 = vmatpush.bf16.msra.mxu0 0
  %2476 = vmatpush.bf16.msra.mxu0 0
  %2477 = vmatpush.bf16.msra.mxu0 0
  %2478 = vmatpush.bf16.msra.mxu0 0
  %2479 = vmatpush.bf16.msra.mxu0 0
  %2480 = vmatpush.bf16.msra.mxu0 0
  %2481 = vmatpush.bf16.msra.mxu0 %v2472
  %2482 = vmatmul.bf16.gmra.mxu0 %v2469
  %v2483 = vpop.f32.mrf.mxu0
  %v2484 = vadd.f32 0.0, %v2483
  %v2485 = vpop.f32.mrf.mxu0
  %2486 = vdwg.mxu0
  %v2487 = vpack.c.bf16 %v2340, %v2316
  %v2488 = vpack.c.bf16 %v2388, %v2364
  %v2489 = vpack.c.bf16 %v2436, %v2412
  %v2490 = vpack.c.bf16 %v2484, %v2460
  %v2492 = vsel %vm345, %v2487, 0
  %v2495 = vsel %vm345, %v2488, 0
  %v2498 = vsel %vm345, %v2489, 0
  %v2501 = vsel %vm345, %v2490, 0
  %v2504 = vsel %vm956, %v329, 0
  %2506 = vmatpush.bf16.msra.mxu0 0
  %2507 = vmatpush.bf16.msra.mxu0 0
  %2508 = vmatpush.bf16.msra.mxu0 0
  %2509 = vmatpush.bf16.msra.mxu0 0
  %2510 = vmatpush.bf16.msra.mxu0 0
  %2511 = vmatpush.bf16.msra.mxu0 0
  %2512 = vmatpush.bf16.msra.mxu0 0
  %2513 = vmatpush.bf16.msra.mxu0 %v2504
  %2514 = vmatmul.bf16.gmra.mxu0 %v2492
  %v2515 = vpop.f32.mrf.mxu0
  %v2516 = vadd.f32 0.0, %v2515
  %v2517 = vpop.f32.mrf.mxu0
  %v2518 = vadd.f32 0.0, %v2517
  %2519 = vmatmul.bf16.gmra.mxu0 %v2495
  %v2520 = vpop.f32.mrf.mxu0
  %v2521 = vadd.f32 0.0, %v2520
  %v2522 = vpop.f32.mrf.mxu0
  %v2523 = vadd.f32 0.0, %v2522
  %2524 = vmatmul.bf16.gmra.mxu0 %v2498
  %v2525 = vpop.f32.mrf.mxu0
  %v2526 = vadd.f32 0.0, %v2525
  %v2527 = vpop.f32.mrf.mxu0
  %v2528 = vadd.f32 0.0, %v2527
  %2529 = vmatmul.bf16.gmra.mxu0 %v2501
  %v2530 = vpop.f32.mrf.mxu0
  %v2531 = vadd.f32 0.0, %v2530
  %v2532 = vpop.f32.mrf.mxu0
  %v2533 = vadd.f32 0.0, %v2532
  %2534 = vdwg.mxu0
  %v2536 = vsel %vm345, %v1774, 0
  %v2539 = vsel %vm345, %v1775, 0
  %v2542 = vsel %vm345, %v1776, 0
  %v2545 = vsel %vm345, %v1777, 0
  %v2548 = vsel %vm956, %v328, 0
  %2550 = vmatpush.bf16.msra.mxu0 0
  %2551 = vmatpush.bf16.msra.mxu0 0
  %2552 = vmatpush.bf16.msra.mxu0 0
  %2553 = vmatpush.bf16.msra.mxu0 0
  %2554 = vmatpush.bf16.msra.mxu0 0
  %2555 = vmatpush.bf16.msra.mxu0 0
  %2556 = vmatpush.bf16.msra.mxu0 0
  %2557 = vmatpush.bf16.msra.mxu0 %v2548
  %2558 = vmatmul.bf16.gmra.mxu0 %v2536
  %v2559 = vpop.f32.mrf.mxu0
  %v2560 = vadd.f32 %v2516, %v2559
  %v2561 = vpop.f32.mrf.mxu0
  %v2562 = vadd.f32 %v2518, %v2561
  %2563 = vmatmul.bf16.gmra.mxu0 %v2539
  %v2564 = vpop.f32.mrf.mxu0
  %v2565 = vadd.f32 %v2521, %v2564
  %v2566 = vpop.f32.mrf.mxu0
  %v2567 = vadd.f32 %v2523, %v2566
  %2568 = vmatmul.bf16.gmra.mxu0 %v2542
  %v2569 = vpop.f32.mrf.mxu0
  %v2570 = vadd.f32 %v2526, %v2569
  %v2571 = vpop.f32.mrf.mxu0
  %v2572 = vadd.f32 %v2528, %v2571
  %2573 = vmatmul.bf16.gmra.mxu0 %v2545
  %v2574 = vpop.f32.mrf.mxu0
  %v2575 = vadd.f32 %v2531, %v2574
  %v2576 = vpop.f32.mrf.mxu0
  %v2577 = vadd.f32 %v2533, %v2576
  %2578 = vdwg.mxu0
  %v2587 = vrot.slane %v2560, 2
  %v2588 = vrot.slane %v2560, 4
  %v2589 = vrot.slane %v2560, 6
  %v2590 = vrot.slane %v2562, 2
  %v2591 = vrot.slane %v2562, 4
  %v2592 = vrot.slane %v2562, 6
  %v2593 = vrot.slane %v2565, 2
  %v2594 = vrot.slane %v2565, 4
  %v2595 = vrot.slane %v2565, 6
  %v2596 = vrot.slane %v2567, 2
  %v2597 = vrot.slane %v2567, 4
  %v2598 = vrot.slane %v2567, 6
  %v2599 = vrot.slane %v2570, 2
  %v2600 = vrot.slane %v2570, 4
  %v2601 = vrot.slane %v2570, 6
  %v2602 = vrot.slane %v2572, 2
  %v2603 = vrot.slane %v2572, 4
  %v2604 = vrot.slane %v2572, 6
  %v2605 = vrot.slane %v2575, 2
  %v2606 = vrot.slane %v2575, 4
  %v2607 = vrot.slane %v2575, 6
  %v2608 = vrot.slane %v2577, 2
  %v2609 = vrot.slane %v2577, 4
  %v2610 = vrot.slane %v2577, 6
  %2611 = vst [vmem:[#allocation1] ss:$4 sm:$0xff] %v2560
  %s2612 = scalar_lea.vmem [#allocation1], 1
  %2613 = vst [vmem:[%s2612] ss:$4 sm:$0xff] %v2562
  %s2614 = scalar_lea.vmem [#allocation1], 2
  %2615 = vst [vmem:[%s2614] ss:$4 sm:$0xff] %v2565
  %s2616 = scalar_lea.vmem [#allocation1], 3
  %2617 = vst [vmem:[%s2616] ss:$4 sm:$0xff] %v2567
  %s2618 = scalar_lea.vmem [#allocation1], 32
  %2619 = vst [vmem:[%s2618] ss:$4 sm:$0xff] %v2570
  %s2620 = scalar_lea.vmem [#allocation1], 33
  %2621 = vst [vmem:[%s2620] ss:$4 sm:$0xff] %v2572
  %s2622 = scalar_lea.vmem [#allocation1], 34
  %2623 = vst [vmem:[%s2622] ss:$4 sm:$0xff] %v2575
  %s2624 = scalar_lea.vmem [#allocation1], 35
  %2625 = vst [vmem:[%s2624] ss:$4 sm:$0xff] %v2577
  %v2626 = vld.sshfl [vmem:[#allocation1] sm:$0xff pattern:$0x73625140]
  %v2627 = vld.sshfl [vmem:[#allocation1 + $0x20] sm:$0xff pattern:$0x73625140]
  %2628 = vst [vmem:[#allocation1] ss:$4 sm:$0xff] %v2587
  %2629 = vst [vmem:[%s2612] ss:$4 sm:$0xff] %v2590
  %2630 = vst [vmem:[%s2614] ss:$4 sm:$0xff] %v2593
  %2631 = vst [vmem:[%s2616] ss:$4 sm:$0xff] %v2596
  %2632 = vst [vmem:[%s2618] ss:$4 sm:$0xff] %v2599
  %2633 = vst [vmem:[%s2620] ss:$4 sm:$0xff] %v2602
  %2634 = vst [vmem:[%s2622] ss:$4 sm:$0xff] %v2605
  %2635 = vst [vmem:[%s2624] ss:$4 sm:$0xff] %v2608
  %v2636 = vld.sshfl [vmem:[#allocation1] sm:$0xff pattern:$0x73625140]
  %v2637 = vld.sshfl [vmem:[#allocation1 + $0x20] sm:$0xff pattern:$0x73625140]
  %2638 = vst [vmem:[#allocation1] ss:$4 sm:$0xff] %v2588
  %2639 = vst [vmem:[%s2612] ss:$4 sm:$0xff] %v2591
  %2640 = vst [vmem:[%s2614] ss:$4 sm:$0xff] %v2594
  %2641 = vst [vmem:[%s2616] ss:$4 sm:$0xff] %v2597
  %2642 = vst [vmem:[%s2618] ss:$4 sm:$0xff] %v2600
  %2643 = vst [vmem:[%s2620] ss:$4 sm:$0xff] %v2603
  %2644 = vst [vmem:[%s2622] ss:$4 sm:$0xff] %v2606
  %2645 = vst [vmem:[%s2624] ss:$4 sm:$0xff] %v2609
  %v2646 = vld.sshfl [vmem:[#allocation1] sm:$0xff pattern:$0x73625140]
  %v2647 = vld.sshfl [vmem:[#allocation1 + $0x20] sm:$0xff pattern:$0x73625140]
  %2648 = vst [vmem:[#allocation1] ss:$4 sm:$0xff] %v2589
  %2649 = vst [vmem:[%s2612] ss:$4 sm:$0xff] %v2592
  %2650 = vst [vmem:[%s2614] ss:$4 sm:$0xff] %v2595
  %2651 = vst [vmem:[%s2616] ss:$4 sm:$0xff] %v2598
  %2652 = vst [vmem:[%s2618] ss:$4 sm:$0xff] %v2601
  %2653 = vst [vmem:[%s2620] ss:$4 sm:$0xff] %v2604
  %2654 = vst [vmem:[%s2622] ss:$4 sm:$0xff] %v2607
  %2655 = vst [vmem:[%s2624] ss:$4 sm:$0xff] %v2610
  %v2656 = vld.sshfl [vmem:[#allocation1] sm:$0xff pattern:$0x73625140]
  %v2657 = vld.sshfl [vmem:[#allocation1 + $0x20] sm:$0xff pattern:$0x73625140]
  %v2666 = vadd.f32 %v1014, %v2626
  %v2667 = vadd.f32 %v1016, %v2627
  %v2668 = vadd.f32 %v1019, %v2636
  %v2669 = vadd.f32 %v1021, %v2637
  %v2670 = vadd.f32 %v1024, %v2646
  %v2671 = vadd.f32 %v1026, %v2647
  %v2672 = vadd.f32 %v1029, %v2656
  %v2673 = vadd.f32 %v1031, %v2657
  %v2674 = vld [vmem:[%s6] sm:$0x1]
  %v2676 = vperm.slane %v2674, 0
  %v2678 = vadd.f32 %v2666, %v2676
  %v2679 = vadd.f32 %v2667, %v2676
  %v2680 = vadd.f32 %v2668, %v2676
  %v2681 = vadd.f32 %v2669, %v2676
  %v2682 = vadd.f32 %v2670, %v2676
  %v2683 = vadd.f32 %v2671, %v2676
  %v2684 = vadd.f32 %v2672, %v2676
  %v2685 = vadd.f32 %v2673, %v2676
  %v2686 = vadd.f32 %v45, %v2678
  %v2687 = vadd.f32 %v46, %v2679
  %v2688 = vadd.f32 %v47, %v2680
  %v2689 = vadd.f32 %v48, %v2681
  %v2690 = vadd.f32 %v49, %v2682
  %v2691 = vadd.f32 %v50, %v2683
  %v2692 = vadd.f32 %v51, %v2684
  %v2693 = vadd.f32 %v52, %v2685
  %v2694 = vld [vmem:[%s7] sm:$0x1]
  %v2695 = vld [vmem:[%s8] sm:$0x1]
  %v2696 = vsel %vm55, %v2686, 0.0
  %2697 = vadd.xlane.f32.xlu0 %v2696
  %v2698 = vpop.xlane.xlu0 %2697
  %v2699 = vsel %vm55, %v2687, 0.0
  %2700 = vadd.xlane.f32.xlu0 %v2699
  %v2701 = vpop.xlane.xlu0 %2700
  %v2702 = vsel %vm55, %v2688, 0.0
  %2703 = vadd.xlane.f32.xlu0 %v2702
  %v2704 = vpop.xlane.xlu0 %2703
  %v2705 = vsel %vm55, %v2689, 0.0
  %2706 = vadd.xlane.f32.xlu0 %v2705
  %v2707 = vpop.xlane.xlu0 %2706
  %v2708 = vsel %vm55, %v2690, 0.0
  %2709 = vadd.xlane.f32.xlu0 %v2708
  %v2710 = vpop.xlane.xlu0 %2709
  %v2711 = vsel %vm55, %v2691, 0.0
  %2712 = vadd.xlane.f32.xlu0 %v2711
  %v2713 = vpop.xlane.xlu0 %2712
  %v2714 = vsel %vm55, %v2692, 0.0
  %2715 = vadd.xlane.f32.xlu0 %v2714
  %v2716 = vpop.xlane.xlu0 %2715
  %v2717 = vsel %vm55, %v2693, 0.0
  %2718 = vadd.xlane.f32.xlu0 %v2717
  %v2719 = vpop.xlane.xlu0 %2718
  %v2720 = vmul.f32 %v2698, %v86
  %v2721 = vmul.f32 %v2701, %v86
  %v2722 = vmul.f32 %v2704, %v86
  %v2723 = vmul.f32 %v2707, %v86
  %v2724 = vmul.f32 %v2710, %v86
  %v2725 = vmul.f32 %v2713, %v86
  %v2726 = vmul.f32 %v2716, %v86
  %v2727 = vmul.f32 %v2719, %v86
  %v2728 = vsub.f32 %v2686, %v2720
  %v2729 = vsub.f32 %v2687, %v2721
  %v2730 = vsub.f32 %v2688, %v2722
  %v2731 = vsub.f32 %v2689, %v2723
  %v2732 = vsub.f32 %v2690, %v2724
  %v2733 = vsub.f32 %v2691, %v2725
  %v2734 = vsub.f32 %v2692, %v2726
  %v2735 = vsub.f32 %v2693, %v2727
  %v2736 = vmul.f32 %v2728, %v2728
  %v2737 = vmul.f32 %v2729, %v2729
  %v2738 = vmul.f32 %v2730, %v2730
  %v2739 = vmul.f32 %v2731, %v2731
  %v2740 = vmul.f32 %v2732, %v2732
  %v2741 = vmul.f32 %v2733, %v2733
  %v2742 = vmul.f32 %v2734, %v2734
  %v2743 = vmul.f32 %v2735, %v2735
  %v2744 = vsel %vm55, %v2736, 0.0
  %2745 = vadd.xlane.f32.xlu0 %v2744
  %v2746 = vpop.xlane.xlu0 %2745
  %v2747 = vsel %vm55, %v2737, 0.0
  %2748 = vadd.xlane.f32.xlu0 %v2747
  %v2749 = vpop.xlane.xlu0 %2748
  %v2750 = vsel %vm55, %v2738, 0.0
  %2751 = vadd.xlane.f32.xlu0 %v2750
  %v2752 = vpop.xlane.xlu0 %2751
  %v2753 = vsel %vm55, %v2739, 0.0
  %2754 = vadd.xlane.f32.xlu0 %v2753
  %v2755 = vpop.xlane.xlu0 %2754
  %v2756 = vsel %vm55, %v2740, 0.0
  %2757 = vadd.xlane.f32.xlu0 %v2756
  %v2758 = vpop.xlane.xlu0 %2757
  %v2759 = vsel %vm55, %v2741, 0.0
  %2760 = vadd.xlane.f32.xlu0 %v2759
  %v2761 = vpop.xlane.xlu0 %2760
  %v2762 = vsel %vm55, %v2742, 0.0
  %2763 = vadd.xlane.f32.xlu0 %v2762
  %v2764 = vpop.xlane.xlu0 %2763
  %v2765 = vsel %vm55, %v2743, 0.0
  %2766 = vadd.xlane.f32.xlu0 %v2765
  %v2767 = vpop.xlane.xlu0 %2766
  %v2768 = vmul.f32 %v2746, %v86
  %v2769 = vmul.f32 %v2749, %v86
  %v2770 = vmul.f32 %v2752, %v86
  %v2771 = vmul.f32 %v2755, %v86
  %v2772 = vmul.f32 %v2758, %v86
  %v2773 = vmul.f32 %v2761, %v86
  %v2774 = vmul.f32 %v2764, %v86
  %v2775 = vmul.f32 %v2767, %v86
  %v2776 = vadd.f32 %v2768, 1e-05
  %v2777 = vadd.f32 %v2769, 1e-05
  %v2778 = vadd.f32 %v2770, 1e-05
  %v2779 = vadd.f32 %v2771, 1e-05
  %v2780 = vadd.f32 %v2772, 1e-05
  %v2781 = vadd.f32 %v2773, 1e-05
  %v2782 = vadd.f32 %v2774, 1e-05
  %v2783 = vadd.f32 %v2775, 1e-05
  %v2784 = vrsqrt.pop %v2776
  %v2785 = vmul.f32 %v2784, %v2776
  %v2786 = vmul.f32 %v2785, %v2784
  %v2787 = vmul.f32 0.5, %v2786
  %v2788 = vsub.f32 1.5, %v2787
  %v2789 = vmul.f32 %v2784, %v2788
  %vm2790 = vweird.f32 %v2776
  %vm2791 = vweird.f32 %v2784
  %vm2792 = vmor %vm2790, %vm2791
  %v2793 = vsel %vm2792, %v2784, %v2789
  %v2794 = vrsqrt.pop %v2777
  %v2795 = vmul.f32 %v2794, %v2777
  %v2796 = vmul.f32 %v2795, %v2794
  %v2797 = vmul.f32 0.5, %v2796
  %v2798 = vsub.f32 1.5, %v2797
  %v2799 = vmul.f32 %v2794, %v2798
  %vm2800 = vweird.f32 %v2777
  %vm2801 = vweird.f32 %v2794
  %vm2802 = vmor %vm2800, %vm2801
  %v2803 = vsel %vm2802, %v2794, %v2799
  %v2804 = vrsqrt.pop %v2778
  %v2805 = vmul.f32 %v2804, %v2778
  %v2806 = vmul.f32 %v2805, %v2804
  %v2807 = vmul.f32 0.5, %v2806
  %v2808 = vsub.f32 1.5, %v2807
  %v2809 = vmul.f32 %v2804, %v2808
  %vm2810 = vweird.f32 %v2778
  %vm2811 = vweird.f32 %v2804
  %vm2812 = vmor %vm2810, %vm2811
  %v2813 = vsel %vm2812, %v2804, %v2809
  %v2814 = vrsqrt.pop %v2779
  %v2815 = vmul.f32 %v2814, %v2779
  %v2816 = vmul.f32 %v2815, %v2814
  %v2817 = vmul.f32 0.5, %v2816
  %v2818 = vsub.f32 1.5, %v2817
  %v2819 = vmul.f32 %v2814, %v2818
  %vm2820 = vweird.f32 %v2779
  %vm2821 = vweird.f32 %v2814
  %vm2822 = vmor %vm2820, %vm2821
  %v2823 = vsel %vm2822, %v2814, %v2819
  %v2824 = vrsqrt.pop %v2780
  %v2825 = vmul.f32 %v2824, %v2780
  %v2826 = vmul.f32 %v2825, %v2824
  %v2827 = vmul.f32 0.5, %v2826
  %v2828 = vsub.f32 1.5, %v2827
  %v2829 = vmul.f32 %v2824, %v2828
  %vm2830 = vweird.f32 %v2780
  %vm2831 = vweird.f32 %v2824
  %vm2832 = vmor %vm2830, %vm2831
  %v2833 = vsel %vm2832, %v2824, %v2829
  %v2834 = vrsqrt.pop %v2781
  %v2835 = vmul.f32 %v2834, %v2781
  %v2836 = vmul.f32 %v2835, %v2834
  %v2837 = vmul.f32 0.5, %v2836
  %v2838 = vsub.f32 1.5, %v2837
  %v2839 = vmul.f32 %v2834, %v2838
  %vm2840 = vweird.f32 %v2781
  %vm2841 = vweird.f32 %v2834
  %vm2842 = vmor %vm2840, %vm2841
  %v2843 = vsel %vm2842, %v2834, %v2839
  %v2844 = vrsqrt.pop %v2782
  %v2845 = vmul.f32 %v2844, %v2782
  %v2846 = vmul.f32 %v2845, %v2844
  %v2847 = vmul.f32 0.5, %v2846
  %v2848 = vsub.f32 1.5, %v2847
  %v2849 = vmul.f32 %v2844, %v2848
  %vm2850 = vweird.f32 %v2782
  %vm2851 = vweird.f32 %v2844
  %vm2852 = vmor %vm2850, %vm2851
  %v2853 = vsel %vm2852, %v2844, %v2849
  %v2854 = vrsqrt.pop %v2783
  %v2855 = vmul.f32 %v2854, %v2783
  %v2856 = vmul.f32 %v2855, %v2854
  %v2857 = vmul.f32 0.5, %v2856
  %v2858 = vsub.f32 1.5, %v2857
  %v2859 = vmul.f32 %v2854, %v2858
  %vm2860 = vweird.f32 %v2783
  %vm2861 = vweird.f32 %v2854
  %vm2862 = vmor %vm2860, %vm2861
  %v2863 = vsel %vm2862, %v2854, %v2859
  %v2864 = vmul.f32 %v2728, %v2793
  %v2865 = vmul.f32 %v2729, %v2803
  %v2866 = vmul.f32 %v2730, %v2813
  %v2867 = vmul.f32 %v2731, %v2823
  %v2868 = vmul.f32 %v2732, %v2833
  %v2869 = vmul.f32 %v2733, %v2843
  %v2870 = vmul.f32 %v2734, %v2853
  %v2871 = vmul.f32 %v2735, %v2863
  %v2873 = vperm.slane %v2694, 0
  %v2875 = vmul.f32 %v2864, %v2873
  %v2876 = vmul.f32 %v2865, %v2873
  %v2877 = vmul.f32 %v2866, %v2873
  %v2878 = vmul.f32 %v2867, %v2873
  %v2879 = vmul.f32 %v2868, %v2873
  %v2880 = vmul.f32 %v2869, %v2873
  %v2881 = vmul.f32 %v2870, %v2873
  %v2882 = vmul.f32 %v2871, %v2873
  %v2884 = vperm.slane %v2695, 0
  %v2886 = vadd.f32 %v2875, %v2884
  %v2887 = vadd.f32 %v2876, %v2884
  %v2888 = vadd.f32 %v2877, %v2884
  %v2889 = vadd.f32 %v2878, %v2884
  %v2890 = vadd.f32 %v2879, %v2884
  %v2891 = vadd.f32 %v2880, %v2884
  %v2892 = vadd.f32 %v2881, %v2884
  %v2893 = vadd.f32 %v2882, %v2884
  %v2894 = vpack.c.bf16 %v2887, %v2886
  %v2895 = vpack.c.bf16 %v2889, %v2888
  %v2896 = vpack.c.bf16 %v2891, %v2890
  %v2897 = vpack.c.bf16 %v2893, %v2892
  %v2898 = vld [vmem:[%s9] sm:$0xf]
  %v2899 = vld [vmem:[%s9 + $0x4] sm:$0xf]
  %v2900 = vld [vmem:[%s9 + $0x8] sm:$0xf]
  %v2901 = vld [vmem:[%s9 + $0xc] sm:$0xf]
  %v2902 = vld [vmem:[%s10] sm:$0x1]
  %v2904 = vperm.slane %v2902, 0
  %v2910 = vunpack.c.l.b16 %v2898
  %v2911 = vunpack.c.l.b16 %v2899
  %v2912 = vunpack.c.l.b16 %v2900
  %v2913 = vunpack.c.l.b16 %v2901
  %v2914 = vpack.c.b16 %v2911, %v2910
  %v2915 = vpack.c.b16 %v2913, %v2912
  %v2919 = vsel %vm55, %v2894, 0
  %v2922 = vsel %vm55, %v2895, 0
  %v2925 = vsel %vm55, %v2896, 0
  %v2928 = vsel %vm55, %v2897, 0
  %2930 = vmatpush.bf16.msra.mxu0 0
  %2931 = vmatpush.bf16.msra.mxu0 0
  %2932 = vmatpush.bf16.msra.mxu0 0
  %2933 = vmatpush.bf16.msra.mxu0 0
  %2934 = vmatpush.bf16.msra.mxu0 0
  %2935 = vmatpush.bf16.msra.mxu0 0
  %2936 = vmatpush.bf16.msra.mxu0 %v2915
  %2937 = vmatpush.bf16.msra.mxu0 %v2914
  %2938 = vmatmul.bf16.gmra.mxu0 %v2919
  %v2939 = vpop.f32.mrf.mxu0
  %v2940 = vadd.f32 %v2904, %v2939
  %v2941 = vpop.f32.mrf.mxu0
  %v2942 = vadd.f32 %v2904, %v2941
  %2943 = vmatmul.bf16.gmra.mxu0 %v2922
  %v2944 = vpop.f32.mrf.mxu0
  %v2945 = vadd.f32 %v2904, %v2944
  %v2946 = vpop.f32.mrf.mxu0
  %v2947 = vadd.f32 %v2904, %v2946
  %2948 = vmatmul.bf16.gmra.mxu0 %v2925
  %v2949 = vpop.f32.mrf.mxu0
  %v2950 = vadd.f32 %v2904, %v2949
  %v2951 = vpop.f32.mrf.mxu0
  %v2952 = vadd.f32 %v2904, %v2951
  %2953 = vmatmul.bf16.gmra.mxu0 %v2928
  %v2954 = vpop.f32.mrf.mxu0
  %v2955 = vadd.f32 %v2904, %v2954
  %v2956 = vpop.f32.mrf.mxu0
  %v2957 = vadd.f32 %v2904, %v2956
  %2958 = vdwg.mxu0
  %v2959 = vmax.f32 %v2940, 0.0
  %v2960 = vmax.f32 %v2942, 0.0
  %v2961 = vmax.f32 %v2945, 0.0
  %v2962 = vmax.f32 %v2947, 0.0
  %v2963 = vmax.f32 %v2950, 0.0
  %v2964 = vmax.f32 %v2952, 0.0
  %v2965 = vmax.f32 %v2955, 0.0
  %v2966 = vmax.f32 %v2957, 0.0
  %v2967 = vpack.c.bf16 %v2960, %v2959
  %v2968 = vpack.c.bf16 %v2962, %v2961
  %v2969 = vpack.c.bf16 %v2964, %v2963
  %v2970 = vpack.c.bf16 %v2966, %v2965
  %v2971 = vld [vmem:[%s11] sm:$0xf]
  %v2972 = vld [vmem:[%s11 + $0x4] sm:$0xf]
  %v2973 = vld [vmem:[%s11 + $0x8] sm:$0xf]
  %v2974 = vld [vmem:[%s11 + $0xc] sm:$0xf]
  %v2975 = vld [vmem:[%s11 + $0x10] sm:$0xf]
  %v2976 = vld [vmem:[%s11 + $0x14] sm:$0xf]
  %v2977 = vld [vmem:[%s11 + $0x18] sm:$0xf]
  %v2978 = vld [vmem:[%s11 + $0x1c] sm:$0xf]
  %v2979 = vld [vmem:[%s12] sm:$0x1]
  %v2981 = vperm.slane %v2979, 0
  %v2991 = vunpack.c.l.b16 %v2971
  %v2992 = vunpack.c.l.b16 %v2972
  %v2993 = vunpack.c.l.b16 %v2973
  %v2994 = vunpack.c.l.b16 %v2974
  %v2995 = vunpack.c.l.b16 %v2975
  %v2996 = vunpack.c.l.b16 %v2976
  %v2997 = vunpack.c.l.b16 %v2977
  %v2998 = vunpack.c.l.b16 %v2978
  %v2999 = vpack.c.b16 %v2992, %v2991
  %v3000 = vpack.c.b16 %v2994, %v2993
  %v3001 = vpack.c.b16 %v2996, %v2995
  %v3002 = vpack.c.b16 %v2998, %v2997
  %vm3007 = vcmask 523264
  %v3009 = vsel %vm3007, %v2967, 0
  %v3012 = vsel %vm3007, %v2968, 0
  %v3015 = vsel %vm3007, %v2969, 0
  %v3018 = vsel %vm3007, %v2970, 0
  %3020 = vmatpush.bf16.msra.mxu0 0
  %3021 = vmatpush.bf16.msra.mxu0 0
  %3022 = vmatpush.bf16.msra.mxu0 0
  %3023 = vmatpush.bf16.msra.mxu0 0
  %3024 = vmatpush.bf16.msra.mxu0 %v3002
  %3025 = vmatpush.bf16.msra.mxu0 %v3001
  %3026 = vmatpush.bf16.msra.mxu0 %v3000
  %3027 = vmatpush.bf16.msra.mxu0 %v2999
  %3028 = vmatmul.bf16.gmra.mxu0 %v3009
  %v3029 = vpop.f32.mrf.mxu0
  %v3030 = vadd.f32 %v2981, %v3029
  %v3031 = vpop.f32.mrf.mxu0
  %v3032 = vadd.f32 %v2981, %v3031
  %3033 = vmatmul.bf16.gmra.mxu0 %v3012
  %v3034 = vpop.f32.mrf.mxu0
  %v3035 = vadd.f32 %v2981, %v3034
  %v3036 = vpop.f32.mrf.mxu0
  %v3037 = vadd.f32 %v2981, %v3036
  %3038 = vmatmul.bf16.gmra.mxu0 %v3015
  %v3039 = vpop.f32.mrf.mxu0
  %v3040 = vadd.f32 %v2981, %v3039
  %v3041 = vpop.f32.mrf.mxu0
  %v3042 = vadd.f32 %v2981, %v3041
  %3043 = vmatmul.bf16.gmra.mxu0 %v3018
  %v3044 = vpop.f32.mrf.mxu0
  %v3045 = vadd.f32 %v2981, %v3044
  %v3046 = vpop.f32.mrf.mxu0
  %v3047 = vadd.f32 %v2981, %v3046
  %3048 = vdwg.mxu0
  %v3049 = vadd.f32 %v2686, %v3030
  %v3050 = vadd.f32 %v2687, %v3032
  %v3051 = vadd.f32 %v2688, %v3035
  %v3052 = vadd.f32 %v2689, %v3037
  %v3053 = vadd.f32 %v2690, %v3040
  %v3054 = vadd.f32 %v2691, %v3042
  %v3055 = vadd.f32 %v2692, %v3045
  %v3056 = vadd.f32 %v2693, %v3047
  %3057 = vst.msk [vmem:[%s13] sm:$0xff] %vm55, %v3049
  %3058 = vst.msk [vmem:[%s13 + $0x8] sm:$0xff] %vm55, %v3050
  %3059 = vst.msk [vmem:[%s13 + $0x10] sm:$0xff] %vm55, %v3051
  %3060 = vst.msk [vmem:[%s13 + $0x18] sm:$0xff] %vm55, %v3052
  %3061 = vst.msk [vmem:[%s13 + $0x20] sm:$0xff] %vm55, %v3053
  %3062 = vst.msk [vmem:[%s13 + $0x28] sm:$0xff] %vm55, %v3054
  %3063 = vst.msk [vmem:[%s13 + $0x30] sm:$0xff] %vm55, %v3055
  %3064 = vst.msk [vmem:[%s13 + $0x38] sm:$0xff] %vm55, %v3056
  // Predicated region
  $region54: #{transformer_encoder_layer_forward.1} parent=0 // pred_check
    _
  $region55: #{transformer_encoder_layer_forward.1} parent=0 // pred_check_branch
    %3066 = sbr.rel (0) target = $region57
  $region56: #{transformer_encoder_layer_forward.1} parent=0 // pred_region
    _
  $region57: #{transformer_encoder_layer_forward.1} parent=0 // pred_fallthru
    _
  // Predicated region
  $region58: #{transformer_encoder_layer_forward.1} parent=0 // pred_check
    _
  $region59: #{transformer_encoder_layer_forward.1} parent=0 // pred_check_branch
    %3068 = sbr.rel (0) target = $region61
  $region60: #{transformer_encoder_layer_forward.1} parent=0 // pred_region
    _
  $region61: #{transformer_encoder_layer_forward.1} parent=0 // pred_fallthru
    _

</llo_original>
